<compile_context>
chip_gen: v7x
topology: tpu7x:2x2x1
jax: 0.10.0
libtpu: 0.0.40
codegen_flags: <defaults>
</compile_context>

<pallas_src>
import functools

import jax
import jax.numpy as jnp
import numpy as np
from jax import lax
from jax.experimental import pallas as pl
from jax.experimental.pallas import tpu as pltpu


# ------------------------------ kernel ------------------------------------- #
def _bottleneck_kernel(x_ref, w1_ref, s1_ref, b1_ref,
                       w2_ref, s2_ref, b2_ref,
                       w3_ref, s3_ref, b3_ref,
                       o_ref, pad_ref, acc_ref, *, H, W, TH):
    """Fused Bottleneck forward for one (sample, row-tile) grid step.

    x_ref   : (1, H*W, Cin)   full sample (resident; block index depends on n only)
    w*_ref  : weights / folded-BN scale+bias (resident, constant index_map)
    o_ref   : (1, TH*W, Cout) output row tile
    pad_ref : (H+2, W+2, P)   zero-padded conv1 output (per-sample scratch)
    acc_ref : (TH*W, P) f32   conv2 accumulator scratch
    """
    Cin = x_ref.shape[-1]
    P = w1_ref.shape[1]
    t = pl.program_id(1)

    # ---- Stage 1 (once per sample): conv1 1x1 + bn1 + relu into padded scratch.
    @pl.when(t == 0)
    def _():
        pad_ref[...] = jnp.zeros_like(pad_ref)
        n_chunks = H // TH
        for c in range(n_chunks):                      # static unroll, bounded vregs
            xc = x_ref[0, pl.ds(c * TH * W, TH * W), :]
            y1 = jnp.dot(xc.astype(w1_ref.dtype), w1_ref[...],
                         preferred_element_type=jnp.float32)
            y1 = jnp.maximum(y1 * s1_ref[...] + b1_ref[...], 0.0)
            pad_ref[pl.ds(1 + c * TH, TH), pl.ds(1, W), :] = (
                y1.reshape(TH, W, P).astype(pad_ref.dtype))

    # ---- Stage 2: conv2 3x3 (stride 1) + bn2 + relu for this row tile.
    r0 = t * TH
    acc_ref[...] = jnp.zeros_like(acc_ref)
    for dy in range(3):
        for dx in range(3):
            patch = pad_ref[pl.ds(r0 + dy, TH), pl.ds(dx, W), :]
            patch = patch.reshape(TH * W, P)
            acc_ref[...] += jnp.dot(patch, w2_ref[dy, dx],
                                    preferred_element_type=jnp.float32)
    y2 = jnp.maximum(acc_ref[...] * s2_ref[...] + b2_ref[...], 0.0)

    # ---- Stage 3: conv3 1x1 + bn3 + residual add + relu.
    y3 = jnp.dot(y2.astype(w3_ref.dtype), w3_ref[...],
                 preferred_element_type=jnp.float32)
    y3 = y3 * s3_ref[...] + b3_ref[...]
    start = pl.multiple_of(t * (TH * W), 8)
    res = x_ref[0, pl.ds(start, TH * W), :]
    y3 = jnp.maximum(y3 + res.astype(jnp.float32), 0.0)
    o_ref[0] = y3.astype(o_ref.dtype)


# ------------------------------ wrapper ------------------------------------ #
def _pick_row_tile(H, W):
    """Largest divisor of H giving roughly <=1024 rows per tile."""
    target = max(1, 1024 // max(W, 1))
    th = min(H, target)
    while H % th:
        th -= 1
    return max(th, 1)


def bottleneck_forward(x_nchw, params, *, row_tile=None,
                       compute_dtype=jnp.float32):
    """Forward matching Bottleneck(inplanes, planes), stride=1, downsample=None."""
    x = jnp.transpose(x_nchw, (0, 2, 3, 1))          # NCHW -> NHWC
    N, H, W, Cin = x.shape
    P = params['w1'].shape[1]
    Cout = params['w3'].shape[1]
    assert Cin == Cout, "downsample=None requires inplanes == planes * 4"

    TH = row_tile if row_tile is not None else _pick_row_tile(H, W)
    assert H % TH == 0, "row_tile must divide H"
    T = H // TH
    assert (TH * W) % 8 == 0, "row tile * W must be a multiple of 8"

    cd = compute_dtype
    x3 = x.reshape(N, H * W, Cin).astype(cd)
    w1 = params['w1'].astype(cd)
    w2 = params['w2'].astype(cd)
    w3 = params['w3'].astype(cd)
    s1 = params['s1'].reshape(1, P).astype(jnp.float32)
    b1 = params['b1'].reshape(1, P).astype(jnp.float32)
    s2 = params['s2'].reshape(1, P).astype(jnp.float32)
    b2 = params['b2'].reshape(1, P).astype(jnp.float32)
    s3 = params['s3'].reshape(1, Cout).astype(jnp.float32)
    b3 = params['b3'].reshape(1, Cout).astype(jnp.float32)

    const2 = lambda n, t: (0, 0)

    out = pl.pallas_call(
        functools.partial(_bottleneck_kernel, H=H, W=W, TH=TH),
        out_shape=jax.ShapeDtypeStruct((N, H * W, Cout), x_nchw.dtype),
        grid_spec=pltpu.PrefetchScalarGridSpec(
            num_scalar_prefetch=0,
            grid=(N, T),
            in_specs=[
                # activation: full sample, block index depends only on n
                # -> DMA'd once per sample, prefetched while previous sample runs.
                pl.BlockSpec((1, H * W, Cin), lambda n, t: (n, 0, 0)),
                # weights / folded-BN params: constant index_map -> resident.
                pl.BlockSpec((Cin, P), const2),
                pl.BlockSpec((1, P), const2),
                pl.BlockSpec((1, P), const2),
                pl.BlockSpec((3, 3, P, P), lambda n, t: (0, 0, 0, 0)),
                pl.BlockSpec((1, P), const2),
                pl.BlockSpec((1, P), const2),
                pl.BlockSpec((P, Cout), const2),
                pl.BlockSpec((1, Cout), const2),
                pl.BlockSpec((1, Cout), const2),
            ],
            out_specs=pl.BlockSpec((1, TH * W, Cout), lambda n, t: (n, t, 0)),
            scratch_shapes=[
                pltpu.VMEM((H + 2, W + 2, P), cd),        # padded conv1 output
                pltpu.VMEM((TH * W, P), jnp.float32),     # conv2 accumulator
            ],
        ),
        compiler_params=pltpu.CompilerParams(
            # batch axis sharded across TCs (v7x megacore); row-tile axis
            # sequential because the conv1 scratch is reused across tiles.
            dimension_semantics=("parallel", "arbitrary"),
            vmem_limit_bytes=64 * 1024 * 1024,
        ),
    )(x3, w1, s1, b1, w2, s2, b2, w3, s3, b3)

    return jnp.transpose(out.reshape(N, H, W, Cout), (0, 3, 1, 2))  # NCHW


# ------------------------- params / reference ------------------------------ #
def init_params(key, inplanes, planes, eps=1e-5):
    expansion = 4
    cout = planes * expansion
    ks = jax.random.split(key, 16)

    def bn_fold(kg, kb, km, kv, c):
        gamma = 1.0 + 0.1 * jax.random.normal(kg, (c,), jnp.float32)
        beta = 0.1 * jax.random.normal(kb, (c,), jnp.float32)
        mean = 0.1 * jax.random.normal(km, (c,), jnp.float32)
        var = 1.0 + 0.1 * jnp.abs(jax.random.normal(kv, (c,), jnp.float32))
        s = gamma / jnp.sqrt(var + eps)
        b = beta - mean * s
        return s, b

    w1 = 0.1 * jax.random.normal(ks[0], (inplanes, planes), jnp.float32)
    w2 = 0.1 * jax.random.normal(ks[1], (3, 3, planes, planes), jnp.float32)
    w3 = 0.1 * jax.random.normal(ks[2], (planes, cout), jnp.float32)
    s1, b1 = bn_fold(ks[3], ks[4], ks[5], ks[6], planes)
    s2, b2 = bn_fold(ks[7], ks[8], ks[9], ks[10], planes)
    s3, b3 = bn_fold(ks[11], ks[12], ks[13], ks[14], cout)
    return dict(w1=w1, w2=w2, w3=w3, s1=s1, b1=b1, s2=s2, b2=b2, s3=s3, b3=b3)


def bottleneck_reference(x_nchw, p):
    """Pure-JAX reference (lax.conv) for correctness checking."""
    x = jnp.transpose(x_nchw, (0, 2, 3, 1)).astype(jnp.float32)
    dn = ('NHWC', 'HWIO', 'NHWC')
    cin, planes = p['w1'].shape
    cout = p['w3'].shape[1]

    y = lax.conv_general_dilated(x, p['w1'].reshape(1, 1, cin, planes),
                                 (1, 1), 'VALID', dimension_numbers=dn)
    y = jnp.maximum(y * p['s1'] + p['b1'], 0.0)
    y = lax.conv_general_dilated(y, p['w2'], (1, 1), 'SAME',
                                 dimension_numbers=dn)
    y = jnp.maximum(y * p['s2'] + p['b2'], 0.0)
    y = lax.conv_general_dilated(y, p['w3'].reshape(1, 1, planes, cout),
                                 (1, 1), 'VALID', dimension_numbers=dn)
    y = y * p['s3'] + p['b3']
    y = jnp.maximum(y + x, 0.0)
    return jnp.transpose(y, (0, 3, 1, 2))


# --------------------------------- main ------------------------------------ #
if __name__ == "__main__":
    key = jax.random.PRNGKey(0)
    k_x, k_p = jax.random.split(key)

    N, planes, H, W = 2, 4, 16, 16
    inplanes = planes * 4  # = 16, so downsample=None is valid (residual add)

    x = jax.random.normal(k_x, (N, inplanes, H, W), jnp.float32)  # NCHW
    params = init_params(k_p, inplanes, planes)

    # row_tile=8 -> 2 row tiles per sample, grid (2, 2): exercises the
    # multi-tile (pl.when / halo-from-scratch) path at the small test shape.
    out = bottleneck_forward(x, params, row_tile=8)
    out = jax.block_until_ready(out)

    ref = jax.block_until_ready(bottleneck_reference(x, params))
    np.testing.assert_allclose(np.asarray(out), np.asarray(ref),
                               rtol=2e-3, atol=2e-3)
    assert out.shape == (N, inplanes, H, W)

    print("KERNEL_OK")
</pallas_src>

<mosaic_0001>
module attributes {stable_mosaic.version = 11 : i64} {
  func.func @_bottleneck_kernel(%arg0: i32, %arg1: i32, %arg2: memref<1x256x16xf32, #tpu.memory_space<vmem>>, %arg3: memref<16x4xf32, #tpu.memory_space<vmem>>, %arg4: memref<1x4xf32, #tpu.memory_space<vmem>>, %arg5: memref<1x4xf32, #tpu.memory_space<vmem>>, %arg6: memref<3x3x4x4xf32, #tpu.memory_space<vmem>>, %arg7: memref<1x4xf32, #tpu.memory_space<vmem>>, %arg8: memref<1x4xf32, #tpu.memory_space<vmem>>, %arg9: memref<4x16xf32, #tpu.memory_space<vmem>>, %arg10: memref<1x16xf32, #tpu.memory_space<vmem>>, %arg11: memref<1x16xf32, #tpu.memory_space<vmem>>, %arg12: memref<1x128x16xf32, #tpu.memory_space<vmem>>, %arg13: memref<18x18x4xf32, #tpu.memory_space<vmem>>, %arg14: memref<128x4xf32, #tpu.memory_space<vmem>>) attributes {dimension_semantics = [#tpu.dimension_semantics<parallel>, #tpu.dimension_semantics<arbitrary>], iteration_bounds = array<i64: 2, 2>, scalar_prefetch = 0 : i64, scratch_operands = 2 : i64, tpu.core_type = #tpu.core_type<tc>, window_params = [{transform_indices = @transform_0, window_bounds = array<i64: 1, 256, 16>}, {pipeline_mode = #tpu.pipeline_mode<synchronous>, transform_indices = @transform_1, window_bounds = array<i64: 16, 4>}, {pipeline_mode = #tpu.pipeline_mode<synchronous>, transform_indices = @transform_2, window_bounds = array<i64: 1, 4>}, {pipeline_mode = #tpu.pipeline_mode<synchronous>, transform_indices = @transform_3, window_bounds = array<i64: 1, 4>}, {pipeline_mode = #tpu.pipeline_mode<synchronous>, transform_indices = @transform_4, window_bounds = array<i64: 3, 3, 4, 4>}, {pipeline_mode = #tpu.pipeline_mode<synchronous>, transform_indices = @transform_5, window_bounds = array<i64: 1, 4>}, {pipeline_mode = #tpu.pipeline_mode<synchronous>, transform_indices = @transform_6, window_bounds = array<i64: 1, 4>}, {pipeline_mode = #tpu.pipeline_mode<synchronous>, transform_indices = @transform_7, window_bounds = array<i64: 4, 16>}, {pipeline_mode = #tpu.pipeline_mode<synchronous>, transform_indices = @transform_8, window_bounds = array<i64: 1, 16>}, {pipeline_mode = #tpu.pipeline_mode<synchronous>, transform_indices = @transform_9, window_bounds = array<i64: 1, 16>}, {transform_indices = @transform_10, window_bounds = array<i64: 1, 128, 16>}]} {
    %c0_i32 = arith.constant 0 : i32
    %0 = arith.cmpi eq, %arg1, %c0_i32 : i32
    %1 = arith.extui %0 : i1 to i32
    %c0_i32_0 = arith.constant 0 : i32
    %2 = arith.cmpi ne, %1, %c0_i32_0 : i32
    scf.if %2 {
      %cst_126 = arith.constant 0.000000e+00 : f32
      %124 = vector.broadcast %cst_126 : f32 to vector<18x18x4xf32>
      %c0_127 = arith.constant 0 : index
      %c0_128 = arith.constant 0 : index
      %c0_129 = arith.constant 0 : index
      %125 = vector.load %arg13[%c0_127, %c0_128, %c0_129] : memref<18x18x4xf32, #tpu.memory_space<vmem>>, vector<18x18x4xf32>
      tpu.vector_store %arg13[%c0_127, %c0_128, %c0_129], %124 {strides = array<i32>} : memref<18x18x4xf32, #tpu.memory_space<vmem>>, vector<18x18x4xf32>,
      %c0_130 = arith.constant 0 : index
      %c0_131 = arith.constant 0 : index
      %c0_132 = arith.constant 0 : index
      %126 = vector.load %arg2[%c0_130, %c0_131, %c0_132] : memref<1x256x16xf32, #tpu.memory_space<vmem>>, vector<1x128x16xf32>
      %127 = vector.shape_cast %126 : vector<1x128x16xf32> to vector<128x16xf32>
      %c0_133 = arith.constant 0 : index
      %c0_134 = arith.constant 0 : index
      %128 = vector.load %arg3[%c0_133, %c0_134] : memref<16x4xf32, #tpu.memory_space<vmem>>, vector<16x4xf32>
      %cst_135 = arith.constant dense<0.000000e+00> : vector<128x4xf32>
      %129 = tpu.matmul %127, %128, %cst_135 {dimension_numbers = #tpu.dot_dimension_numbers<[1], [0], [0], [1], [0, 0, 1, 1], [], []>} : vector<128x16xf32>, vector<16x4xf32>, vector<128x4xf32> -> vector<128x4xf32>
      %c0_136 = arith.constant 0 : index
      %c0_137 = arith.constant 0 : index
      %130 = vector.load %arg4[%c0_136, %c0_137] : memref<1x4xf32, #tpu.memory_space<vmem>>, vector<1x4xf32>
      %131 = vector.broadcast %130 : vector<1x4xf32> to vector<128x4xf32>
      %132 = arith.mulf %129, %131 : vector<128x4xf32>
      %c0_138 = arith.constant 0 : index
      %c0_139 = arith.constant 0 : index
      %133 = vector.load %arg5[%c0_138, %c0_139] : memref<1x4xf32, #tpu.memory_space<vmem>>, vector<1x4xf32>
      %134 = vector.broadcast %133 : vector<1x4xf32> to vector<128x4xf32>
      %135 = arith.addf %132, %134 : vector<128x4xf32>
      %cst_140 = arith.constant 0.000000e+00 : f32
      %136 = vector.broadcast %cst_140 : f32 to vector<128x4xf32>
      %137 = arith.maximumf %135, %136 : vector<128x4xf32>
      %138 = vector.shape_cast %137 : vector<128x4xf32> to vector<8x16x4xf32>
      %c1_141 = arith.constant 1 : index
      %c1_142 = arith.constant 1 : index
      %c0_143 = arith.constant 0 : index
      %139 = vector.load %arg13[%c1_141, %c1_142, %c0_143] : memref<18x18x4xf32, #tpu.memory_space<vmem>>, vector<8x16x4xf32>
      tpu.vector_store %arg13[%c1_141, %c1_142, %c0_143], %138 {strides = array<i32>} : memref<18x18x4xf32, #tpu.memory_space<vmem>>, vector<8x16x4xf32>,
      %c0_144 = arith.constant 0 : index
      %c128 = arith.constant 128 : index
      %c0_145 = arith.constant 0 : index
      %140 = vector.load %arg2[%c0_144, %c128, %c0_145] : memref<1x256x16xf32, #tpu.memory_space<vmem>>, vector<1x128x16xf32>
      %141 = vector.shape_cast %140 : vector<1x128x16xf32> to vector<128x16xf32>
      %c0_146 = arith.constant 0 : index
      %c0_147 = arith.constant 0 : index
      %142 = vector.load %arg3[%c0_146, %c0_147] : memref<16x4xf32, #tpu.memory_space<vmem>>, vector<16x4xf32>
      %cst_148 = arith.constant dense<0.000000e+00> : vector<128x4xf32>
      %143 = tpu.matmul %141, %142, %cst_148 {dimension_numbers = #tpu.dot_dimension_numbers<[1], [0], [0], [1], [0, 0, 1, 1], [], []>} : vector<128x16xf32>, vector<16x4xf32>, vector<128x4xf32> -> vector<128x4xf32>
      %c0_149 = arith.constant 0 : index
      %c0_150 = arith.constant 0 : index
      %144 = vector.load %arg4[%c0_149, %c0_150] : memref<1x4xf32, #tpu.memory_space<vmem>>, vector<1x4xf32>
      %145 = vector.broadcast %144 : vector<1x4xf32> to vector<128x4xf32>
      %146 = arith.mulf %143, %145 : vector<128x4xf32>
      %c0_151 = arith.constant 0 : index
      %c0_152 = arith.constant 0 : index
      %147 = vector.load %arg5[%c0_151, %c0_152] : memref<1x4xf32, #tpu.memory_space<vmem>>, vector<1x4xf32>
      %148 = vector.broadcast %147 : vector<1x4xf32> to vector<128x4xf32>
      %149 = arith.addf %146, %148 : vector<128x4xf32>
      %cst_153 = arith.constant 0.000000e+00 : f32
      %150 = vector.broadcast %cst_153 : f32 to vector<128x4xf32>
      %151 = arith.maximumf %149, %150 : vector<128x4xf32>
      %152 = vector.shape_cast %151 : vector<128x4xf32> to vector<8x16x4xf32>
      %c9 = arith.constant 9 : index
      %c1_154 = arith.constant 1 : index
      %c0_155 = arith.constant 0 : index
      %153 = vector.load %arg13[%c9, %c1_154, %c0_155] : memref<18x18x4xf32, #tpu.memory_space<vmem>>, vector<8x16x4xf32>
      tpu.vector_store %arg13[%c9, %c1_154, %c0_155], %152 {strides = array<i32>} : memref<18x18x4xf32, #tpu.memory_space<vmem>>, vector<8x16x4xf32>,
    } else {
    }
    %c8_i32 = arith.constant 8 : i32
    %3 = arith.muli %arg1, %c8_i32 : i32
    %cst = arith.constant 0.000000e+00 : f32
    %4 = vector.broadcast %cst : f32 to vector<128x4xf32>
    %c0 = arith.constant 0 : index
    %c0_1 = arith.constant 0 : index
    %5 = vector.load %arg14[%c0, %c0_1] : memref<128x4xf32, #tpu.memory_space<vmem>>, vector<128x4xf32>
    tpu.vector_store %arg14[%c0, %c0_1], %4 {strides = array<i32>} : memref<128x4xf32, #tpu.memory_space<vmem>>, vector<128x4xf32>,
    %c0_i32_2 = arith.constant 0 : i32
    %6 = arith.addi %3, %c0_i32_2 : i32
    %7 = arith.index_cast %6 : i32 to index
    %c0_3 = arith.constant 0 : index
    %c0_4 = arith.constant 0 : index
    %8 = vector.load %arg13[%7, %c0_3, %c0_4] : memref<18x18x4xf32, #tpu.memory_space<vmem>>, vector<8x16x4xf32>
    %9 = vector.shape_cast %8 : vector<8x16x4xf32> to vector<128x4xf32>
    %c0_5 = arith.constant 0 : index
    %c0_6 = arith.constant 0 : index
    %10 = vector.load %arg14[%c0_5, %c0_6] : memref<128x4xf32, #tpu.memory_space<vmem>>, vector<128x4xf32>
    %c0_7 = arith.constant 0 : index
    %c0_8 = arith.constant 0 : index
    %c0_9 = arith.constant 0 : index
    %c0_10 = arith.constant 0 : index
    %11 = vector.load %arg6[%c0_7, %c0_8, %c0_9, %c0_10] : memref<3x3x4x4xf32, #tpu.memory_space<vmem>>, vector<1x1x4x4xf32>
    %12 = vector.shape_cast %11 : vector<1x1x4x4xf32> to vector<4x4xf32>
    %cst_11 = arith.constant dense<0.000000e+00> : vector<128x4xf32>
    %13 = tpu.matmul %9, %12, %cst_11 {dimension_numbers = #tpu.dot_dimension_numbers<[1], [0], [0], [1], [0, 0, 1, 1], [], []>} : vector<128x4xf32>, vector<4x4xf32>, vector<128x4xf32> -> vector<128x4xf32>
    %14 = arith.addf %10, %13 : vector<128x4xf32>
    %c0_12 = arith.constant 0 : index
    %c0_13 = arith.constant 0 : index
    %15 = vector.load %arg14[%c0_12, %c0_13] : memref<128x4xf32, #tpu.memory_space<vmem>>, vector<128x4xf32>
    tpu.vector_store %arg14[%c0_12, %c0_13], %14 {strides = array<i32>} : memref<128x4xf32, #tpu.memory_space<vmem>>, vector<128x4xf32>,
    %c0_i32_14 = arith.constant 0 : i32
    %16 = arith.addi %3, %c0_i32_14 : i32
    %17 = arith.index_cast %16 : i32 to index
    %c1 = arith.constant 1 : index
    %c0_15 = arith.constant 0 : index
    %18 = vector.load %arg13[%17, %c1, %c0_15] : memref<18x18x4xf32, #tpu.memory_space<vmem>>, vector<8x16x4xf32>
    %19 = vector.shape_cast %18 : vector<8x16x4xf32> to vector<128x4xf32>
    %c0_16 = arith.constant 0 : index
    %c0_17 = arith.constant 0 : index
    %20 = vector.load %arg14[%c0_16, %c0_17] : memref<128x4xf32, #tpu.memory_space<vmem>>, vector<128x4xf32>
    %c0_18 = arith.constant 0 : index
    %c1_19 = arith.constant 1 : index
    %c0_20 = arith.constant 0 : index
    %c0_21 = arith.constant 0 : index
    %21 = vector.load %arg6[%c0_18, %c1_19, %c0_20, %c0_21] : memref<3x3x4x4xf32, #tpu.memory_space<vmem>>, vector<1x1x4x4xf32>
    %22 = vector.shape_cast %21 : vector<1x1x4x4xf32> to vector<4x4xf32>
    %cst_22 = arith.constant dense<0.000000e+00> : vector<128x4xf32>
    %23 = tpu.matmul %19, %22, %cst_22 {dimension_numbers = #tpu.dot_dimension_numbers<[1], [0], [0], [1], [0, 0, 1, 1], [], []>} : vector<128x4xf32>, vector<4x4xf32>, vector<128x4xf32> -> vector<128x4xf32>
    %24 = arith.addf %20, %23 : vector<128x4xf32>
    %c0_23 = arith.constant 0 : index
    %c0_24 = arith.constant 0 : index
    %25 = vector.load %arg14[%c0_23, %c0_24] : memref<128x4xf32, #tpu.memory_space<vmem>>, vector<128x4xf32>
    tpu.vector_store %arg14[%c0_23, %c0_24], %24 {strides = array<i32>} : memref<128x4xf32, #tpu.memory_space<vmem>>, vector<128x4xf32>,
    %c0_i32_25 = arith.constant 0 : i32
    %26 = arith.addi %3, %c0_i32_25 : i32
    %27 = arith.index_cast %26 : i32 to index
    %c2 = arith.constant 2 : index
    %c0_26 = arith.constant 0 : index
    %28 = vector.load %arg13[%27, %c2, %c0_26] : memref<18x18x4xf32, #tpu.memory_space<vmem>>, vector<8x16x4xf32>
    %29 = vector.shape_cast %28 : vector<8x16x4xf32> to vector<128x4xf32>
    %c0_27 = arith.constant 0 : index
    %c0_28 = arith.constant 0 : index
    %30 = vector.load %arg14[%c0_27, %c0_28] : memref<128x4xf32, #tpu.memory_space<vmem>>, vector<128x4xf32>
    %c0_29 = arith.constant 0 : index
    %c2_30 = arith.constant 2 : index
    %c0_31 = arith.constant 0 : index
    %c0_32 = arith.constant 0 : index
    %31 = vector.load %arg6[%c0_29, %c2_30, %c0_31, %c0_32] : memref<3x3x4x4xf32, #tpu.memory_space<vmem>>, vector<1x1x4x4xf32>
    %32 = vector.shape_cast %31 : vector<1x1x4x4xf32> to vector<4x4xf32>
    %cst_33 = arith.constant dense<0.000000e+00> : vector<128x4xf32>
    %33 = tpu.matmul %29, %32, %cst_33 {dimension_numbers = #tpu.dot_dimension_numbers<[1], [0], [0], [1], [0, 0, 1, 1], [], []>} : vector<128x4xf32>, vector<4x4xf32>, vector<128x4xf32> -> vector<128x4xf32>
    %34 = arith.addf %30, %33 : vector<128x4xf32>
    %c0_34 = arith.constant 0 : index
    %c0_35 = arith.constant 0 : index
    %35 = vector.load %arg14[%c0_34, %c0_35] : memref<128x4xf32, #tpu.memory_space<vmem>>, vector<128x4xf32>
    tpu.vector_store %arg14[%c0_34, %c0_35], %34 {strides = array<i32>} : memref<128x4xf32, #tpu.memory_space<vmem>>, vector<128x4xf32>,
    %c1_i32 = arith.constant 1 : i32
    %36 = arith.addi %3, %c1_i32 : i32
    %37 = arith.index_cast %36 : i32 to index
    %c0_36 = arith.constant 0 : index
    %c0_37 = arith.constant 0 : index
    %38 = vector.load %arg13[%37, %c0_36, %c0_37] : memref<18x18x4xf32, #tpu.memory_space<vmem>>, vector<8x16x4xf32>
    %39 = vector.shape_cast %38 : vector<8x16x4xf32> to vector<128x4xf32>
    %c0_38 = arith.constant 0 : index
    %c0_39 = arith.constant 0 : index
    %40 = vector.load %arg14[%c0_38, %c0_39] : memref<128x4xf32, #tpu.memory_space<vmem>>, vector<128x4xf32>
    %c1_40 = arith.constant 1 : index
    %c0_41 = arith.constant 0 : index
    %c0_42 = arith.constant 0 : index
    %c0_43 = arith.constant 0 : index
    %41 = vector.load %arg6[%c1_40, %c0_41, %c0_42, %c0_43] : memref<3x3x4x4xf32, #tpu.memory_space<vmem>>, vector<1x1x4x4xf32>
    %42 = vector.shape_cast %41 : vector<1x1x4x4xf32> to vector<4x4xf32>
    %cst_44 = arith.constant dense<0.000000e+00> : vector<128x4xf32>
    %43 = tpu.matmul %39, %42, %cst_44 {dimension_numbers = #tpu.dot_dimension_numbers<[1], [0], [0], [1], [0, 0, 1, 1], [], []>} : vector<128x4xf32>, vector<4x4xf32>, vector<128x4xf32> -> vector<128x4xf32>
    %44 = arith.addf %40, %43 : vector<128x4xf32>
    %c0_45 = arith.constant 0 : index
    %c0_46 = arith.constant 0 : index
    %45 = vector.load %arg14[%c0_45, %c0_46] : memref<128x4xf32, #tpu.memory_space<vmem>>, vector<128x4xf32>
    tpu.vector_store %arg14[%c0_45, %c0_46], %44 {strides = array<i32>} : memref<128x4xf32, #tpu.memory_space<vmem>>, vector<128x4xf32>,
    %c1_i32_47 = arith.constant 1 : i32
    %46 = arith.addi %3, %c1_i32_47 : i32
    %47 = arith.index_cast %46 : i32 to index
    %c1_48 = arith.constant 1 : index
    %c0_49 = arith.constant 0 : index
    %48 = vector.load %arg13[%47, %c1_48, %c0_49] : memref<18x18x4xf32, #tpu.memory_space<vmem>>, vector<8x16x4xf32>
    %49 = vector.shape_cast %48 : vector<8x16x4xf32> to vector<128x4xf32>
    %c0_50 = arith.constant 0 : index
    %c0_51 = arith.constant 0 : index
    %50 = vector.load %arg14[%c0_50, %c0_51] : memref<128x4xf32, #tpu.memory_space<vmem>>, vector<128x4xf32>
    %c1_52 = arith.constant 1 : index
    %c1_53 = arith.constant 1 : index
    %c0_54 = arith.constant 0 : index
    %c0_55 = arith.constant 0 : index
    %51 = vector.load %arg6[%c1_52, %c1_53, %c0_54, %c0_55] : memref<3x3x4x4xf32, #tpu.memory_space<vmem>>, vector<1x1x4x4xf32>
    %52 = vector.shape_cast %51 : vector<1x1x4x4xf32> to vector<4x4xf32>
    %cst_56 = arith.constant dense<0.000000e+00> : vector<128x4xf32>
    %53 = tpu.matmul %49, %52, %cst_56 {dimension_numbers = #tpu.dot_dimension_numbers<[1], [0], [0], [1], [0, 0, 1, 1], [], []>} : vector<128x4xf32>, vector<4x4xf32>, vector<128x4xf32> -> vector<128x4xf32>
    %54 = arith.addf %50, %53 : vector<128x4xf32>
    %c0_57 = arith.constant 0 : index
    %c0_58 = arith.constant 0 : index
    %55 = vector.load %arg14[%c0_57, %c0_58] : memref<128x4xf32, #tpu.memory_space<vmem>>, vector<128x4xf32>
    tpu.vector_store %arg14[%c0_57, %c0_58], %54 {strides = array<i32>} : memref<128x4xf32, #tpu.memory_space<vmem>>, vector<128x4xf32>,
    %c1_i32_59 = arith.constant 1 : i32
    %56 = arith.addi %3, %c1_i32_59 : i32
    %57 = arith.index_cast %56 : i32 to index
    %c2_60 = arith.constant 2 : index
    %c0_61 = arith.constant 0 : index
    %58 = vector.load %arg13[%57, %c2_60, %c0_61] : memref<18x18x4xf32, #tpu.memory_space<vmem>>, vector<8x16x4xf32>
    %59 = vector.shape_cast %58 : vector<8x16x4xf32> to vector<128x4xf32>
    %c0_62 = arith.constant 0 : index
    %c0_63 = arith.constant 0 : index
    %60 = vector.load %arg14[%c0_62, %c0_63] : memref<128x4xf32, #tpu.memory_space<vmem>>, vector<128x4xf32>
    %c1_64 = arith.constant 1 : index
    %c2_65 = arith.constant 2 : index
    %c0_66 = arith.constant 0 : index
    %c0_67 = arith.constant 0 : index
    %61 = vector.load %arg6[%c1_64, %c2_65, %c0_66, %c0_67] : memref<3x3x4x4xf32, #tpu.memory_space<vmem>>, vector<1x1x4x4xf32>
    %62 = vector.shape_cast %61 : vector<1x1x4x4xf32> to vector<4x4xf32>
    %cst_68 = arith.constant dense<0.000000e+00> : vector<128x4xf32>
    %63 = tpu.matmul %59, %62, %cst_68 {dimension_numbers = #tpu.dot_dimension_numbers<[1], [0], [0], [1], [0, 0, 1, 1], [], []>} : vector<128x4xf32>, vector<4x4xf32>, vector<128x4xf32> -> vector<128x4xf32>
    %64 = arith.addf %60, %63 : vector<128x4xf32>
    %c0_69 = arith.constant 0 : index
    %c0_70 = arith.constant 0 : index
    %65 = vector.load %arg14[%c0_69, %c0_70] : memref<128x4xf32, #tpu.memory_space<vmem>>, vector<128x4xf32>
    tpu.vector_store %arg14[%c0_69, %c0_70], %64 {strides = array<i32>} : memref<128x4xf32, #tpu.memory_space<vmem>>, vector<128x4xf32>,
    %c2_i32 = arith.constant 2 : i32
    %66 = arith.addi %3, %c2_i32 : i32
    %67 = arith.index_cast %66 : i32 to index
    %c0_71 = arith.constant 0 : index
    %c0_72 = arith.constant 0 : index
    %68 = vector.load %arg13[%67, %c0_71, %c0_72] : memref<18x18x4xf32, #tpu.memory_space<vmem>>, vector<8x16x4xf32>
    %69 = vector.shape_cast %68 : vector<8x16x4xf32> to vector<128x4xf32>
    %c0_73 = arith.constant 0 : index
    %c0_74 = arith.constant 0 : index
    %70 = vector.load %arg14[%c0_73, %c0_74] : memref<128x4xf32, #tpu.memory_space<vmem>>, vector<128x4xf32>
    %c2_75 = arith.constant 2 : index
    %c0_76 = arith.constant 0 : index
    %c0_77 = arith.constant 0 : index
    %c0_78 = arith.constant 0 : index
    %71 = vector.load %arg6[%c2_75, %c0_76, %c0_77, %c0_78] : memref<3x3x4x4xf32, #tpu.memory_space<vmem>>, vector<1x1x4x4xf32>
    %72 = vector.shape_cast %71 : vector<1x1x4x4xf32> to vector<4x4xf32>
    %cst_79 = arith.constant dense<0.000000e+00> : vector<128x4xf32>
    %73 = tpu.matmul %69, %72, %cst_79 {dimension_numbers = #tpu.dot_dimension_numbers<[1], [0], [0], [1], [0, 0, 1, 1], [], []>} : vector<128x4xf32>, vector<4x4xf32>, vector<128x4xf32> -> vector<128x4xf32>
    %74 = arith.addf %70, %73 : vector<128x4xf32>
    %c0_80 = arith.constant 0 : index
    %c0_81 = arith.constant 0 : index
    %75 = vector.load %arg14[%c0_80, %c0_81] : memref<128x4xf32, #tpu.memory_space<vmem>>, vector<128x4xf32>
    tpu.vector_store %arg14[%c0_80, %c0_81], %74 {strides = array<i32>} : memref<128x4xf32, #tpu.memory_space<vmem>>, vector<128x4xf32>,
    %c2_i32_82 = arith.constant 2 : i32
    %76 = arith.addi %3, %c2_i32_82 : i32
    %77 = arith.index_cast %76 : i32 to index
    %c1_83 = arith.constant 1 : index
    %c0_84 = arith.constant 0 : index
    %78 = vector.load %arg13[%77, %c1_83, %c0_84] : memref<18x18x4xf32, #tpu.memory_space<vmem>>, vector<8x16x4xf32>
    %79 = vector.shape_cast %78 : vector<8x16x4xf32> to vector<128x4xf32>
    %c0_85 = arith.constant 0 : index
    %c0_86 = arith.constant 0 : index
    %80 = vector.load %arg14[%c0_85, %c0_86] : memref<128x4xf32, #tpu.memory_space<vmem>>, vector<128x4xf32>
    %c2_87 = arith.constant 2 : index
    %c1_88 = arith.constant 1 : index
    %c0_89 = arith.constant 0 : index
    %c0_90 = arith.constant 0 : index
    %81 = vector.load %arg6[%c2_87, %c1_88, %c0_89, %c0_90] : memref<3x3x4x4xf32, #tpu.memory_space<vmem>>, vector<1x1x4x4xf32>
    %82 = vector.shape_cast %81 : vector<1x1x4x4xf32> to vector<4x4xf32>
    %cst_91 = arith.constant dense<0.000000e+00> : vector<128x4xf32>
    %83 = tpu.matmul %79, %82, %cst_91 {dimension_numbers = #tpu.dot_dimension_numbers<[1], [0], [0], [1], [0, 0, 1, 1], [], []>} : vector<128x4xf32>, vector<4x4xf32>, vector<128x4xf32> -> vector<128x4xf32>
    %84 = arith.addf %80, %83 : vector<128x4xf32>
    %c0_92 = arith.constant 0 : index
    %c0_93 = arith.constant 0 : index
    %85 = vector.load %arg14[%c0_92, %c0_93] : memref<128x4xf32, #tpu.memory_space<vmem>>, vector<128x4xf32>
    tpu.vector_store %arg14[%c0_92, %c0_93], %84 {strides = array<i32>} : memref<128x4xf32, #tpu.memory_space<vmem>>, vector<128x4xf32>,
    %c2_i32_94 = arith.constant 2 : i32
    %86 = arith.addi %3, %c2_i32_94 : i32
    %87 = arith.index_cast %86 : i32 to index
    %c2_95 = arith.constant 2 : index
    %c0_96 = arith.constant 0 : index
    %88 = vector.load %arg13[%87, %c2_95, %c0_96] : memref<18x18x4xf32, #tpu.memory_space<vmem>>, vector<8x16x4xf32>
    %89 = vector.shape_cast %88 : vector<8x16x4xf32> to vector<128x4xf32>
    %c0_97 = arith.constant 0 : index
    %c0_98 = arith.constant 0 : index
    %90 = vector.load %arg14[%c0_97, %c0_98] : memref<128x4xf32, #tpu.memory_space<vmem>>, vector<128x4xf32>
    %c2_99 = arith.constant 2 : index
    %c2_100 = arith.constant 2 : index
    %c0_101 = arith.constant 0 : index
    %c0_102 = arith.constant 0 : index
    %91 = vector.load %arg6[%c2_99, %c2_100, %c0_101, %c0_102] : memref<3x3x4x4xf32, #tpu.memory_space<vmem>>, vector<1x1x4x4xf32>
    %92 = vector.shape_cast %91 : vector<1x1x4x4xf32> to vector<4x4xf32>
    %cst_103 = arith.constant dense<0.000000e+00> : vector<128x4xf32>
    %93 = tpu.matmul %89, %92, %cst_103 {dimension_numbers = #tpu.dot_dimension_numbers<[1], [0], [0], [1], [0, 0, 1, 1], [], []>} : vector<128x4xf32>, vector<4x4xf32>, vector<128x4xf32> -> vector<128x4xf32>
    %94 = arith.addf %90, %93 : vector<128x4xf32>
    %c0_104 = arith.constant 0 : index
    %c0_105 = arith.constant 0 : index
    %95 = vector.load %arg14[%c0_104, %c0_105] : memref<128x4xf32, #tpu.memory_space<vmem>>, vector<128x4xf32>
    tpu.vector_store %arg14[%c0_104, %c0_105], %94 {strides = array<i32>} : memref<128x4xf32, #tpu.memory_space<vmem>>, vector<128x4xf32>,
    %c0_106 = arith.constant 0 : index
    %c0_107 = arith.constant 0 : index
    %96 = vector.load %arg14[%c0_106, %c0_107] : memref<128x4xf32, #tpu.memory_space<vmem>>, vector<128x4xf32>
    %c0_108 = arith.constant 0 : index
    %c0_109 = arith.constant 0 : index
    %97 = vector.load %arg7[%c0_108, %c0_109] : memref<1x4xf32, #tpu.memory_space<vmem>>, vector<1x4xf32>
    %98 = vector.broadcast %97 : vector<1x4xf32> to vector<128x4xf32>
    %99 = arith.mulf %96, %98 : vector<128x4xf32>
    %c0_110 = arith.constant 0 : index
    %c0_111 = arith.constant 0 : index
    %100 = vector.load %arg8[%c0_110, %c0_111] : memref<1x4xf32, #tpu.memory_space<vmem>>, vector<1x4xf32>
    %101 = vector.broadcast %100 : vector<1x4xf32> to vector<128x4xf32>
    %102 = arith.addf %99, %101 : vector<128x4xf32>
    %cst_112 = arith.constant 0.000000e+00 : f32
    %103 = vector.broadcast %cst_112 : f32 to vector<128x4xf32>
    %104 = arith.maximumf %102, %103 : vector<128x4xf32>
    %c0_113 = arith.constant 0 : index
    %c0_114 = arith.constant 0 : index
    %105 = vector.load %arg9[%c0_113, %c0_114] : memref<4x16xf32, #tpu.memory_space<vmem>>, vector<4x16xf32>
    %cst_115 = arith.constant dense<0.000000e+00> : vector<128x16xf32>
    %106 = tpu.matmul %104, %105, %cst_115 {dimension_numbers = #tpu.dot_dimension_numbers<[1], [0], [0], [1], [0, 0, 1, 1], [], []>} : vector<128x4xf32>, vector<4x16xf32>, vector<128x16xf32> -> vector<128x16xf32>
    %c0_116 = arith.constant 0 : index
    %c0_117 = arith.constant 0 : index
    %107 = vector.load %arg10[%c0_116, %c0_117] : memref<1x16xf32, #tpu.memory_space<vmem>>, vector<1x16xf32>
    %108 = vector.broadcast %107 : vector<1x16xf32> to vector<128x16xf32>
    %109 = arith.mulf %106, %108 : vector<128x16xf32>
    %c0_118 = arith.constant 0 : index
    %c0_119 = arith.constant 0 : index
    %110 = vector.load %arg11[%c0_118, %c0_119] : memref<1x16xf32, #tpu.memory_space<vmem>>, vector<1x16xf32>
    %111 = vector.broadcast %110 : vector<1x16xf32> to vector<128x16xf32>
    %112 = arith.addf %109, %111 : vector<128x16xf32>
    %c128_i32 = arith.constant 128 : i32
    %113 = arith.muli %arg1, %c128_i32 : i32
    %114 = tpu.assume_multiple %113, 8 : i32
    %c0_120 = arith.constant 0 : index
    %115 = arith.index_cast %114 : i32 to index
    %c0_121 = arith.constant 0 : index
    %116 = vector.load %arg2[%c0_120, %115, %c0_121] : memref<1x256x16xf32, #tpu.memory_space<vmem>>, vector<1x128x16xf32>
    %117 = vector.shape_cast %116 : vector<1x128x16xf32> to vector<128x16xf32>
    %118 = arith.addf %112, %117 : vector<128x16xf32>
    %cst_122 = arith.constant 0.000000e+00 : f32
    %119 = vector.broadcast %cst_122 : f32 to vector<128x16xf32>
    %120 = arith.maximumf %118, %119 : vector<128x16xf32>
    %c0_123 = arith.constant 0 : index
    %c0_124 = arith.constant 0 : index
    %c0_125 = arith.constant 0 : index
    %121 = vector.load %arg12[%c0_123, %c0_124, %c0_125] : memref<1x128x16xf32, #tpu.memory_space<vmem>>, vector<1x128x16xf32>
    %122 = vector.shape_cast %121 : vector<1x128x16xf32> to vector<128x16xf32>
    %123 = vector.shape_cast %120 : vector<128x16xf32> to vector<1x128x16xf32>
    tpu.vector_store %arg12[%c0_123, %c0_124, %c0_125], %123 {strides = array<i32>} : memref<1x128x16xf32, #tpu.memory_space<vmem>>, vector<1x128x16xf32>,
    return
  }
  func.func @transform_0(%arg0: i32, %arg1: i32) -> (i32, i32, i32) {
    %c0_i32 = arith.constant 0 : i32
    %c0_i32_0 = arith.constant 0 : i32
    %c0_i32_1 = arith.constant 0 : i32
    return %arg0, %c0_i32, %c0_i32_0 : i32, i32, i32
  }
  func.func @transform_1(%arg0: i32, %arg1: i32) -> (i32, i32) {
    %c0_i32 = arith.constant 0 : i32
    %c0_i32_0 = arith.constant 0 : i32
    %c0_i32_1 = arith.constant 0 : i32
    return %c0_i32, %c0_i32_0 : i32, i32
  }
  func.func @transform_2(%arg0: i32, %arg1: i32) -> (i32, i32) {
    %c0_i32 = arith.constant 0 : i32
    %c0_i32_0 = arith.constant 0 : i32
    %c0_i32_1 = arith.constant 0 : i32
    return %c0_i32, %c0_i32_0 : i32, i32
  }
  func.func @transform_3(%arg0: i32, %arg1: i32) -> (i32, i32) {
    %c0_i32 = arith.constant 0 : i32
    %c0_i32_0 = arith.constant 0 : i32
    %c0_i32_1 = arith.constant 0 : i32
    return %c0_i32, %c0_i32_0 : i32, i32
  }
  func.func @transform_4(%arg0: i32, %arg1: i32) -> (i32, i32, i32, i32) {
    %c0_i32 = arith.constant 0 : i32
    %c0_i32_0 = arith.constant 0 : i32
    %c0_i32_1 = arith.constant 0 : i32
    %c0_i32_2 = arith.constant 0 : i32
    %c0_i32_3 = arith.constant 0 : i32
    return %c0_i32, %c0_i32_0, %c0_i32_1, %c0_i32_2 : i32, i32, i32, i32
  }
  func.func @transform_5(%arg0: i32, %arg1: i32) -> (i32, i32) {
    %c0_i32 = arith.constant 0 : i32
    %c0_i32_0 = arith.constant 0 : i32
    %c0_i32_1 = arith.constant 0 : i32
    return %c0_i32, %c0_i32_0 : i32, i32
  }
  func.func @transform_6(%arg0: i32, %arg1: i32) -> (i32, i32) {
    %c0_i32 = arith.constant 0 : i32
    %c0_i32_0 = arith.constant 0 : i32
    %c0_i32_1 = arith.constant 0 : i32
    return %c0_i32, %c0_i32_0 : i32, i32
  }
  func.func @transform_7(%arg0: i32, %arg1: i32) -> (i32, i32) {
    %c0_i32 = arith.constant 0 : i32
    %c0_i32_0 = arith.constant 0 : i32
    %c0_i32_1 = arith.constant 0 : i32
    return %c0_i32, %c0_i32_0 : i32, i32
  }
  func.func @transform_8(%arg0: i32, %arg1: i32) -> (i32, i32) {
    %c0_i32 = arith.constant 0 : i32
    %c0_i32_0 = arith.constant 0 : i32
    %c0_i32_1 = arith.constant 0 : i32
    return %c0_i32, %c0_i32_0 : i32, i32
  }
  func.func @transform_9(%arg0: i32, %arg1: i32) -> (i32, i32) {
    %c0_i32 = arith.constant 0 : i32
    %c0_i32_0 = arith.constant 0 : i32
    %c0_i32_1 = arith.constant 0 : i32
    return %c0_i32, %c0_i32_0 : i32, i32
  }
  func.func @transform_10(%arg0: i32, %arg1: i32) -> (i32, i32, i32) {
    %c0_i32 = arith.constant 0 : i32
    %c0_i32_0 = arith.constant 0 : i32
    return %arg0, %arg1, %c0_i32 : i32, i32, i32
  }
}

</mosaic_0001>

<llo_original>
// kernel: tpu_custom_call.1
$region0: #{tpu_custom_call.1}
  #allocation0 [shape = 'u32[]', space=smem, size = 0x4, offset = 0x4, fixed_abs, tag = 'smem constant byte address 0x4 - core index']
  #allocation1 [shape = 'u32[144,128]{1,0:T(1,128)}', space=vmem, size = 0x12000, scoped, tag = 'internal scratch']
  #allocation2 [shape = 'f32[18,18,4]{2,1,0:T(8,128)}', space=vmem, size = 0x36000, scoped, tag = 'scratch operand']
  #allocation3 [shape = 'f32[128,4]{1,0:T(8,128)}', space=vmem, size = 0x10000, scoped, tag = 'scratch operand']
  %s0 = inlined_call_operand.hbm [shape: f32[2,256,16], index: 0, kind: input, shape index: {}]
  %s1 = inlined_call_operand.hbm [shape: f32[16,4], index: 1, kind: input, shape index: {}]
  %s2 = inlined_call_operand.hbm [shape: f32[1,4], index: 2, kind: input, shape index: {}]
  %s3 = inlined_call_operand.hbm [shape: f32[1,4], index: 3, kind: input, shape index: {}]
  %s4 = inlined_call_operand.hbm [shape: f32[3,3,4,4], index: 4, kind: input, shape index: {}]
  %s5 = inlined_call_operand.hbm [shape: f32[1,4], index: 5, kind: input, shape index: {}]
  %s6 = inlined_call_operand.hbm [shape: f32[1,4], index: 6, kind: input, shape index: {}]
  %s7 = inlined_call_operand.hbm [shape: f32[4,16], index: 7, kind: input, shape index: {}]
  %s8 = inlined_call_operand.hbm [shape: f32[1,16], index: 8, kind: input, shape index: {}]
  %s9 = inlined_call_operand.hbm [shape: f32[1,16], index: 9, kind: input, shape index: {}]
  %s10 = inlined_call_operand.hbm [shape: f32[2,256,16], index: 10, kind: output, shape index: {}]
  %s11 = sld [smem:[#allocation0]]
  $region117: #{tpu_custom_call.1} parent=0
    _
  %s13 = ssub.s32 1, %s11
  %s14 = scalar_select 0, %s13, %s11
  $region1: #{tpu_custom_call.1} parent=0
    #allocation4 [shape = 'u8[262144]{0}', space=vmem, size = 0x40000, scoped, tag = 'input window, operand 0']
    #allocation5 [shape = 's32[2]{0}', space=sflag, size = 0x8, scoped, tag = 'scoped memory for tpu_custom_call.1']
    #allocation6 [shape = 's32[2]{0}', space=sflag, size = 0x8, scoped, tag = 'scoped memory for tpu_custom_call.1']
    #allocation7 [shape = 'u8[8192]{0}', space=vmem, size = 0x2000, scoped, tag = 'input window, operand 1, single buffered']
    #allocation8 [shape = 's32[1]{0}', space=sflag, size = 0x4, scoped, tag = 'scoped memory for tpu_custom_call.1']
    #allocation9 [shape = 'u8[512]{0}', space=vmem, size = 0x400, scoped, tag = 'input window, operand 2, single buffered']
    #allocation10 [shape = 'u8[512]{0}', space=vmem, size = 0x400, scoped, tag = 'input window, operand 3, single buffered']
    #allocation11 [shape = 's32[1]{0}', space=sflag, size = 0x4, scoped, tag = 'scoped memory for tpu_custom_call.1']
    #allocation12 [shape = 'u8[18432]{0}', space=vmem, size = 0x4800, scoped, tag = 'input window, operand 4, single buffered']
    #allocation13 [shape = 'u8[512]{0}', space=vmem, size = 0x400, scoped, tag = 'input window, operand 5, single buffered']
    #allocation14 [shape = 's32[1]{0}', space=sflag, size = 0x4, scoped, tag = 'scoped memory for tpu_custom_call.1']
    #allocation15 [shape = 'u8[512]{0}', space=vmem, size = 0x400, scoped, tag = 'input window, operand 6, single buffered']
    #allocation16 [shape = 'u8[2048]{0}', space=vmem, size = 0x800, scoped, tag = 'input window, operand 7, single buffered']
    #allocation17 [shape = 's32[1]{0}', space=sflag, size = 0x4, scoped, tag = 'scoped memory for tpu_custom_call.1']
    #allocation18 [shape = 'u8[512]{0}', space=vmem, size = 0x400, scoped, tag = 'input window, operand 8, single buffered']
    #allocation19 [shape = 'u8[512]{0}', space=vmem, size = 0x400, scoped, tag = 'input window, operand 9, single buffered']
    #allocation20 [shape = 's32[1]{0}', space=sflag, size = 0x4, scoped, tag = 'scoped memory for tpu_custom_call.1']
    #allocation21 [shape = 'u8[131072]{0}', space=vmem, size = 0x20000, scoped, tag = 'output window, operand 0']
    %15 = vsyncpa [#allocation5], 0
    %s16 = scalar_lea.sflag [#allocation5], 1
    %17 = vsyncpa %s16, 0
    %18 = vsyncpa [#allocation8], 0
    %19 = vsyncpa [#allocation11], 0
    %20 = vsyncpa [#allocation14], 0
    %21 = vsyncpa [#allocation17], 0
    %22 = vsyncpa [#allocation20], 0
    %23 = vsyncpa [#allocation6], 0
    %s24 = scalar_lea.sflag [#allocation6], 1
    %25 = vsyncpa %s24, 0
    loop: start=0, step=1, limit=6
    $region2: #{tpu_custom_call.1} parent=1 // loop_pre_header
      _
    $region3: #{tpu_custom_call.1} parent=1 // loop_header
      %s27 = sphi 0, %s31
      %p28 = scmp.ge.s32.totalorder %s27, 6
      %s34 = sphi 0, %s46
      %s35 = sphi 0, %s42
      %s36 = sphi 0, %s34
      %s37 = sphi 0, %s35
      %s38 = sphi 0, %s36
      %s39 = sphi 0, %s37
      %s49 = sphi 0, %s51
      %s52 = sphi 0, %s49
      %s53 = sphi 0, %s52
      %s69 = sphi 0, %s53
      %s73 = sphi 0, %s73
      %s75 = sphi 0, %s73
      %s76 = sphi 0, %s75
      %s90 = sphi 0, %s76
      %s94 = sphi 0, %s94
      %s96 = sphi 0, %s94
      %s97 = sphi 0, %s96
      %s111 = sphi 0, %s97
      %s115 = sphi 0, %s115
      %s117 = sphi 0, %s115
      %s118 = sphi 0, %s117
      %s132 = sphi 0, %s118
      %s136 = sphi 0, %s136
      %s138 = sphi 0, %s136
      %s139 = sphi 0, %s138
      %s153 = sphi 0, %s139
      %s157 = sphi 0, %s157
      %s159 = sphi 0, %s157
      %s160 = sphi 0, %s159
      %s174 = sphi 0, %s160
      %s178 = sphi 0, %s178
      %s180 = sphi 0, %s178
      %s181 = sphi 0, %s180
      %s195 = sphi 0, %s181
      %s199 = sphi 0, %s199
      %s201 = sphi 0, %s199
      %s202 = sphi 0, %s201
      %s216 = sphi 0, %s202
      %s220 = sphi 0, %s220
      %s222 = sphi 0, %s220
      %s223 = sphi 0, %s222
      %s237 = sphi 0, %s223
      %s241 = sphi 0, %s241
      %s243 = sphi 0, %s241
      %s244 = sphi 0, %s243
      %s258 = sphi 0, %s244
      %s266 = sphi 0, %s268
      %s269 = sphi 0, %s266
      %s270 = sphi 0, %s269
      %s286 = sphi 0, %s270
    $region4: #{tpu_custom_call.1} parent=1 // loop_header_branch
      %30 = sbr.rel (%p28) target = $region8
    $region5: #{tpu_custom_call.1} parent=1 // loop_body
      %s32 = ssub.s32 %s27, 1
      %s33 = ssub.s32 %s27, 2
      %s40 = sadd.s32 1, %s35
      %p41 = scmp.ge.s32.totalorder %s40, 2
      %s42 = scalar_select %p41, 0, %s40
      %s43 = sadd.s32 1, %s34
      %s44 = scalar_select %p41, %s43, %s34
      %p45 = scmp.ge.s32.totalorder %s44, 2
      %s46 = scalar_select %p45, 0, %s44
      %s47 = ssub.s32 %s34, %s46
      %p48 = scmp.eq.s32.totalorder %s47, 0
      %s50 = sadd.s32 %s49, 1
      %s51 = scalar_select %p48, %s49, %s50
      %p54 = pneg %p48
      %p55 = scmp.eq.s32.totalorder %s27, 3
      %p56 = por %p54, %p55
      %p57 = scmp.ne.s32.totalorder %s49, %s52
      %p58 = scmp.eq.s32.totalorder %s27, 0
      %p59 = por %p57, %p58
      %p60 = scmp.ne.s32.totalorder %s49, %s52
      %p61 = scmp.eq.s32.totalorder %s32, 3
      %p62 = por %p60, %p61
      %p63 = scmp.ne.s32.totalorder %s52, %s53
      %p64 = scmp.eq.s32.totalorder %s32, 0
      %p65 = por %p63, %p64
      %p66 = scmp.ne.s32.totalorder %s52, %s53
      %p67 = scmp.eq.s32.totalorder %s33, 3
      %p68 = por %p66, %p67
      %p70 = scmp.ne.s32.totalorder %s53, %s69
      %p71 = scmp.eq.s32.totalorder %s33, 0
      %p72 = por %p70, %p71
      %s74 = sadd.s32 %s73, 1
      %p77 = scmp.eq.s32.totalorder %s27, 3
      %p78 = scmp.ne.s32.totalorder %s73, %s75
      %p79 = scmp.eq.s32.totalorder %s27, 0
      %p80 = por %p78, %p79
      %p81 = scmp.ne.s32.totalorder %s73, %s75
      %p82 = scmp.eq.s32.totalorder %s32, 3
      %p83 = por %p81, %p82
      %p84 = scmp.ne.s32.totalorder %s75, %s76
      %p85 = scmp.eq.s32.totalorder %s32, 0
      %p86 = por %p84, %p85
      %p87 = scmp.ne.s32.totalorder %s75, %s76
      %p88 = scmp.eq.s32.totalorder %s33, 3
      %p89 = por %p87, %p88
      %p91 = scmp.ne.s32.totalorder %s76, %s90
      %p92 = scmp.eq.s32.totalorder %s33, 0
      %p93 = por %p91, %p92
      %s95 = sadd.s32 %s94, 1
      %p98 = scmp.eq.s32.totalorder %s27, 3
      %p99 = scmp.ne.s32.totalorder %s94, %s96
      %p100 = scmp.eq.s32.totalorder %s27, 0
      %p101 = por %p99, %p100
      %p102 = scmp.ne.s32.totalorder %s94, %s96
      %p103 = scmp.eq.s32.totalorder %s32, 3
      %p104 = por %p102, %p103
      %p105 = scmp.ne.s32.totalorder %s96, %s97
      %p106 = scmp.eq.s32.totalorder %s32, 0
      %p107 = por %p105, %p106
      %p108 = scmp.ne.s32.totalorder %s96, %s97
      %p109 = scmp.eq.s32.totalorder %s33, 3
      %p110 = por %p108, %p109
      %p112 = scmp.ne.s32.totalorder %s97, %s111
      %p113 = scmp.eq.s32.totalorder %s33, 0
      %p114 = por %p112, %p113
      %s116 = sadd.s32 %s115, 1
      %p119 = scmp.eq.s32.totalorder %s27, 3
      %p120 = scmp.ne.s32.totalorder %s115, %s117
      %p121 = scmp.eq.s32.totalorder %s27, 0
      %p122 = por %p120, %p121
      %p123 = scmp.ne.s32.totalorder %s115, %s117
      %p124 = scmp.eq.s32.totalorder %s32, 3
      %p125 = por %p123, %p124
      %p126 = scmp.ne.s32.totalorder %s117, %s118
      %p127 = scmp.eq.s32.totalorder %s32, 0
      %p128 = por %p126, %p127
      %p129 = scmp.ne.s32.totalorder %s117, %s118
      %p130 = scmp.eq.s32.totalorder %s33, 3
      %p131 = por %p129, %p130
      %p133 = scmp.ne.s32.totalorder %s118, %s132
      %p134 = scmp.eq.s32.totalorder %s33, 0
      %p135 = por %p133, %p134
      %s137 = sadd.s32 %s136, 1
      %p140 = scmp.eq.s32.totalorder %s27, 3
      %p141 = scmp.ne.s32.totalorder %s136, %s138
      %p142 = scmp.eq.s32.totalorder %s27, 0
      %p143 = por %p141, %p142
      %p144 = scmp.ne.s32.totalorder %s136, %s138
      %p145 = scmp.eq.s32.totalorder %s32, 3
      %p146 = por %p144, %p145
      %p147 = scmp.ne.s32.totalorder %s138, %s139
      %p148 = scmp.eq.s32.totalorder %s32, 0
      %p149 = por %p147, %p148
      %p150 = scmp.ne.s32.totalorder %s138, %s139
      %p151 = scmp.eq.s32.totalorder %s33, 3
      %p152 = por %p150, %p151
      %p154 = scmp.ne.s32.totalorder %s139, %s153
      %p155 = scmp.eq.s32.totalorder %s33, 0
      %p156 = por %p154, %p155
      %s158 = sadd.s32 %s157, 1
      %p161 = scmp.eq.s32.totalorder %s27, 3
      %p162 = scmp.ne.s32.totalorder %s157, %s159
      %p163 = scmp.eq.s32.totalorder %s27, 0
      %p164 = por %p162, %p163
      %p165 = scmp.ne.s32.totalorder %s157, %s159
      %p166 = scmp.eq.s32.totalorder %s32, 3
      %p167 = por %p165, %p166
      %p168 = scmp.ne.s32.totalorder %s159, %s160
      %p169 = scmp.eq.s32.totalorder %s32, 0
      %p170 = por %p168, %p169
      %p171 = scmp.ne.s32.totalorder %s159, %s160
      %p172 = scmp.eq.s32.totalorder %s33, 3
      %p173 = por %p171, %p172
      %p175 = scmp.ne.s32.totalorder %s160, %s174
      %p176 = scmp.eq.s32.totalorder %s33, 0
      %p177 = por %p175, %p176
      %s179 = sadd.s32 %s178, 1
      %p182 = scmp.eq.s32.totalorder %s27, 3
      %p183 = scmp.ne.s32.totalorder %s178, %s180
      %p184 = scmp.eq.s32.totalorder %s27, 0
      %p185 = por %p183, %p184
      %p186 = scmp.ne.s32.totalorder %s178, %s180
      %p187 = scmp.eq.s32.totalorder %s32, 3
      %p188 = por %p186, %p187
      %p189 = scmp.ne.s32.totalorder %s180, %s181
      %p190 = scmp.eq.s32.totalorder %s32, 0
      %p191 = por %p189, %p190
      %p192 = scmp.ne.s32.totalorder %s180, %s181
      %p193 = scmp.eq.s32.totalorder %s33, 3
      %p194 = por %p192, %p193
      %p196 = scmp.ne.s32.totalorder %s181, %s195
      %p197 = scmp.eq.s32.totalorder %s33, 0
      %p198 = por %p196, %p197
      %s200 = sadd.s32 %s199, 1
      %p203 = scmp.eq.s32.totalorder %s27, 3
      %p204 = scmp.ne.s32.totalorder %s199, %s201
      %p205 = scmp.eq.s32.totalorder %s27, 0
      %p206 = por %p204, %p205
      %p207 = scmp.ne.s32.totalorder %s199, %s201
      %p208 = scmp.eq.s32.totalorder %s32, 3
      %p209 = por %p207, %p208
      %p210 = scmp.ne.s32.totalorder %s201, %s202
      %p211 = scmp.eq.s32.totalorder %s32, 0
      %p212 = por %p210, %p211
      %p213 = scmp.ne.s32.totalorder %s201, %s202
      %p214 = scmp.eq.s32.totalorder %s33, 3
      %p215 = por %p213, %p214
      %p217 = scmp.ne.s32.totalorder %s202, %s216
      %p218 = scmp.eq.s32.totalorder %s33, 0
      %p219 = por %p217, %p218
      %s221 = sadd.s32 %s220, 1
      %p224 = scmp.eq.s32.totalorder %s27, 3
      %p225 = scmp.ne.s32.totalorder %s220, %s222
      %p226 = scmp.eq.s32.totalorder %s27, 0
      %p227 = por %p225, %p226
      %p228 = scmp.ne.s32.totalorder %s220, %s222
      %p229 = scmp.eq.s32.totalorder %s32, 3
      %p230 = por %p228, %p229
      %p231 = scmp.ne.s32.totalorder %s222, %s223
      %p232 = scmp.eq.s32.totalorder %s32, 0
      %p233 = por %p231, %p232
      %p234 = scmp.ne.s32.totalorder %s222, %s223
      %p235 = scmp.eq.s32.totalorder %s33, 3
      %p236 = por %p234, %p235
      %p238 = scmp.ne.s32.totalorder %s223, %s237
      %p239 = scmp.eq.s32.totalorder %s33, 0
      %p240 = por %p238, %p239
      %s242 = sadd.s32 %s241, 1
      %p245 = scmp.eq.s32.totalorder %s27, 3
      %p246 = scmp.ne.s32.totalorder %s241, %s243
      %p247 = scmp.eq.s32.totalorder %s27, 0
      %p248 = por %p246, %p247
      %p249 = scmp.ne.s32.totalorder %s241, %s243
      %p250 = scmp.eq.s32.totalorder %s32, 3
      %p251 = por %p249, %p250
      %p252 = scmp.ne.s32.totalorder %s243, %s244
      %p253 = scmp.eq.s32.totalorder %s32, 0
      %p254 = por %p252, %p253
      %p255 = scmp.ne.s32.totalorder %s243, %s244
      %p256 = scmp.eq.s32.totalorder %s33, 3
      %p257 = por %p255, %p256
      %p259 = scmp.ne.s32.totalorder %s244, %s258
      %p260 = scmp.eq.s32.totalorder %s33, 0
      %p261 = por %p259, %p260
      %s262 = ssub.s32 %s34, %s46
      %s263 = ssub.s32 %s35, %s42
      %s264 = sor.u32 %s262, %s263
      %p265 = scmp.eq.s32.totalorder %s264, 0
      %s267 = sadd.s32 %s266, 1
      %s268 = scalar_select %p265, %s266, %s267
      %p271 = pneg %p265
      %p272 = scmp.eq.s32.totalorder %s27, 3
      %p273 = por %p271, %p272
      %p274 = scmp.ne.s32.totalorder %s266, %s269
      %p275 = scmp.eq.s32.totalorder %s27, 0
      %p276 = por %p274, %p275
      %p277 = scmp.ne.s32.totalorder %s266, %s269
      %p278 = scmp.eq.s32.totalorder %s32, 3
      %p279 = por %p277, %p278
      %p280 = scmp.ne.s32.totalorder %s269, %s270
      %p281 = scmp.eq.s32.totalorder %s32, 0
      %p282 = por %p280, %p281
      %p283 = scmp.ne.s32.totalorder %s269, %s270
      %p284 = scmp.eq.s32.totalorder %s33, 3
      %p285 = por %p283, %p284
      %p287 = scmp.ne.s32.totalorder %s270, %s286
      %p288 = scmp.eq.s32.totalorder %s33, 0
      %p289 = por %p287, %p288
      %p290 = scmp.le.s32.totalorder 1, %s27
      %p291 = scmp.lt.s32.totalorder %s27, 5
      %p292 = pnand %p290, %p291
      %p293 = pneg %p292
      // Predicated region
      $region9: #{tpu_custom_call.1} parent=5 // pred_check
        _
      $region10: #{tpu_custom_call.1} parent=5 // pred_check_branch
        %295 = sbr.rel (%p292) target = $region12
      $region11: #{tpu_custom_call.1} parent=5 // pred_region
        %s296 = ssub.s32 %s27, 1
        // Predicated region
        $region13: #{tpu_custom_call.1} parent=11 // pred_check
          %p297 = pneg %p86
        $region14: #{tpu_custom_call.1} parent=11 // pred_check_branch
          %299 = sbr.rel (%p297) target = $region16
        $region15: #{tpu_custom_call.1} parent=11 // pred_region
          %s301 = ssub.s32 256, 256
          %302 = vsyncadd [#allocation8], %s301
          %s303 = sshll.u32 [#allocation7], 4
          %s304 = int_to_ptr.vmem [resolvable:$true] %s303
          %309 = dma.hbm_to_vmem [thread:$0]  %s1, 256, %s304, [#allocation8], 128, 128, 8
        $region16: #{tpu_custom_call.1} parent=11 // pred_fallthru
          _
        // Predicated region
        $region17: #{tpu_custom_call.1} parent=11 // pred_check
          %p310 = pneg %p107
        $region18: #{tpu_custom_call.1} parent=11 // pred_check_branch
          %312 = sbr.rel (%p310) target = $region20
        $region19: #{tpu_custom_call.1} parent=11 // pred_region
          %s314 = ssub.s32 16, 16
          %315 = vsyncadd [#allocation8], %s314
          %s317 = sshll.u32 [#allocation9], 4
          %s318 = int_to_ptr.vmem [resolvable:$true] %s317
          %320 = dma.hbm_to_vmem [thread:$0]  %s2, 16, %s318, [#allocation8]
        $region20: #{tpu_custom_call.1} parent=11 // pred_fallthru
          _
        // Predicated region
        $region21: #{tpu_custom_call.1} parent=11 // pred_check
          %p321 = pneg %p128
        $region22: #{tpu_custom_call.1} parent=11 // pred_check_branch
          %323 = sbr.rel (%p321) target = $region24
        $region23: #{tpu_custom_call.1} parent=11 // pred_region
          %s325 = ssub.s32 16, 16
          %326 = vsyncadd [#allocation11], %s325
          %s328 = sshll.u32 [#allocation10], 4
          %s329 = int_to_ptr.vmem [resolvable:$true] %s328
          %331 = dma.hbm_to_vmem [thread:$0]  %s3, 16, %s329, [#allocation11]
        $region24: #{tpu_custom_call.1} parent=11 // pred_fallthru
          _
        // Predicated region
        $region25: #{tpu_custom_call.1} parent=11 // pred_check
          %p332 = pneg %p149
        $region26: #{tpu_custom_call.1} parent=11 // pred_check_branch
          %334 = sbr.rel (%p332) target = $region28
        $region27: #{tpu_custom_call.1} parent=11 // pred_region
          %s336 = ssub.s32 576, 576
          %337 = vsyncadd [#allocation11], %s336
          %s338 = sshll.u32 [#allocation12], 4
          %s339 = int_to_ptr.vmem [resolvable:$true] %s338
          %344 = dma.hbm_to_vmem [thread:$0]  %s4, 576, %s339, [#allocation11], 64, 64, 4
        $region28: #{tpu_custom_call.1} parent=11 // pred_fallthru
          _
        // Predicated region
        $region29: #{tpu_custom_call.1} parent=11 // pred_check
          %p345 = pneg %p170
        $region30: #{tpu_custom_call.1} parent=11 // pred_check_branch
          %347 = sbr.rel (%p345) target = $region32
        $region31: #{tpu_custom_call.1} parent=11 // pred_region
          %s349 = ssub.s32 16, 16
          %350 = vsyncadd [#allocation14], %s349
          %s352 = sshll.u32 [#allocation13], 4
          %s353 = int_to_ptr.vmem [resolvable:$true] %s352
          %355 = dma.hbm_to_vmem [thread:$0]  %s5, 16, %s353, [#allocation14]
        $region32: #{tpu_custom_call.1} parent=11 // pred_fallthru
          _
        // Predicated region
        $region33: #{tpu_custom_call.1} parent=11 // pred_check
          %p356 = pneg %p191
        $region34: #{tpu_custom_call.1} parent=11 // pred_check_branch
          %358 = sbr.rel (%p356) target = $region36
        $region35: #{tpu_custom_call.1} parent=11 // pred_region
          %s360 = ssub.s32 16, 16
          %361 = vsyncadd [#allocation14], %s360
          %s363 = sshll.u32 [#allocation15], 4
          %s364 = int_to_ptr.vmem [resolvable:$true] %s363
          %366 = dma.hbm_to_vmem [thread:$0]  %s6, 16, %s364, [#allocation14]
        $region36: #{tpu_custom_call.1} parent=11 // pred_fallthru
          _
        // Predicated region
        $region37: #{tpu_custom_call.1} parent=11 // pred_check
          %p367 = pneg %p212
        $region38: #{tpu_custom_call.1} parent=11 // pred_check_branch
          %369 = sbr.rel (%p367) target = $region40
        $region39: #{tpu_custom_call.1} parent=11 // pred_region
          %s371 = ssub.s32 64, 64
          %372 = vsyncadd [#allocation17], %s371
          %s374 = sshll.u32 [#allocation16], 4
          %s375 = int_to_ptr.vmem [resolvable:$true] %s374
          %377 = dma.hbm_to_vmem [thread:$0]  %s7, 64, %s375, [#allocation17]
        $region40: #{tpu_custom_call.1} parent=11 // pred_fallthru
          _
        // Predicated region
        $region41: #{tpu_custom_call.1} parent=11 // pred_check
          %p378 = pneg %p233
        $region42: #{tpu_custom_call.1} parent=11 // pred_check_branch
          %380 = sbr.rel (%p378) target = $region44
        $region43: #{tpu_custom_call.1} parent=11 // pred_region
          %s382 = ssub.s32 16, 16
          %383 = vsyncadd [#allocation17], %s382
          %s385 = sshll.u32 [#allocation18], 4
          %s386 = int_to_ptr.vmem [resolvable:$true] %s385
          %388 = dma.hbm_to_vmem [thread:$0]  %s8, 16, %s386, [#allocation17]
        $region44: #{tpu_custom_call.1} parent=11 // pred_fallthru
          _
        // Predicated region
        $region45: #{tpu_custom_call.1} parent=11 // pred_check
          %p389 = pneg %p254
        $region46: #{tpu_custom_call.1} parent=11 // pred_check_branch
          %391 = sbr.rel (%p389) target = $region48
        $region47: #{tpu_custom_call.1} parent=11 // pred_region
          %s393 = ssub.s32 16, 16
          %394 = vsyncadd [#allocation20], %s393
          %s396 = sshll.u32 [#allocation19], 4
          %s397 = int_to_ptr.vmem [resolvable:$true] %s396
          %399 = dma.hbm_to_vmem [thread:$0]  %s9, 16, %s397, [#allocation20]
        $region48: #{tpu_custom_call.1} parent=11 // pred_fallthru
          _
      $region12: #{tpu_custom_call.1} parent=5 // pred_fallthru
        _
      %p400 = scmp.lt.s32.totalorder %s27, 4
      // Predicated region
      $region49: #{tpu_custom_call.1} parent=5 // pred_check
        %p401 = pneg %p400
      $region50: #{tpu_custom_call.1} parent=5 // pred_check_branch
        %403 = sbr.rel (%p401) target = $region52
      $region51: #{tpu_custom_call.1} parent=5 // pred_region
        // Predicated region
        $region53: #{tpu_custom_call.1} parent=51 // pred_check
          %p404 = pneg %p59
        $region54: #{tpu_custom_call.1} parent=51 // pred_check_branch
          %406 = sbr.rel (%p404) target = $region56
        $region55: #{tpu_custom_call.1} parent=51 // pred_region
          %s407 = sand.u32 %s49, 1
          %s408 = scalar_lea.sflag [#allocation5], %s407
          %s409 = sand.u32 %s49, 1
          %s410 = smul.addr %s409, 256
          %s411 = scalar_lea.vmem [#allocation4], %s410
          %s413 = ssub.s32 4096, 4096
          %414 = vsyncadd %s408, %s413
          %s415 = smul.addr %s34, 32
          %s416 = smul.addr %s415, 128
          %s417 = scalar_lea.hbm %s0, %s416
          %s418 = sshll.u32 %s411, 4
          %s419 = int_to_ptr.vmem [resolvable:$true] %s418
          %424 = dma.hbm_to_vmem [thread:$0]  %s417, 4096, %s419, %s408, 128, 128, 8
        $region56: #{tpu_custom_call.1} parent=51 // pred_fallthru
          _
      $region52: #{tpu_custom_call.1} parent=5 // pred_fallthru
        _
      %p425 = scmp.le.s32.totalorder 1, %s27
      %p426 = scmp.lt.s32.totalorder %s27, 5
      %p427 = pnand %p425, %p426
      %p428 = pneg %p427
      // Predicated region
      $region57: #{tpu_custom_call.1} parent=5 // pred_check
        _
      $region58: #{tpu_custom_call.1} parent=5 // pred_check_branch
        %430 = sbr.rel (%p427) target = $region60
      $region59: #{tpu_custom_call.1} parent=5 // pred_region
        %s431 = ssub.s32 %s27, 1
        %s432 = sand.u32 %s52, 1
        %s433 = scalar_lea.sflag [#allocation5], %s432
        %s434 = sand.u32 %s52, 1
        %s435 = smul.addr %s434, 256
        %s436 = scalar_lea.vmem [#allocation4], %s435
        // Predicated region
        $region61: #{tpu_custom_call.1} parent=59 // pred_check
          %p437 = pneg %p65
        $region62: #{tpu_custom_call.1} parent=59 // pred_check_branch
          %439 = sbr.rel (%p437) target = $region64
        $region63: #{tpu_custom_call.1} parent=59 // pred_region
          %440 = dma.done %s433, 4096
        $region64: #{tpu_custom_call.1} parent=59 // pred_fallthru
          _
        // Predicated region
        $region65: #{tpu_custom_call.1} parent=59 // pred_check
          %p441 = pneg %p86
        $region66: #{tpu_custom_call.1} parent=59 // pred_check_branch
          %443 = sbr.rel (%p441) target = $region68
        $region67: #{tpu_custom_call.1} parent=59 // pred_region
          %444 = dma.done [#allocation8], 256
        $region68: #{tpu_custom_call.1} parent=59 // pred_fallthru
          _
        // Predicated region
        $region69: #{tpu_custom_call.1} parent=59 // pred_check
          %p445 = pneg %p107
        $region70: #{tpu_custom_call.1} parent=59 // pred_check_branch
          %447 = sbr.rel (%p445) target = $region72
        $region71: #{tpu_custom_call.1} parent=59 // pred_region
          %448 = dma.done [#allocation8], 16
        $region72: #{tpu_custom_call.1} parent=59 // pred_fallthru
          _
        // Predicated region
        $region73: #{tpu_custom_call.1} parent=59 // pred_check
          %p449 = pneg %p128
        $region74: #{tpu_custom_call.1} parent=59 // pred_check_branch
          %451 = sbr.rel (%p449) target = $region76
        $region75: #{tpu_custom_call.1} parent=59 // pred_region
          %452 = dma.done [#allocation11], 16
        $region76: #{tpu_custom_call.1} parent=59 // pred_fallthru
          _
        // Predicated region
        $region77: #{tpu_custom_call.1} parent=59 // pred_check
          %p453 = pneg %p149
        $region78: #{tpu_custom_call.1} parent=59 // pred_check_branch
          %455 = sbr.rel (%p453) target = $region80
        $region79: #{tpu_custom_call.1} parent=59 // pred_region
          %456 = dma.done [#allocation11], 576
        $region80: #{tpu_custom_call.1} parent=59 // pred_fallthru
          _
        // Predicated region
        $region81: #{tpu_custom_call.1} parent=59 // pred_check
          %p457 = pneg %p170
        $region82: #{tpu_custom_call.1} parent=59 // pred_check_branch
          %459 = sbr.rel (%p457) target = $region84
        $region83: #{tpu_custom_call.1} parent=59 // pred_region
          %460 = dma.done [#allocation14], 16
        $region84: #{tpu_custom_call.1} parent=59 // pred_fallthru
          _
        // Predicated region
        $region85: #{tpu_custom_call.1} parent=59 // pred_check
          %p461 = pneg %p191
        $region86: #{tpu_custom_call.1} parent=59 // pred_check_branch
          %463 = sbr.rel (%p461) target = $region88
        $region87: #{tpu_custom_call.1} parent=59 // pred_region
          %464 = dma.done [#allocation14], 16
        $region88: #{tpu_custom_call.1} parent=59 // pred_fallthru
          _
        // Predicated region
        $region89: #{tpu_custom_call.1} parent=59 // pred_check
          %p465 = pneg %p212
        $region90: #{tpu_custom_call.1} parent=59 // pred_check_branch
          %467 = sbr.rel (%p465) target = $region92
        $region91: #{tpu_custom_call.1} parent=59 // pred_region
          %468 = dma.done [#allocation17], 64
        $region92: #{tpu_custom_call.1} parent=59 // pred_fallthru
          _
        // Predicated region
        $region93: #{tpu_custom_call.1} parent=59 // pred_check
          %p469 = pneg %p233
        $region94: #{tpu_custom_call.1} parent=59 // pred_check_branch
          %471 = sbr.rel (%p469) target = $region96
        $region95: #{tpu_custom_call.1} parent=59 // pred_region
          %472 = dma.done [#allocation17], 16
        $region96: #{tpu_custom_call.1} parent=59 // pred_fallthru
          _
        // Predicated region
        $region97: #{tpu_custom_call.1} parent=59 // pred_check
          %p473 = pneg %p254
        $region98: #{tpu_custom_call.1} parent=59 // pred_check_branch
          %475 = sbr.rel (%p473) target = $region100
        $region99: #{tpu_custom_call.1} parent=59 // pred_region
          %476 = dma.done [#allocation20], 16
        $region100: #{tpu_custom_call.1} parent=59 // pred_fallthru
          _
        %s477 = sand.u32 %s52, 1
        %s478 = scalar_lea.sflag [#allocation5], %s477
        %s479 = sand.u32 %s52, 1
        %s480 = smul.addr %s479, 256
        %s481 = scalar_lea.vmem [#allocation4], %s480
        %p482 = pneg %p65
        %p483 = pneg %p62
        %p484 = pneg %p86
        %p485 = pneg %p83
        %p486 = pneg %p107
        %p487 = pneg %p104
        %p488 = pneg %p128
        %p489 = pneg %p125
        %p490 = pneg %p149
        %p491 = pneg %p146
        %p492 = pneg %p170
        %p493 = pneg %p167
        %p494 = pneg %p191
        %p495 = pneg %p188
        %p496 = pneg %p212
        %p497 = pneg %p209
        %p498 = pneg %p233
        %p499 = pneg %p230
        %p500 = pneg %p254
        %p501 = pneg %p251
        %p502 = pneg %p282
        %p503 = pneg %p279
        %s504 = sand.u32 %s269, 1
        %s505 = scalar_lea.sflag [#allocation6], %s504
        %s506 = sand.u32 %s269, 1
        %s507 = smul.addr %s506, 128
        %s508 = scalar_lea.vmem [#allocation21], %s507
        %s509 = smul.u32 16, %s37
        %p510 = scmp.eq.s32.totalorder %s37, 0
        // Predicated region
        $region101: #{tpu_custom_call.1} parent=59 // pred_check
          %p511 = pneg %p510
        $region102: #{tpu_custom_call.1} parent=59 // pred_check_branch
          %513 = sbr.rel (%p511) target = $region104
        $region103: #{tpu_custom_call.1} parent=59 // pred_region
          %vm514 = vcmask 31744
          %515 = vst.msk [vmem:[#allocation2] sm:$0xff] %vm514, 0.0
          %516 = vst.msk [vmem:[#allocation2 + $0x8] sm:$0xff] %vm514, 0.0
          %vm517 = vcmask 25600
          %518 = vst.msk [vmem:[#allocation2 + $0x10] sm:$0x3] %vm517, 0.0
          %519 = vst.msk [vmem:[#allocation2 + $0x18] sm:$0xff] %vm514, 0.0
          %520 = vst.msk [vmem:[#allocation2 + $0x20] sm:$0xff] %vm514, 0.0
          %521 = vst.msk [vmem:[#allocation2 + $0x28] sm:$0x3] %vm517, 0.0
          %522 = vst.msk [vmem:[#allocation2 + $0x30] sm:$0xff] %vm514, 0.0
          %523 = vst.msk [vmem:[#allocation2 + $0x38] sm:$0xff] %vm514, 0.0
          %524 = vst.msk [vmem:[#allocation2 + $0x40] sm:$0x3] %vm517, 0.0
          %525 = vst.msk [vmem:[#allocation2 + $0x48] sm:$0xff] %vm514, 0.0
          %526 = vst.msk [vmem:[#allocation2 + $0x50] sm:$0xff] %vm514, 0.0
          %527 = vst.msk [vmem:[#allocation2 + $0x58] sm:$0x3] %vm517, 0.0
          %528 = vst.msk [vmem:[#allocation2 + $0x60] sm:$0xff] %vm514, 0.0
          %529 = vst.msk [vmem:[#allocation2 + $0x68] sm:$0xff] %vm514, 0.0
          %530 = vst.msk [vmem:[#allocation2 + $0x70] sm:$0x3] %vm517, 0.0
          %531 = vst.msk [vmem:[#allocation2 + $0x78] sm:$0xff] %vm514, 0.0
          %532 = vst.msk [vmem:[#allocation2 + $0x80] sm:$0xff] %vm514, 0.0
          %533 = vst.msk [vmem:[#allocation2 + $0x88] sm:$0x3] %vm517, 0.0
          %534 = vst.msk [vmem:[#allocation2 + $0x90] sm:$0xff] %vm514, 0.0
          %535 = vst.msk [vmem:[#allocation2 + $0x98] sm:$0xff] %vm514, 0.0
          %536 = vst.msk [vmem:[#allocation2 + $0xa0] sm:$0x3] %vm517, 0.0
          %537 = vst.msk [vmem:[#allocation2 + $0xa8] sm:$0xff] %vm514, 0.0
          %538 = vst.msk [vmem:[#allocation2 + $0xb0] sm:$0xff] %vm514, 0.0
          %539 = vst.msk [vmem:[#allocation2 + $0xb8] sm:$0x3] %vm517, 0.0
          %540 = vst.msk [vmem:[#allocation2 + $0xc0] sm:$0xff] %vm514, 0.0
          %541 = vst.msk [vmem:[#allocation2 + $0xc8] sm:$0xff] %vm514, 0.0
          %542 = vst.msk [vmem:[#allocation2 + $0xd0] sm:$0x3] %vm517, 0.0
          %543 = vst.msk [vmem:[#allocation2 + $0xd8] sm:$0xff] %vm514, 0.0
          %544 = vst.msk [vmem:[#allocation2 + $0xe0] sm:$0xff] %vm514, 0.0
          %545 = vst.msk [vmem:[#allocation2 + $0xe8] sm:$0x3] %vm517, 0.0
          %546 = vst.msk [vmem:[#allocation2 + $0xf0] sm:$0xff] %vm514, 0.0
          %547 = vst.msk [vmem:[#allocation2 + $0xf8] sm:$0xff] %vm514, 0.0
          %548 = vst.msk [vmem:[#allocation2 + $0x100] sm:$0x3] %vm517, 0.0
          %549 = vst.msk [vmem:[#allocation2 + $0x108] sm:$0xff] %vm514, 0.0
          %550 = vst.msk [vmem:[#allocation2 + $0x110] sm:$0xff] %vm514, 0.0
          %551 = vst.msk [vmem:[#allocation2 + $0x118] sm:$0x3] %vm517, 0.0
          %552 = vst.msk [vmem:[#allocation2 + $0x120] sm:$0xff] %vm514, 0.0
          %553 = vst.msk [vmem:[#allocation2 + $0x128] sm:$0xff] %vm514, 0.0
          %554 = vst.msk [vmem:[#allocation2 + $0x130] sm:$0x3] %vm517, 0.0
          %555 = vst.msk [vmem:[#allocation2 + $0x138] sm:$0xff] %vm514, 0.0
          %556 = vst.msk [vmem:[#allocation2 + $0x140] sm:$0xff] %vm514, 0.0
          %557 = vst.msk [vmem:[#allocation2 + $0x148] sm:$0x3] %vm517, 0.0
          %558 = vst.msk [vmem:[#allocation2 + $0x150] sm:$0xff] %vm514, 0.0
          %559 = vst.msk [vmem:[#allocation2 + $0x158] sm:$0xff] %vm514, 0.0
          %560 = vst.msk [vmem:[#allocation2 + $0x160] sm:$0x3] %vm517, 0.0
          %561 = vst.msk [vmem:[#allocation2 + $0x168] sm:$0xff] %vm514, 0.0
          %562 = vst.msk [vmem:[#allocation2 + $0x170] sm:$0xff] %vm514, 0.0
          %563 = vst.msk [vmem:[#allocation2 + $0x178] sm:$0x3] %vm517, 0.0
          %564 = vst.msk [vmem:[#allocation2 + $0x180] sm:$0xff] %vm514, 0.0
          %565 = vst.msk [vmem:[#allocation2 + $0x188] sm:$0xff] %vm514, 0.0
          %566 = vst.msk [vmem:[#allocation2 + $0x190] sm:$0x3] %vm517, 0.0
          %567 = vst.msk [vmem:[#allocation2 + $0x198] sm:$0xff] %vm514, 0.0
          %568 = vst.msk [vmem:[#allocation2 + $0x1a0] sm:$0xff] %vm514, 0.0
          %569 = vst.msk [vmem:[#allocation2 + $0x1a8] sm:$0x3] %vm517, 0.0
          %v570 = vld [vmem:[%s436] sm:$0xff]
          %v571 = vld [vmem:[%s436 + $0x8] sm:$0xff]
          %v572 = vld [vmem:[%s436 + $0x10] sm:$0xff]
          %v573 = vld [vmem:[%s436 + $0x18] sm:$0xff]
          %v574 = vld [vmem:[%s436 + $0x20] sm:$0xff]
          %v575 = vld [vmem:[%s436 + $0x28] sm:$0xff]
          %v576 = vld [vmem:[%s436 + $0x30] sm:$0xff]
          %v577 = vld [vmem:[%s436 + $0x38] sm:$0xff]
          %v578 = vld [vmem:[%s436 + $0x40] sm:$0xff]
          %v579 = vld [vmem:[%s436 + $0x48] sm:$0xff]
          %v580 = vld [vmem:[%s436 + $0x50] sm:$0xff]
          %v581 = vld [vmem:[%s436 + $0x58] sm:$0xff]
          %v582 = vld [vmem:[%s436 + $0x60] sm:$0xff]
          %v583 = vld [vmem:[%s436 + $0x68] sm:$0xff]
          %v584 = vld [vmem:[%s436 + $0x70] sm:$0xff]
          %v585 = vld [vmem:[%s436 + $0x78] sm:$0xff]
          %v586 = vld [vmem:[#allocation7] sm:$0xff]
          %v587 = vld [vmem:[#allocation7 + $0x8] sm:$0xff]
          %vm588 = vcmask 130048
          %v590 = vsel %vm588, %v570, 0
          %v593 = vsel %vm588, %v571, 0
          %v596 = vsel %vm588, %v572, 0
          %v599 = vsel %vm588, %v573, 0
          %v602 = vsel %vm588, %v574, 0
          %v605 = vsel %vm588, %v575, 0
          %v608 = vsel %vm588, %v576, 0
          %v611 = vsel %vm588, %v577, 0
          %v614 = vsel %vm588, %v578, 0
          %v617 = vsel %vm588, %v579, 0
          %v620 = vsel %vm588, %v580, 0
          %v623 = vsel %vm588, %v581, 0
          %v626 = vsel %vm588, %v582, 0
          %v629 = vsel %vm588, %v583, 0
          %v632 = vsel %vm588, %v584, 0
          %v635 = vsel %vm588, %v585, 0
          %637 = vmatprep.subr.mxu0 0.0
          %638 = vmatpush1.msra.mxu0 %v586
          %639 = vmatprep.subr.mxu0 0.0
          %640 = vmatpush1.msra.mxu0 %v587
          %641 = vmatprep.subr.mxu0 0.0
          %642 = vmatpush1.msra.mxu0 0.0
          %643 = vmatprep.subr.mxu0 0.0
          %644 = vmatpush1.msra.mxu0 0.0
          %645 = vmatprep.subr.mxu0 0.0
          %646 = vmatpush1.msra.mxu0 0.0
          %647 = vmatprep.subr.mxu0 0.0
          %648 = vmatpush1.msra.mxu0 0.0
          %649 = vmatprep.subr.mxu0 0.0
          %650 = vmatpush1.msra.mxu0 0.0
          %651 = vmatprep.subr.mxu0 0.0
          %652 = vmatpush1.msra.mxu0 0.0
          %653 = vmatprep.subr.mxu0 0.0
          %654 = vmatpush1.msra.mxu0 0.0
          %655 = vmatprep.subr.mxu0 0.0
          %656 = vmatpush1.msra.mxu0 0.0
          %657 = vmatprep.subr.mxu0 0.0
          %658 = vmatpush1.msra.mxu0 0.0
          %659 = vmatprep.subr.mxu0 0.0
          %660 = vmatpush1.msra.mxu0 0.0
          %661 = vmatprep.subr.mxu0 0.0
          %662 = vmatpush1.msra.mxu0 0.0
          %663 = vmatprep.subr.mxu0 0.0
          %664 = vmatpush1.msra.mxu0 0.0
          %665 = vmatprep.subr.mxu0 0.0
          %666 = vmatpush1.msra.mxu0 0.0
          %667 = vmatprep.subr.mxu0 0.0
          %668 = vmatpush1.msra.mxu0 0.0
          %669 = vmatprep.subr.mxu0 0.0
          %670 = vmatpush1.msra.mxu0 0.0
          %671 = vmatprep.subr.mxu0 0.0
          %672 = vmatpush1.msra.mxu0 0.0
          %673 = vmatprep.subr.mxu0 0.0
          %674 = vmatpush1.msra.mxu0 0.0
          %675 = vmatprep.subr.mxu0 0.0
          %676 = vmatpush1.msra.mxu0 0.0
          %677 = vmatprep.subr.mxu0 0.0
          %678 = vmatpush1.msra.mxu0 0.0
          %679 = vmatprep.subr.mxu0 0.0
          %680 = vmatpush1.msra.mxu0 0.0
          %681 = vmatprep.subr.mxu0 0.0
          %682 = vmatpush1.msra.mxu0 0.0
          %683 = vmatprep.subr.mxu0 0.0
          %684 = vmatpush1.msra.mxu0 0.0
          %685 = vmatprep.subr.mxu0 0.0
          %686 = vmatpush1.msra.mxu0 0.0
          %687 = vmatprep.subr.mxu0 0.0
          %688 = vmatpush1.msra.mxu0 0.0
          %689 = vmatprep.subr.mxu0 0.0
          %690 = vmatpush1.msra.mxu0 0.0
          %691 = vmatprep.subr.mxu0 0.0
          %692 = vmatpush1.msra.mxu0 0.0
          %693 = vmatprep.subr.mxu0 0.0
          %694 = vmatpush1.msra.mxu0 0.0
          %695 = vmatprep.subr.mxu0 0.0
          %696 = vmatpush1.msra.mxu0 0.0
          %697 = vmatprep.subr.mxu0 0.0
          %698 = vmatpush1.msra.mxu0 0.0
          %699 = vmatprep.subr.mxu0 0.0
          %700 = vmatpush1.msra.mxu0 0.0
          %701 = vmatprep.mubr.f32.mxu0 0.0
          %702 = vmatmul.mubr.f32.gmra.mrb[0].mxu0 %v590
          %v703 = vpop.f32.mrb[0].mxu0
          %v704 = vadd.f32 0.0, %v703
          %v705 = vpop.f32.mrb[0].mxu0
          %706 = vmatprep.mubr.f32.mxu0 0.0
          %707 = vmatmul.mubr.f32.gmra.mrb[0].mxu0 %v593
          %v708 = vpop.f32.mrb[0].mxu0
          %v709 = vadd.f32 0.0, %v708
          %v710 = vpop.f32.mrb[0].mxu0
          %711 = vmatprep.mubr.f32.mxu0 0.0
          %712 = vmatmul.mubr.f32.gmra.mrb[0].mxu0 %v596
          %v713 = vpop.f32.mrb[0].mxu0
          %v714 = vadd.f32 0.0, %v713
          %v715 = vpop.f32.mrb[0].mxu0
          %716 = vmatprep.mubr.f32.mxu0 0.0
          %717 = vmatmul.mubr.f32.gmra.mrb[0].mxu0 %v599
          %v718 = vpop.f32.mrb[0].mxu0
          %v719 = vadd.f32 0.0, %v718
          %v720 = vpop.f32.mrb[0].mxu0
          %721 = vmatprep.mubr.f32.mxu0 0.0
          %722 = vmatmul.mubr.f32.gmra.mrb[0].mxu0 %v602
          %v723 = vpop.f32.mrb[0].mxu0
          %v724 = vadd.f32 0.0, %v723
          %v725 = vpop.f32.mrb[0].mxu0
          %726 = vmatprep.mubr.f32.mxu0 0.0
          %727 = vmatmul.mubr.f32.gmra.mrb[0].mxu0 %v605
          %v728 = vpop.f32.mrb[0].mxu0
          %v729 = vadd.f32 0.0, %v728
          %v730 = vpop.f32.mrb[0].mxu0
          %731 = vmatprep.mubr.f32.mxu0 0.0
          %732 = vmatmul.mubr.f32.gmra.mrb[0].mxu0 %v608
          %v733 = vpop.f32.mrb[0].mxu0
          %v734 = vadd.f32 0.0, %v733
          %v735 = vpop.f32.mrb[0].mxu0
          %736 = vmatprep.mubr.f32.mxu0 0.0
          %737 = vmatmul.mubr.f32.gmra.mrb[0].mxu0 %v611
          %v738 = vpop.f32.mrb[0].mxu0
          %v739 = vadd.f32 0.0, %v738
          %v740 = vpop.f32.mrb[0].mxu0
          %741 = vmatprep.mubr.f32.mxu0 0.0
          %742 = vmatmul.mubr.f32.gmra.mrb[0].mxu0 %v614
          %v743 = vpop.f32.mrb[0].mxu0
          %v744 = vadd.f32 0.0, %v743
          %v745 = vpop.f32.mrb[0].mxu0
          %746 = vmatprep.mubr.f32.mxu0 0.0
          %747 = vmatmul.mubr.f32.gmra.mrb[0].mxu0 %v617
          %v748 = vpop.f32.mrb[0].mxu0
          %v749 = vadd.f32 0.0, %v748
          %v750 = vpop.f32.mrb[0].mxu0
          %751 = vmatprep.mubr.f32.mxu0 0.0
          %752 = vmatmul.mubr.f32.gmra.mrb[0].mxu0 %v620
          %v753 = vpop.f32.mrb[0].mxu0
          %v754 = vadd.f32 0.0, %v753
          %v755 = vpop.f32.mrb[0].mxu0
          %756 = vmatprep.mubr.f32.mxu0 0.0
          %757 = vmatmul.mubr.f32.gmra.mrb[0].mxu0 %v623
          %v758 = vpop.f32.mrb[0].mxu0
          %v759 = vadd.f32 0.0, %v758
          %v760 = vpop.f32.mrb[0].mxu0
          %761 = vmatprep.mubr.f32.mxu0 0.0
          %762 = vmatmul.mubr.f32.gmra.mrb[0].mxu0 %v626
          %v763 = vpop.f32.mrb[0].mxu0
          %v764 = vadd.f32 0.0, %v763
          %v765 = vpop.f32.mrb[0].mxu0
          %766 = vmatprep.mubr.f32.mxu0 0.0
          %767 = vmatmul.mubr.f32.gmra.mrb[0].mxu0 %v629
          %v768 = vpop.f32.mrb[0].mxu0
          %v769 = vadd.f32 0.0, %v768
          %v770 = vpop.f32.mrb[0].mxu0
          %771 = vmatprep.mubr.f32.mxu0 0.0
          %772 = vmatmul.mubr.f32.gmra.mrb[0].mxu0 %v632
          %v773 = vpop.f32.mrb[0].mxu0
          %v774 = vadd.f32 0.0, %v773
          %v775 = vpop.f32.mrb[0].mxu0
          %776 = vmatprep.mubr.f32.mxu0 0.0
          %777 = vmatmul.mubr.f32.gmra.mrb[0].mxu0 %v635
          %v778 = vpop.f32.mrb[0].mxu0
          %v779 = vadd.f32 0.0, %v778
          %v780 = vpop.f32.mrb[0].mxu0
          %781 = vdwg.mxu0
          %v782 = vld [vmem:[#allocation9] sm:$0x1]
          %v784 = vlaneseq
          %v785 = vshrl.u32 %v784, 7
          %v786 = vsub.s32 0, %v785
          %v787 = vrot.slane %v782, %v786
          %v789 = vmul.f32 %v704, %v787
          %v790 = vmul.f32 %v709, %v787
          %v791 = vmul.f32 %v714, %v787
          %v792 = vmul.f32 %v719, %v787
          %v793 = vmul.f32 %v724, %v787
          %v794 = vmul.f32 %v729, %v787
          %v795 = vmul.f32 %v734, %v787
          %v796 = vmul.f32 %v739, %v787
          %v797 = vmul.f32 %v744, %v787
          %v798 = vmul.f32 %v749, %v787
          %v799 = vmul.f32 %v754, %v787
          %v800 = vmul.f32 %v759, %v787
          %v801 = vmul.f32 %v764, %v787
          %v802 = vmul.f32 %v769, %v787
          %v803 = vmul.f32 %v774, %v787
          %v804 = vmul.f32 %v779, %v787
          %v805 = vld [vmem:[#allocation10] sm:$0x1]
          %v807 = vlaneseq
          %v808 = vshrl.u32 %v807, 7
          %v809 = vsub.s32 0, %v808
          %v810 = vrot.slane %v805, %v809
          %v812 = vadd.f32 %v789, %v810
          %v813 = vadd.f32 %v790, %v810
          %v814 = vadd.f32 %v791, %v810
          %v815 = vadd.f32 %v792, %v810
          %v816 = vadd.f32 %v793, %v810
          %v817 = vadd.f32 %v794, %v810
          %v818 = vadd.f32 %v795, %v810
          %v819 = vadd.f32 %v796, %v810
          %v820 = vadd.f32 %v797, %v810
          %v821 = vadd.f32 %v798, %v810
          %v822 = vadd.f32 %v799, %v810
          %v823 = vadd.f32 %v800, %v810
          %v824 = vadd.f32 %v801, %v810
          %v825 = vadd.f32 %v802, %v810
          %v826 = vadd.f32 %v803, %v810
          %v827 = vadd.f32 %v804, %v810
          %v828 = vmax.f32 %v812, 0.0
          %v829 = vmax.f32 %v813, 0.0
          %v830 = vmax.f32 %v814, 0.0
          %v831 = vmax.f32 %v815, 0.0
          %v832 = vmax.f32 %v816, 0.0
          %v833 = vmax.f32 %v817, 0.0
          %v834 = vmax.f32 %v818, 0.0
          %v835 = vmax.f32 %v819, 0.0
          %v836 = vmax.f32 %v820, 0.0
          %v837 = vmax.f32 %v821, 0.0
          %v838 = vmax.f32 %v822, 0.0
          %v839 = vmax.f32 %v823, 0.0
          %v840 = vmax.f32 %v824, 0.0
          %v841 = vmax.f32 %v825, 0.0
          %v842 = vmax.f32 %v826, 0.0
          %v843 = vmax.f32 %v827, 0.0
          %s844 = scalar_lea.vmem [#allocation2], 24
          %845 = vst.msk [vmem:[%s844 + $0x1] sm:$0xff] %vm514, %v828
          %846 = vst.msk [vmem:[%s844 + $0x9] sm:$0xff] %vm514, %v829
          %847 = vst.msk [vmem:[%s844 + $0x19] sm:$0xff] %vm514, %v830
          %848 = vst.msk [vmem:[%s844 + $0x21] sm:$0xff] %vm514, %v831
          %849 = vst.msk [vmem:[%s844 + $0x31] sm:$0xff] %vm514, %v832
          %850 = vst.msk [vmem:[%s844 + $0x39] sm:$0xff] %vm514, %v833
          %851 = vst.msk [vmem:[%s844 + $0x49] sm:$0xff] %vm514, %v834
          %852 = vst.msk [vmem:[%s844 + $0x51] sm:$0xff] %vm514, %v835
          %853 = vst.msk [vmem:[%s844 + $0x61] sm:$0xff] %vm514, %v836
          %854 = vst.msk [vmem:[%s844 + $0x69] sm:$0xff] %vm514, %v837
          %855 = vst.msk [vmem:[%s844 + $0x79] sm:$0xff] %vm514, %v838
          %856 = vst.msk [vmem:[%s844 + $0x81] sm:$0xff] %vm514, %v839
          %857 = vst.msk [vmem:[%s844 + $0x91] sm:$0xff] %vm514, %v840
          %858 = vst.msk [vmem:[%s844 + $0x99] sm:$0xff] %vm514, %v841
          %859 = vst.msk [vmem:[%s844 + $0xa9] sm:$0xff] %vm514, %v842
          %860 = vst.msk [vmem:[%s844 + $0xb1] sm:$0xff] %vm514, %v843
          %v861 = vld [vmem:[%s436 + $0x80] sm:$0xff]
          %v862 = vld [vmem:[%s436 + $0x88] sm:$0xff]
          %v863 = vld [vmem:[%s436 + $0x90] sm:$0xff]
          %v864 = vld [vmem:[%s436 + $0x98] sm:$0xff]
          %v865 = vld [vmem:[%s436 + $0xa0] sm:$0xff]
          %v866 = vld [vmem:[%s436 + $0xa8] sm:$0xff]
          %v867 = vld [vmem:[%s436 + $0xb0] sm:$0xff]
          %v868 = vld [vmem:[%s436 + $0xb8] sm:$0xff]
          %v869 = vld [vmem:[%s436 + $0xc0] sm:$0xff]
          %v870 = vld [vmem:[%s436 + $0xc8] sm:$0xff]
          %v871 = vld [vmem:[%s436 + $0xd0] sm:$0xff]
          %v872 = vld [vmem:[%s436 + $0xd8] sm:$0xff]
          %v873 = vld [vmem:[%s436 + $0xe0] sm:$0xff]
          %v874 = vld [vmem:[%s436 + $0xe8] sm:$0xff]
          %v875 = vld [vmem:[%s436 + $0xf0] sm:$0xff]
          %v876 = vld [vmem:[%s436 + $0xf8] sm:$0xff]
          %v877 = vld [vmem:[#allocation7] sm:$0xff]
          %v878 = vld [vmem:[#allocation7 + $0x8] sm:$0xff]
          %v880 = vsel %vm588, %v861, 0
          %v883 = vsel %vm588, %v862, 0
          %v886 = vsel %vm588, %v863, 0
          %v889 = vsel %vm588, %v864, 0
          %v892 = vsel %vm588, %v865, 0
          %v895 = vsel %vm588, %v866, 0
          %v898 = vsel %vm588, %v867, 0
          %v901 = vsel %vm588, %v868, 0
          %v904 = vsel %vm588, %v869, 0
          %v907 = vsel %vm588, %v870, 0
          %v910 = vsel %vm588, %v871, 0
          %v913 = vsel %vm588, %v872, 0
          %v916 = vsel %vm588, %v873, 0
          %v919 = vsel %vm588, %v874, 0
          %v922 = vsel %vm588, %v875, 0
          %v925 = vsel %vm588, %v876, 0
          %927 = vmatprep.subr.mxu0 0.0
          %928 = vmatpush1.msra.mxu0 %v877
          %929 = vmatprep.subr.mxu0 0.0
          %930 = vmatpush1.msra.mxu0 %v878
          %931 = vmatprep.subr.mxu0 0.0
          %932 = vmatpush1.msra.mxu0 0.0
          %933 = vmatprep.subr.mxu0 0.0
          %934 = vmatpush1.msra.mxu0 0.0
          %935 = vmatprep.subr.mxu0 0.0
          %936 = vmatpush1.msra.mxu0 0.0
          %937 = vmatprep.subr.mxu0 0.0
          %938 = vmatpush1.msra.mxu0 0.0
          %939 = vmatprep.subr.mxu0 0.0
          %940 = vmatpush1.msra.mxu0 0.0
          %941 = vmatprep.subr.mxu0 0.0
          %942 = vmatpush1.msra.mxu0 0.0
          %943 = vmatprep.subr.mxu0 0.0
          %944 = vmatpush1.msra.mxu0 0.0
          %945 = vmatprep.subr.mxu0 0.0
          %946 = vmatpush1.msra.mxu0 0.0
          %947 = vmatprep.subr.mxu0 0.0
          %948 = vmatpush1.msra.mxu0 0.0
          %949 = vmatprep.subr.mxu0 0.0
          %950 = vmatpush1.msra.mxu0 0.0
          %951 = vmatprep.subr.mxu0 0.0
          %952 = vmatpush1.msra.mxu0 0.0
          %953 = vmatprep.subr.mxu0 0.0
          %954 = vmatpush1.msra.mxu0 0.0
          %955 = vmatprep.subr.mxu0 0.0
          %956 = vmatpush1.msra.mxu0 0.0
          %957 = vmatprep.subr.mxu0 0.0
          %958 = vmatpush1.msra.mxu0 0.0
          %959 = vmatprep.subr.mxu0 0.0
          %960 = vmatpush1.msra.mxu0 0.0
          %961 = vmatprep.subr.mxu0 0.0
          %962 = vmatpush1.msra.mxu0 0.0
          %963 = vmatprep.subr.mxu0 0.0
          %964 = vmatpush1.msra.mxu0 0.0
          %965 = vmatprep.subr.mxu0 0.0
          %966 = vmatpush1.msra.mxu0 0.0
          %967 = vmatprep.subr.mxu0 0.0
          %968 = vmatpush1.msra.mxu0 0.0
          %969 = vmatprep.subr.mxu0 0.0
          %970 = vmatpush1.msra.mxu0 0.0
          %971 = vmatprep.subr.mxu0 0.0
          %972 = vmatpush1.msra.mxu0 0.0
          %973 = vmatprep.subr.mxu0 0.0
          %974 = vmatpush1.msra.mxu0 0.0
          %975 = vmatprep.subr.mxu0 0.0
          %976 = vmatpush1.msra.mxu0 0.0
          %977 = vmatprep.subr.mxu0 0.0
          %978 = vmatpush1.msra.mxu0 0.0
          %979 = vmatprep.subr.mxu0 0.0
          %980 = vmatpush1.msra.mxu0 0.0
          %981 = vmatprep.subr.mxu0 0.0
          %982 = vmatpush1.msra.mxu0 0.0
          %983 = vmatprep.subr.mxu0 0.0
          %984 = vmatpush1.msra.mxu0 0.0
          %985 = vmatprep.subr.mxu0 0.0
          %986 = vmatpush1.msra.mxu0 0.0
          %987 = vmatprep.subr.mxu0 0.0
          %988 = vmatpush1.msra.mxu0 0.0
          %989 = vmatprep.subr.mxu0 0.0
          %990 = vmatpush1.msra.mxu0 0.0
          %991 = vmatprep.mubr.f32.mxu0 0.0
          %992 = vmatmul.mubr.f32.gmra.mrb[0].mxu0 %v880
          %v993 = vpop.f32.mrb[0].mxu0
          %v994 = vadd.f32 0.0, %v993
          %v995 = vpop.f32.mrb[0].mxu0
          %996 = vmatprep.mubr.f32.mxu0 0.0
          %997 = vmatmul.mubr.f32.gmra.mrb[0].mxu0 %v883
          %v998 = vpop.f32.mrb[0].mxu0
          %v999 = vadd.f32 0.0, %v998
          %v1000 = vpop.f32.mrb[0].mxu0
          %1001 = vmatprep.mubr.f32.mxu0 0.0
          %1002 = vmatmul.mubr.f32.gmra.mrb[0].mxu0 %v886
          %v1003 = vpop.f32.mrb[0].mxu0
          %v1004 = vadd.f32 0.0, %v1003
          %v1005 = vpop.f32.mrb[0].mxu0
          %1006 = vmatprep.mubr.f32.mxu0 0.0
          %1007 = vmatmul.mubr.f32.gmra.mrb[0].mxu0 %v889
          %v1008 = vpop.f32.mrb[0].mxu0
          %v1009 = vadd.f32 0.0, %v1008
          %v1010 = vpop.f32.mrb[0].mxu0
          %1011 = vmatprep.mubr.f32.mxu0 0.0
          %1012 = vmatmul.mubr.f32.gmra.mrb[0].mxu0 %v892
          %v1013 = vpop.f32.mrb[0].mxu0
          %v1014 = vadd.f32 0.0, %v1013
          %v1015 = vpop.f32.mrb[0].mxu0
          %1016 = vmatprep.mubr.f32.mxu0 0.0
          %1017 = vmatmul.mubr.f32.gmra.mrb[0].mxu0 %v895
          %v1018 = vpop.f32.mrb[0].mxu0
          %v1019 = vadd.f32 0.0, %v1018
          %v1020 = vpop.f32.mrb[0].mxu0
          %1021 = vmatprep.mubr.f32.mxu0 0.0
          %1022 = vmatmul.mubr.f32.gmra.mrb[0].mxu0 %v898
          %v1023 = vpop.f32.mrb[0].mxu0
          %v1024 = vadd.f32 0.0, %v1023
          %v1025 = vpop.f32.mrb[0].mxu0
          %1026 = vmatprep.mubr.f32.mxu0 0.0
          %1027 = vmatmul.mubr.f32.gmra.mrb[0].mxu0 %v901
          %v1028 = vpop.f32.mrb[0].mxu0
          %v1029 = vadd.f32 0.0, %v1028
          %v1030 = vpop.f32.mrb[0].mxu0
          %1031 = vmatprep.mubr.f32.mxu0 0.0
          %1032 = vmatmul.mubr.f32.gmra.mrb[0].mxu0 %v904
          %v1033 = vpop.f32.mrb[0].mxu0
          %v1034 = vadd.f32 0.0, %v1033
          %v1035 = vpop.f32.mrb[0].mxu0
          %1036 = vmatprep.mubr.f32.mxu0 0.0
          %1037 = vmatmul.mubr.f32.gmra.mrb[0].mxu0 %v907
          %v1038 = vpop.f32.mrb[0].mxu0
          %v1039 = vadd.f32 0.0, %v1038
          %v1040 = vpop.f32.mrb[0].mxu0
          %1041 = vmatprep.mubr.f32.mxu0 0.0
          %1042 = vmatmul.mubr.f32.gmra.mrb[0].mxu0 %v910
          %v1043 = vpop.f32.mrb[0].mxu0
          %v1044 = vadd.f32 0.0, %v1043
          %v1045 = vpop.f32.mrb[0].mxu0
          %1046 = vmatprep.mubr.f32.mxu0 0.0
          %1047 = vmatmul.mubr.f32.gmra.mrb[0].mxu0 %v913
          %v1048 = vpop.f32.mrb[0].mxu0
          %v1049 = vadd.f32 0.0, %v1048
          %v1050 = vpop.f32.mrb[0].mxu0
          %1051 = vmatprep.mubr.f32.mxu0 0.0
          %1052 = vmatmul.mubr.f32.gmra.mrb[0].mxu0 %v916
          %v1053 = vpop.f32.mrb[0].mxu0
          %v1054 = vadd.f32 0.0, %v1053
          %v1055 = vpop.f32.mrb[0].mxu0
          %1056 = vmatprep.mubr.f32.mxu0 0.0
          %1057 = vmatmul.mubr.f32.gmra.mrb[0].mxu0 %v919
          %v1058 = vpop.f32.mrb[0].mxu0
          %v1059 = vadd.f32 0.0, %v1058
          %v1060 = vpop.f32.mrb[0].mxu0
          %1061 = vmatprep.mubr.f32.mxu0 0.0
          %1062 = vmatmul.mubr.f32.gmra.mrb[0].mxu0 %v922
          %v1063 = vpop.f32.mrb[0].mxu0
          %v1064 = vadd.f32 0.0, %v1063
          %v1065 = vpop.f32.mrb[0].mxu0
          %1066 = vmatprep.mubr.f32.mxu0 0.0
          %1067 = vmatmul.mubr.f32.gmra.mrb[0].mxu0 %v925
          %v1068 = vpop.f32.mrb[0].mxu0
          %v1069 = vadd.f32 0.0, %v1068
          %v1070 = vpop.f32.mrb[0].mxu0
          %1071 = vdwg.mxu0
          %v1072 = vld [vmem:[#allocation9] sm:$0x1]
          %v1074 = vlaneseq
          %v1075 = vshrl.u32 %v1074, 7
          %v1076 = vsub.s32 0, %v1075
          %v1077 = vrot.slane %v1072, %v1076
          %v1079 = vmul.f32 %v994, %v1077
          %v1080 = vmul.f32 %v999, %v1077
          %v1081 = vmul.f32 %v1004, %v1077
          %v1082 = vmul.f32 %v1009, %v1077
          %v1083 = vmul.f32 %v1014, %v1077
          %v1084 = vmul.f32 %v1019, %v1077
          %v1085 = vmul.f32 %v1024, %v1077
          %v1086 = vmul.f32 %v1029, %v1077
          %v1087 = vmul.f32 %v1034, %v1077
          %v1088 = vmul.f32 %v1039, %v1077
          %v1089 = vmul.f32 %v1044, %v1077
          %v1090 = vmul.f32 %v1049, %v1077
          %v1091 = vmul.f32 %v1054, %v1077
          %v1092 = vmul.f32 %v1059, %v1077
          %v1093 = vmul.f32 %v1064, %v1077
          %v1094 = vmul.f32 %v1069, %v1077
          %v1095 = vld [vmem:[#allocation10] sm:$0x1]
          %v1097 = vlaneseq
          %v1098 = vshrl.u32 %v1097, 7
          %v1099 = vsub.s32 0, %v1098
          %v1100 = vrot.slane %v1095, %v1099
          %v1102 = vadd.f32 %v1079, %v1100
          %v1103 = vadd.f32 %v1080, %v1100
          %v1104 = vadd.f32 %v1081, %v1100
          %v1105 = vadd.f32 %v1082, %v1100
          %v1106 = vadd.f32 %v1083, %v1100
          %v1107 = vadd.f32 %v1084, %v1100
          %v1108 = vadd.f32 %v1085, %v1100
          %v1109 = vadd.f32 %v1086, %v1100
          %v1110 = vadd.f32 %v1087, %v1100
          %v1111 = vadd.f32 %v1088, %v1100
          %v1112 = vadd.f32 %v1089, %v1100
          %v1113 = vadd.f32 %v1090, %v1100
          %v1114 = vadd.f32 %v1091, %v1100
          %v1115 = vadd.f32 %v1092, %v1100
          %v1116 = vadd.f32 %v1093, %v1100
          %v1117 = vadd.f32 %v1094, %v1100
          %v1118 = vmax.f32 %v1102, 0.0
          %v1119 = vmax.f32 %v1103, 0.0
          %v1120 = vmax.f32 %v1104, 0.0
          %v1121 = vmax.f32 %v1105, 0.0
          %v1122 = vmax.f32 %v1106, 0.0
          %v1123 = vmax.f32 %v1107, 0.0
          %v1124 = vmax.f32 %v1108, 0.0
          %v1125 = vmax.f32 %v1109, 0.0
          %v1126 = vmax.f32 %v1110, 0.0
          %v1127 = vmax.f32 %v1111, 0.0
          %v1128 = vmax.f32 %v1112, 0.0
          %v1129 = vmax.f32 %v1113, 0.0
          %v1130 = vmax.f32 %v1114, 0.0
          %v1131 = vmax.f32 %v1115, 0.0
          %v1132 = vmax.f32 %v1116, 0.0
          %v1133 = vmax.f32 %v1117, 0.0
          %s1134 = scalar_lea.vmem [#allocation2], 216
          %1135 = vst.msk [vmem:[%s1134 + $0x1] sm:$0xff] %vm514, %v1118
          %1136 = vst.msk [vmem:[%s1134 + $0x9] sm:$0xff] %vm514, %v1119
          %1137 = vst.msk [vmem:[%s1134 + $0x19] sm:$0xff] %vm514, %v1120
          %1138 = vst.msk [vmem:[%s1134 + $0x21] sm:$0xff] %vm514, %v1121
          %1139 = vst.msk [vmem:[%s1134 + $0x31] sm:$0xff] %vm514, %v1122
          %1140 = vst.msk [vmem:[%s1134 + $0x39] sm:$0xff] %vm514, %v1123
          %1141 = vst.msk [vmem:[%s1134 + $0x49] sm:$0xff] %vm514, %v1124
          %1142 = vst.msk [vmem:[%s1134 + $0x51] sm:$0xff] %vm514, %v1125
          %1143 = vst.msk [vmem:[%s1134 + $0x61] sm:$0xff] %vm514, %v1126
          %1144 = vst.msk [vmem:[%s1134 + $0x69] sm:$0xff] %vm514, %v1127
          %1145 = vst.msk [vmem:[%s1134 + $0x79] sm:$0xff] %vm514, %v1128
          %1146 = vst.msk [vmem:[%s1134 + $0x81] sm:$0xff] %vm514, %v1129
          %1147 = vst.msk [vmem:[%s1134 + $0x91] sm:$0xff] %vm514, %v1130
          %1148 = vst.msk [vmem:[%s1134 + $0x99] sm:$0xff] %vm514, %v1131
          %1149 = vst.msk [vmem:[%s1134 + $0xa9] sm:$0xff] %vm514, %v1132
          %1150 = vst.msk [vmem:[%s1134 + $0xb1] sm:$0xff] %vm514, %v1133
        $region104: #{tpu_custom_call.1} parent=59 // pred_fallthru
          _
        %s1151 = smul.u32 %s37, 8
        %vm1152 = vcmask 31744
        %1153 = vst.msk [vmem:[#allocation3] sm:$0xff] %vm1152, 0.0
        %1154 = vst.msk [vmem:[#allocation3 + $0x8] sm:$0xff] %vm1152, 0.0
        %1155 = vst.msk [vmem:[#allocation3 + $0x10] sm:$0xff] %vm1152, 0.0
        %1156 = vst.msk [vmem:[#allocation3 + $0x18] sm:$0xff] %vm1152, 0.0
        %1157 = vst.msk [vmem:[#allocation3 + $0x20] sm:$0xff] %vm1152, 0.0
        %1158 = vst.msk [vmem:[#allocation3 + $0x28] sm:$0xff] %vm1152, 0.0
        %1159 = vst.msk [vmem:[#allocation3 + $0x30] sm:$0xff] %vm1152, 0.0
        %1160 = vst.msk [vmem:[#allocation3 + $0x38] sm:$0xff] %vm1152, 0.0
        %1161 = vst.msk [vmem:[#allocation3 + $0x40] sm:$0xff] %vm1152, 0.0
        %1162 = vst.msk [vmem:[#allocation3 + $0x48] sm:$0xff] %vm1152, 0.0
        %1163 = vst.msk [vmem:[#allocation3 + $0x50] sm:$0xff] %vm1152, 0.0
        %1164 = vst.msk [vmem:[#allocation3 + $0x58] sm:$0xff] %vm1152, 0.0
        %1165 = vst.msk [vmem:[#allocation3 + $0x60] sm:$0xff] %vm1152, 0.0
        %1166 = vst.msk [vmem:[#allocation3 + $0x68] sm:$0xff] %vm1152, 0.0
        %1167 = vst.msk [vmem:[#allocation3 + $0x70] sm:$0xff] %vm1152, 0.0
        %1168 = vst.msk [vmem:[#allocation3 + $0x78] sm:$0xff] %vm1152, 0.0
        %s1169 = smul.u32 %s1151, 24
        %s1170 = scalar_lea.vmem [#allocation2], %s1169
        %v1171 = vld [vmem:[%s1170] sm:$0xff]
        %v1172 = vld [vmem:[%s1170 + $0x8] sm:$0xff]
        %v1173 = vld [vmem:[%s1170 + $0x18] sm:$0xff]
        %v1174 = vld [vmem:[%s1170 + $0x20] sm:$0xff]
        %v1175 = vld [vmem:[%s1170 + $0x30] sm:$0xff]
        %v1176 = vld [vmem:[%s1170 + $0x38] sm:$0xff]
        %v1177 = vld [vmem:[%s1170 + $0x48] sm:$0xff]
        %v1178 = vld [vmem:[%s1170 + $0x50] sm:$0xff]
        %v1179 = vld [vmem:[%s1170 + $0x60] sm:$0xff]
        %v1180 = vld [vmem:[%s1170 + $0x68] sm:$0xff]
        %v1181 = vld [vmem:[%s1170 + $0x78] sm:$0xff]
        %v1182 = vld [vmem:[%s1170 + $0x80] sm:$0xff]
        %v1183 = vld [vmem:[%s1170 + $0x90] sm:$0xff]
        %v1184 = vld [vmem:[%s1170 + $0x98] sm:$0xff]
        %v1185 = vld [vmem:[%s1170 + $0xa8] sm:$0xff]
        %v1186 = vld [vmem:[%s1170 + $0xb0] sm:$0xff]
        %v1187 = vld [vmem:[#allocation3] sm:$0xff]
        %v1188 = vld [vmem:[#allocation3 + $0x8] sm:$0xff]
        %v1189 = vld [vmem:[#allocation3 + $0x10] sm:$0xff]
        %v1190 = vld [vmem:[#allocation3 + $0x18] sm:$0xff]
        %v1191 = vld [vmem:[#allocation3 + $0x20] sm:$0xff]
        %v1192 = vld [vmem:[#allocation3 + $0x28] sm:$0xff]
        %v1193 = vld [vmem:[#allocation3 + $0x30] sm:$0xff]
        %v1194 = vld [vmem:[#allocation3 + $0x38] sm:$0xff]
        %v1195 = vld [vmem:[#allocation3 + $0x40] sm:$0xff]
        %v1196 = vld [vmem:[#allocation3 + $0x48] sm:$0xff]
        %v1197 = vld [vmem:[#allocation3 + $0x50] sm:$0xff]
        %v1198 = vld [vmem:[#allocation3 + $0x58] sm:$0xff]
        %v1199 = vld [vmem:[#allocation3 + $0x60] sm:$0xff]
        %v1200 = vld [vmem:[#allocation3 + $0x68] sm:$0xff]
        %v1201 = vld [vmem:[#allocation3 + $0x70] sm:$0xff]
        %v1202 = vld [vmem:[#allocation3 + $0x78] sm:$0xff]
        %v1203 = vld [vmem:[#allocation12] sm:$0xf]
        %v1205 = vsel %vm1152, %v1171, 0
        %v1208 = vsel %vm1152, %v1172, 0
        %v1211 = vsel %vm1152, %v1173, 0
        %v1214 = vsel %vm1152, %v1174, 0
        %v1217 = vsel %vm1152, %v1175, 0
        %v1220 = vsel %vm1152, %v1176, 0
        %v1223 = vsel %vm1152, %v1177, 0
        %v1226 = vsel %vm1152, %v1178, 0
        %v1229 = vsel %vm1152, %v1179, 0
        %v1232 = vsel %vm1152, %v1180, 0
        %v1235 = vsel %vm1152, %v1181, 0
        %v1238 = vsel %vm1152, %v1182, 0
        %v1241 = vsel %vm1152, %v1183, 0
        %v1244 = vsel %vm1152, %v1184, 0
        %v1247 = vsel %vm1152, %v1185, 0
        %v1250 = vsel %vm1152, %v1186, 0
        %vm1252 = vcmask 1043456
        %v1254 = vsel %vm1252, %v1203, 0
        %1256 = vmatprep.subr.mxu0 0.0
        %1257 = vmatpush1.msra.mxu0 %v1254
        %1258 = vmatprep.subr.mxu0 0.0
        %1259 = vmatpush1.msra.mxu0 0.0
        %1260 = vmatprep.subr.mxu0 0.0
        %1261 = vmatpush1.msra.mxu0 0.0
        %1262 = vmatprep.subr.mxu0 0.0
        %1263 = vmatpush1.msra.mxu0 0.0
        %1264 = vmatprep.subr.mxu0 0.0
        %1265 = vmatpush1.msra.mxu0 0.0
        %1266 = vmatprep.subr.mxu0 0.0
        %1267 = vmatpush1.msra.mxu0 0.0
        %1268 = vmatprep.subr.mxu0 0.0
        %1269 = vmatpush1.msra.mxu0 0.0
        %1270 = vmatprep.subr.mxu0 0.0
        %1271 = vmatpush1.msra.mxu0 0.0
        %1272 = vmatprep.subr.mxu0 0.0
        %1273 = vmatpush1.msra.mxu0 0.0
        %1274 = vmatprep.subr.mxu0 0.0
        %1275 = vmatpush1.msra.mxu0 0.0
        %1276 = vmatprep.subr.mxu0 0.0
        %1277 = vmatpush1.msra.mxu0 0.0
        %1278 = vmatprep.subr.mxu0 0.0
        %1279 = vmatpush1.msra.mxu0 0.0
        %1280 = vmatprep.subr.mxu0 0.0
        %1281 = vmatpush1.msra.mxu0 0.0
        %1282 = vmatprep.subr.mxu0 0.0
        %1283 = vmatpush1.msra.mxu0 0.0
        %1284 = vmatprep.subr.mxu0 0.0
        %1285 = vmatpush1.msra.mxu0 0.0
        %1286 = vmatprep.subr.mxu0 0.0
        %1287 = vmatpush1.msra.mxu0 0.0
        %1288 = vmatprep.subr.mxu0 0.0
        %1289 = vmatpush1.msra.mxu0 0.0
        %1290 = vmatprep.subr.mxu0 0.0
        %1291 = vmatpush1.msra.mxu0 0.0
        %1292 = vmatprep.subr.mxu0 0.0
        %1293 = vmatpush1.msra.mxu0 0.0
        %1294 = vmatprep.subr.mxu0 0.0
        %1295 = vmatpush1.msra.mxu0 0.0
        %1296 = vmatprep.subr.mxu0 0.0
        %1297 = vmatpush1.msra.mxu0 0.0
        %1298 = vmatprep.subr.mxu0 0.0
        %1299 = vmatpush1.msra.mxu0 0.0
        %1300 = vmatprep.subr.mxu0 0.0
        %1301 = vmatpush1.msra.mxu0 0.0
        %1302 = vmatprep.subr.mxu0 0.0
        %1303 = vmatpush1.msra.mxu0 0.0
        %1304 = vmatprep.subr.mxu0 0.0
        %1305 = vmatpush1.msra.mxu0 0.0
        %1306 = vmatprep.subr.mxu0 0.0
        %1307 = vmatpush1.msra.mxu0 0.0
        %1308 = vmatprep.subr.mxu0 0.0
        %1309 = vmatpush1.msra.mxu0 0.0
        %1310 = vmatprep.subr.mxu0 0.0
        %1311 = vmatpush1.msra.mxu0 0.0
        %1312 = vmatprep.subr.mxu0 0.0
        %1313 = vmatpush1.msra.mxu0 0.0
        %1314 = vmatprep.subr.mxu0 0.0
        %1315 = vmatpush1.msra.mxu0 0.0
        %1316 = vmatprep.subr.mxu0 0.0
        %1317 = vmatpush1.msra.mxu0 0.0
        %1318 = vmatprep.subr.mxu0 0.0
        %1319 = vmatpush1.msra.mxu0 0.0
        %1320 = vmatprep.mubr.f32.mxu0 0.0
        %1321 = vmatmul.mubr.f32.gmra.mrb[0].mxu0 %v1205
        %v1322 = vpop.f32.mrb[0].mxu0
        %v1323 = vadd.f32 0.0, %v1322
        %v1324 = vpop.f32.mrb[0].mxu0
        %1325 = vmatprep.mubr.f32.mxu0 0.0
        %1326 = vmatmul.mubr.f32.gmra.mrb[0].mxu0 %v1208
        %v1327 = vpop.f32.mrb[0].mxu0
        %v1328 = vadd.f32 0.0, %v1327
        %v1329 = vpop.f32.mrb[0].mxu0
        %1330 = vmatprep.mubr.f32.mxu0 0.0
        %1331 = vmatmul.mubr.f32.gmra.mrb[0].mxu0 %v1211
        %v1332 = vpop.f32.mrb[0].mxu0
        %v1333 = vadd.f32 0.0, %v1332
        %v1334 = vpop.f32.mrb[0].mxu0
        %1335 = vmatprep.mubr.f32.mxu0 0.0
        %1336 = vmatmul.mubr.f32.gmra.mrb[0].mxu0 %v1214
        %v1337 = vpop.f32.mrb[0].mxu0
        %v1338 = vadd.f32 0.0, %v1337
        %v1339 = vpop.f32.mrb[0].mxu0
        %1340 = vmatprep.mubr.f32.mxu0 0.0
        %1341 = vmatmul.mubr.f32.gmra.mrb[0].mxu0 %v1217
        %v1342 = vpop.f32.mrb[0].mxu0
        %v1343 = vadd.f32 0.0, %v1342
        %v1344 = vpop.f32.mrb[0].mxu0
        %1345 = vmatprep.mubr.f32.mxu0 0.0
        %1346 = vmatmul.mubr.f32.gmra.mrb[0].mxu0 %v1220
        %v1347 = vpop.f32.mrb[0].mxu0
        %v1348 = vadd.f32 0.0, %v1347
        %v1349 = vpop.f32.mrb[0].mxu0
        %1350 = vmatprep.mubr.f32.mxu0 0.0
        %1351 = vmatmul.mubr.f32.gmra.mrb[0].mxu0 %v1223
        %v1352 = vpop.f32.mrb[0].mxu0
        %v1353 = vadd.f32 0.0, %v1352
        %v1354 = vpop.f32.mrb[0].mxu0
        %1355 = vmatprep.mubr.f32.mxu0 0.0
        %1356 = vmatmul.mubr.f32.gmra.mrb[0].mxu0 %v1226
        %v1357 = vpop.f32.mrb[0].mxu0
        %v1358 = vadd.f32 0.0, %v1357
        %v1359 = vpop.f32.mrb[0].mxu0
        %1360 = vmatprep.mubr.f32.mxu0 0.0
        %1361 = vmatmul.mubr.f32.gmra.mrb[0].mxu0 %v1229
        %v1362 = vpop.f32.mrb[0].mxu0
        %v1363 = vadd.f32 0.0, %v1362
        %v1364 = vpop.f32.mrb[0].mxu0
        %1365 = vmatprep.mubr.f32.mxu0 0.0
        %1366 = vmatmul.mubr.f32.gmra.mrb[0].mxu0 %v1232
        %v1367 = vpop.f32.mrb[0].mxu0
        %v1368 = vadd.f32 0.0, %v1367
        %v1369 = vpop.f32.mrb[0].mxu0
        %1370 = vmatprep.mubr.f32.mxu0 0.0
        %1371 = vmatmul.mubr.f32.gmra.mrb[0].mxu0 %v1235
        %v1372 = vpop.f32.mrb[0].mxu0
        %v1373 = vadd.f32 0.0, %v1372
        %v1374 = vpop.f32.mrb[0].mxu0
        %1375 = vmatprep.mubr.f32.mxu0 0.0
        %1376 = vmatmul.mubr.f32.gmra.mrb[0].mxu0 %v1238
        %v1377 = vpop.f32.mrb[0].mxu0
        %v1378 = vadd.f32 0.0, %v1377
        %v1379 = vpop.f32.mrb[0].mxu0
        %1380 = vmatprep.mubr.f32.mxu0 0.0
        %1381 = vmatmul.mubr.f32.gmra.mrb[0].mxu0 %v1241
        %v1382 = vpop.f32.mrb[0].mxu0
        %v1383 = vadd.f32 0.0, %v1382
        %v1384 = vpop.f32.mrb[0].mxu0
        %1385 = vmatprep.mubr.f32.mxu0 0.0
        %1386 = vmatmul.mubr.f32.gmra.mrb[0].mxu0 %v1244
        %v1387 = vpop.f32.mrb[0].mxu0
        %v1388 = vadd.f32 0.0, %v1387
        %v1389 = vpop.f32.mrb[0].mxu0
        %1390 = vmatprep.mubr.f32.mxu0 0.0
        %1391 = vmatmul.mubr.f32.gmra.mrb[0].mxu0 %v1247
        %v1392 = vpop.f32.mrb[0].mxu0
        %v1393 = vadd.f32 0.0, %v1392
        %v1394 = vpop.f32.mrb[0].mxu0
        %1395 = vmatprep.mubr.f32.mxu0 0.0
        %1396 = vmatmul.mubr.f32.gmra.mrb[0].mxu0 %v1250
        %v1397 = vpop.f32.mrb[0].mxu0
        %v1398 = vadd.f32 0.0, %v1397
        %v1399 = vpop.f32.mrb[0].mxu0
        %1400 = vdwg.mxu0
        %v1401 = vadd.f32 %v1187, %v1323
        %v1402 = vadd.f32 %v1188, %v1328
        %v1403 = vadd.f32 %v1189, %v1333
        %v1404 = vadd.f32 %v1190, %v1338
        %v1405 = vadd.f32 %v1191, %v1343
        %v1406 = vadd.f32 %v1192, %v1348
        %v1407 = vadd.f32 %v1193, %v1353
        %v1408 = vadd.f32 %v1194, %v1358
        %v1409 = vadd.f32 %v1195, %v1363
        %v1410 = vadd.f32 %v1196, %v1368
        %v1411 = vadd.f32 %v1197, %v1373
        %v1412 = vadd.f32 %v1198, %v1378
        %v1413 = vadd.f32 %v1199, %v1383
        %v1414 = vadd.f32 %v1200, %v1388
        %v1415 = vadd.f32 %v1201, %v1393
        %v1416 = vadd.f32 %v1202, %v1398
        %1417 = vst.msk [vmem:[#allocation3] sm:$0xff] %vm1152, %v1401
        %1418 = vst.msk [vmem:[#allocation3 + $0x8] sm:$0xff] %vm1152, %v1402
        %1419 = vst.msk [vmem:[#allocation3 + $0x10] sm:$0xff] %vm1152, %v1403
        %1420 = vst.msk [vmem:[#allocation3 + $0x18] sm:$0xff] %vm1152, %v1404
        %1421 = vst.msk [vmem:[#allocation3 + $0x20] sm:$0xff] %vm1152, %v1405
        %1422 = vst.msk [vmem:[#allocation3 + $0x28] sm:$0xff] %vm1152, %v1406
        %1423 = vst.msk [vmem:[#allocation3 + $0x30] sm:$0xff] %vm1152, %v1407
        %1424 = vst.msk [vmem:[#allocation3 + $0x38] sm:$0xff] %vm1152, %v1408
        %1425 = vst.msk [vmem:[#allocation3 + $0x40] sm:$0xff] %vm1152, %v1409
        %1426 = vst.msk [vmem:[#allocation3 + $0x48] sm:$0xff] %vm1152, %v1410
        %1427 = vst.msk [vmem:[#allocation3 + $0x50] sm:$0xff] %vm1152, %v1411
        %1428 = vst.msk [vmem:[#allocation3 + $0x58] sm:$0xff] %vm1152, %v1412
        %1429 = vst.msk [vmem:[#allocation3 + $0x60] sm:$0xff] %vm1152, %v1413
        %1430 = vst.msk [vmem:[#allocation3 + $0x68] sm:$0xff] %vm1152, %v1414
        %1431 = vst.msk [vmem:[#allocation3 + $0x70] sm:$0xff] %vm1152, %v1415
        %1432 = vst.msk [vmem:[#allocation3 + $0x78] sm:$0xff] %vm1152, %v1416
        %v1433 = vld [vmem:[%s1170 + $0x1] sm:$0xff]
        %v1434 = vld [vmem:[%s1170 + $0x9] sm:$0xff]
        %v1435 = vld [vmem:[%s1170 + $0x19] sm:$0xff]
        %v1436 = vld [vmem:[%s1170 + $0x21] sm:$0xff]
        %v1437 = vld [vmem:[%s1170 + $0x31] sm:$0xff]
        %v1438 = vld [vmem:[%s1170 + $0x39] sm:$0xff]
        %v1439 = vld [vmem:[%s1170 + $0x49] sm:$0xff]
        %v1440 = vld [vmem:[%s1170 + $0x51] sm:$0xff]
        %v1441 = vld [vmem:[%s1170 + $0x61] sm:$0xff]
        %v1442 = vld [vmem:[%s1170 + $0x69] sm:$0xff]
        %v1443 = vld [vmem:[%s1170 + $0x79] sm:$0xff]
        %v1444 = vld [vmem:[%s1170 + $0x81] sm:$0xff]
        %v1445 = vld [vmem:[%s1170 + $0x91] sm:$0xff]
        %v1446 = vld [vmem:[%s1170 + $0x99] sm:$0xff]
        %v1447 = vld [vmem:[%s1170 + $0xa9] sm:$0xff]
        %v1448 = vld [vmem:[%s1170 + $0xb1] sm:$0xff]
        %v1449 = vld [vmem:[#allocation3] sm:$0xff]
        %v1450 = vld [vmem:[#allocation3 + $0x8] sm:$0xff]
        %v1451 = vld [vmem:[#allocation3 + $0x10] sm:$0xff]
        %v1452 = vld [vmem:[#allocation3 + $0x18] sm:$0xff]
        %v1453 = vld [vmem:[#allocation3 + $0x20] sm:$0xff]
        %v1454 = vld [vmem:[#allocation3 + $0x28] sm:$0xff]
        %v1455 = vld [vmem:[#allocation3 + $0x30] sm:$0xff]
        %v1456 = vld [vmem:[#allocation3 + $0x38] sm:$0xff]
        %v1457 = vld [vmem:[#allocation3 + $0x40] sm:$0xff]
        %v1458 = vld [vmem:[#allocation3 + $0x48] sm:$0xff]
        %v1459 = vld [vmem:[#allocation3 + $0x50] sm:$0xff]
        %v1460 = vld [vmem:[#allocation3 + $0x58] sm:$0xff]
        %v1461 = vld [vmem:[#allocation3 + $0x60] sm:$0xff]
        %v1462 = vld [vmem:[#allocation3 + $0x68] sm:$0xff]
        %v1463 = vld [vmem:[#allocation3 + $0x70] sm:$0xff]
        %v1464 = vld [vmem:[#allocation3 + $0x78] sm:$0xff]
        %s1465 = scalar_lea.vmem [#allocation12], 4
        %v1466 = vld [vmem:[%s1465] sm:$0xf]
        %v1468 = vsel %vm1152, %v1433, 0
        %v1471 = vsel %vm1152, %v1434, 0
        %v1474 = vsel %vm1152, %v1435, 0
        %v1477 = vsel %vm1152, %v1436, 0
        %v1480 = vsel %vm1152, %v1437, 0
        %v1483 = vsel %vm1152, %v1438, 0
        %v1486 = vsel %vm1152, %v1439, 0
        %v1489 = vsel %vm1152, %v1440, 0
        %v1492 = vsel %vm1152, %v1441, 0
        %v1495 = vsel %vm1152, %v1442, 0
        %v1498 = vsel %vm1152, %v1443, 0
        %v1501 = vsel %vm1152, %v1444, 0
        %v1504 = vsel %vm1152, %v1445, 0
        %v1507 = vsel %vm1152, %v1446, 0
        %v1510 = vsel %vm1152, %v1447, 0
        %v1513 = vsel %vm1152, %v1448, 0
        %v1516 = vsel %vm1252, %v1466, 0
        %1518 = vmatprep.subr.mxu0 0.0
        %1519 = vmatpush1.msra.mxu0 %v1516
        %1520 = vmatprep.subr.mxu0 0.0
        %1521 = vmatpush1.msra.mxu0 0.0
        %1522 = vmatprep.subr.mxu0 0.0
        %1523 = vmatpush1.msra.mxu0 0.0
        %1524 = vmatprep.subr.mxu0 0.0
        %1525 = vmatpush1.msra.mxu0 0.0
        %1526 = vmatprep.subr.mxu0 0.0
        %1527 = vmatpush1.msra.mxu0 0.0
        %1528 = vmatprep.subr.mxu0 0.0
        %1529 = vmatpush1.msra.mxu0 0.0
        %1530 = vmatprep.subr.mxu0 0.0
        %1531 = vmatpush1.msra.mxu0 0.0
        %1532 = vmatprep.subr.mxu0 0.0
        %1533 = vmatpush1.msra.mxu0 0.0
        %1534 = vmatprep.subr.mxu0 0.0
        %1535 = vmatpush1.msra.mxu0 0.0
        %1536 = vmatprep.subr.mxu0 0.0
        %1537 = vmatpush1.msra.mxu0 0.0
        %1538 = vmatprep.subr.mxu0 0.0
        %1539 = vmatpush1.msra.mxu0 0.0
        %1540 = vmatprep.subr.mxu0 0.0
        %1541 = vmatpush1.msra.mxu0 0.0
        %1542 = vmatprep.subr.mxu0 0.0
        %1543 = vmatpush1.msra.mxu0 0.0
        %1544 = vmatprep.subr.mxu0 0.0
        %1545 = vmatpush1.msra.mxu0 0.0
        %1546 = vmatprep.subr.mxu0 0.0
        %1547 = vmatpush1.msra.mxu0 0.0
        %1548 = vmatprep.subr.mxu0 0.0
        %1549 = vmatpush1.msra.mxu0 0.0
        %1550 = vmatprep.subr.mxu0 0.0
        %1551 = vmatpush1.msra.mxu0 0.0
        %1552 = vmatprep.subr.mxu0 0.0
        %1553 = vmatpush1.msra.mxu0 0.0
        %1554 = vmatprep.subr.mxu0 0.0
        %1555 = vmatpush1.msra.mxu0 0.0
        %1556 = vmatprep.subr.mxu0 0.0
        %1557 = vmatpush1.msra.mxu0 0.0
        %1558 = vmatprep.subr.mxu0 0.0
        %1559 = vmatpush1.msra.mxu0 0.0
        %1560 = vmatprep.subr.mxu0 0.0
        %1561 = vmatpush1.msra.mxu0 0.0
        %1562 = vmatprep.subr.mxu0 0.0
        %1563 = vmatpush1.msra.mxu0 0.0
        %1564 = vmatprep.subr.mxu0 0.0
        %1565 = vmatpush1.msra.mxu0 0.0
        %1566 = vmatprep.subr.mxu0 0.0
        %1567 = vmatpush1.msra.mxu0 0.0
        %1568 = vmatprep.subr.mxu0 0.0
        %1569 = vmatpush1.msra.mxu0 0.0
        %1570 = vmatprep.subr.mxu0 0.0
        %1571 = vmatpush1.msra.mxu0 0.0
        %1572 = vmatprep.subr.mxu0 0.0
        %1573 = vmatpush1.msra.mxu0 0.0
        %1574 = vmatprep.subr.mxu0 0.0
        %1575 = vmatpush1.msra.mxu0 0.0
        %1576 = vmatprep.subr.mxu0 0.0
        %1577 = vmatpush1.msra.mxu0 0.0
        %1578 = vmatprep.subr.mxu0 0.0
        %1579 = vmatpush1.msra.mxu0 0.0
        %1580 = vmatprep.subr.mxu0 0.0
        %1581 = vmatpush1.msra.mxu0 0.0
        %1582 = vmatprep.mubr.f32.mxu0 0.0
        %1583 = vmatmul.mubr.f32.gmra.mrb[0].mxu0 %v1468
        %v1584 = vpop.f32.mrb[0].mxu0
        %v1585 = vadd.f32 0.0, %v1584
        %v1586 = vpop.f32.mrb[0].mxu0
        %1587 = vmatprep.mubr.f32.mxu0 0.0
        %1588 = vmatmul.mubr.f32.gmra.mrb[0].mxu0 %v1471
        %v1589 = vpop.f32.mrb[0].mxu0
        %v1590 = vadd.f32 0.0, %v1589
        %v1591 = vpop.f32.mrb[0].mxu0
        %1592 = vmatprep.mubr.f32.mxu0 0.0
        %1593 = vmatmul.mubr.f32.gmra.mrb[0].mxu0 %v1474
        %v1594 = vpop.f32.mrb[0].mxu0
        %v1595 = vadd.f32 0.0, %v1594
        %v1596 = vpop.f32.mrb[0].mxu0
        %1597 = vmatprep.mubr.f32.mxu0 0.0
        %1598 = vmatmul.mubr.f32.gmra.mrb[0].mxu0 %v1477
        %v1599 = vpop.f32.mrb[0].mxu0
        %v1600 = vadd.f32 0.0, %v1599
        %v1601 = vpop.f32.mrb[0].mxu0
        %1602 = vmatprep.mubr.f32.mxu0 0.0
        %1603 = vmatmul.mubr.f32.gmra.mrb[0].mxu0 %v1480
        %v1604 = vpop.f32.mrb[0].mxu0
        %v1605 = vadd.f32 0.0, %v1604
        %v1606 = vpop.f32.mrb[0].mxu0
        %1607 = vmatprep.mubr.f32.mxu0 0.0
        %1608 = vmatmul.mubr.f32.gmra.mrb[0].mxu0 %v1483
        %v1609 = vpop.f32.mrb[0].mxu0
        %v1610 = vadd.f32 0.0, %v1609
        %v1611 = vpop.f32.mrb[0].mxu0
        %1612 = vmatprep.mubr.f32.mxu0 0.0
        %1613 = vmatmul.mubr.f32.gmra.mrb[0].mxu0 %v1486
        %v1614 = vpop.f32.mrb[0].mxu0
        %v1615 = vadd.f32 0.0, %v1614
        %v1616 = vpop.f32.mrb[0].mxu0
        %1617 = vmatprep.mubr.f32.mxu0 0.0
        %1618 = vmatmul.mubr.f32.gmra.mrb[0].mxu0 %v1489
        %v1619 = vpop.f32.mrb[0].mxu0
        %v1620 = vadd.f32 0.0, %v1619
        %v1621 = vpop.f32.mrb[0].mxu0
        %1622 = vmatprep.mubr.f32.mxu0 0.0
        %1623 = vmatmul.mubr.f32.gmra.mrb[0].mxu0 %v1492
        %v1624 = vpop.f32.mrb[0].mxu0
        %v1625 = vadd.f32 0.0, %v1624
        %v1626 = vpop.f32.mrb[0].mxu0
        %1627 = vmatprep.mubr.f32.mxu0 0.0
        %1628 = vmatmul.mubr.f32.gmra.mrb[0].mxu0 %v1495
        %v1629 = vpop.f32.mrb[0].mxu0
        %v1630 = vadd.f32 0.0, %v1629
        %v1631 = vpop.f32.mrb[0].mxu0
        %1632 = vmatprep.mubr.f32.mxu0 0.0
        %1633 = vmatmul.mubr.f32.gmra.mrb[0].mxu0 %v1498
        %v1634 = vpop.f32.mrb[0].mxu0
        %v1635 = vadd.f32 0.0, %v1634
        %v1636 = vpop.f32.mrb[0].mxu0
        %1637 = vmatprep.mubr.f32.mxu0 0.0
        %1638 = vmatmul.mubr.f32.gmra.mrb[0].mxu0 %v1501
        %v1639 = vpop.f32.mrb[0].mxu0
        %v1640 = vadd.f32 0.0, %v1639
        %v1641 = vpop.f32.mrb[0].mxu0
        %1642 = vmatprep.mubr.f32.mxu0 0.0
        %1643 = vmatmul.mubr.f32.gmra.mrb[0].mxu0 %v1504
        %v1644 = vpop.f32.mrb[0].mxu0
        %v1645 = vadd.f32 0.0, %v1644
        %v1646 = vpop.f32.mrb[0].mxu0
        %1647 = vmatprep.mubr.f32.mxu0 0.0
        %1648 = vmatmul.mubr.f32.gmra.mrb[0].mxu0 %v1507
        %v1649 = vpop.f32.mrb[0].mxu0
        %v1650 = vadd.f32 0.0, %v1649
        %v1651 = vpop.f32.mrb[0].mxu0
        %1652 = vmatprep.mubr.f32.mxu0 0.0
        %1653 = vmatmul.mubr.f32.gmra.mrb[0].mxu0 %v1510
        %v1654 = vpop.f32.mrb[0].mxu0
        %v1655 = vadd.f32 0.0, %v1654
        %v1656 = vpop.f32.mrb[0].mxu0
        %1657 = vmatprep.mubr.f32.mxu0 0.0
        %1658 = vmatmul.mubr.f32.gmra.mrb[0].mxu0 %v1513
        %v1659 = vpop.f32.mrb[0].mxu0
        %v1660 = vadd.f32 0.0, %v1659
        %v1661 = vpop.f32.mrb[0].mxu0
        %1662 = vdwg.mxu0
        %v1663 = vadd.f32 %v1449, %v1585
        %v1664 = vadd.f32 %v1450, %v1590
        %v1665 = vadd.f32 %v1451, %v1595
        %v1666 = vadd.f32 %v1452, %v1600
        %v1667 = vadd.f32 %v1453, %v1605
        %v1668 = vadd.f32 %v1454, %v1610
        %v1669 = vadd.f32 %v1455, %v1615
        %v1670 = vadd.f32 %v1456, %v1620
        %v1671 = vadd.f32 %v1457, %v1625
        %v1672 = vadd.f32 %v1458, %v1630
        %v1673 = vadd.f32 %v1459, %v1635
        %v1674 = vadd.f32 %v1460, %v1640
        %v1675 = vadd.f32 %v1461, %v1645
        %v1676 = vadd.f32 %v1462, %v1650
        %v1677 = vadd.f32 %v1463, %v1655
        %v1678 = vadd.f32 %v1464, %v1660
        %1679 = vst.msk [vmem:[#allocation3] sm:$0xff] %vm1152, %v1663
        %1680 = vst.msk [vmem:[#allocation3 + $0x8] sm:$0xff] %vm1152, %v1664
        %1681 = vst.msk [vmem:[#allocation3 + $0x10] sm:$0xff] %vm1152, %v1665
        %1682 = vst.msk [vmem:[#allocation3 + $0x18] sm:$0xff] %vm1152, %v1666
        %1683 = vst.msk [vmem:[#allocation3 + $0x20] sm:$0xff] %vm1152, %v1667
        %1684 = vst.msk [vmem:[#allocation3 + $0x28] sm:$0xff] %vm1152, %v1668
        %1685 = vst.msk [vmem:[#allocation3 + $0x30] sm:$0xff] %vm1152, %v1669
        %1686 = vst.msk [vmem:[#allocation3 + $0x38] sm:$0xff] %vm1152, %v1670
        %1687 = vst.msk [vmem:[#allocation3 + $0x40] sm:$0xff] %vm1152, %v1671
        %1688 = vst.msk [vmem:[#allocation3 + $0x48] sm:$0xff] %vm1152, %v1672
        %1689 = vst.msk [vmem:[#allocation3 + $0x50] sm:$0xff] %vm1152, %v1673
        %1690 = vst.msk [vmem:[#allocation3 + $0x58] sm:$0xff] %vm1152, %v1674
        %1691 = vst.msk [vmem:[#allocation3 + $0x60] sm:$0xff] %vm1152, %v1675
        %1692 = vst.msk [vmem:[#allocation3 + $0x68] sm:$0xff] %vm1152, %v1676
        %1693 = vst.msk [vmem:[#allocation3 + $0x70] sm:$0xff] %vm1152, %v1677
        %1694 = vst.msk [vmem:[#allocation3 + $0x78] sm:$0xff] %vm1152, %v1678
        %v1695 = vld [vmem:[%s1170 + $0x2] sm:$0xff]
        %v1696 = vld [vmem:[%s1170 + $0xa] sm:$0xff]
        %v1697 = vld [vmem:[%s1170 + $0x1a] sm:$0xff]
        %v1698 = vld [vmem:[%s1170 + $0x22] sm:$0xff]
        %v1699 = vld [vmem:[%s1170 + $0x32] sm:$0xff]
        %v1700 = vld [vmem:[%s1170 + $0x3a] sm:$0xff]
        %v1701 = vld [vmem:[%s1170 + $0x4a] sm:$0xff]
        %v1702 = vld [vmem:[%s1170 + $0x52] sm:$0xff]
        %v1703 = vld [vmem:[%s1170 + $0x62] sm:$0xff]
        %v1704 = vld [vmem:[%s1170 + $0x6a] sm:$0xff]
        %v1705 = vld [vmem:[%s1170 + $0x7a] sm:$0xff]
        %v1706 = vld [vmem:[%s1170 + $0x82] sm:$0xff]
        %v1707 = vld [vmem:[%s1170 + $0x92] sm:$0xff]
        %v1708 = vld [vmem:[%s1170 + $0x9a] sm:$0xff]
        %v1709 = vld [vmem:[%s1170 + $0xaa] sm:$0xff]
        %v1710 = vld [vmem:[%s1170 + $0xb2] sm:$0xff]
        %v1711 = vld [vmem:[#allocation3] sm:$0xff]
        %v1712 = vld [vmem:[#allocation3 + $0x8] sm:$0xff]
        %v1713 = vld [vmem:[#allocation3 + $0x10] sm:$0xff]
        %v1714 = vld [vmem:[#allocation3 + $0x18] sm:$0xff]
        %v1715 = vld [vmem:[#allocation3 + $0x20] sm:$0xff]
        %v1716 = vld [vmem:[#allocation3 + $0x28] sm:$0xff]
        %v1717 = vld [vmem:[#allocation3 + $0x30] sm:$0xff]
        %v1718 = vld [vmem:[#allocation3 + $0x38] sm:$0xff]
        %v1719 = vld [vmem:[#allocation3 + $0x40] sm:$0xff]
        %v1720 = vld [vmem:[#allocation3 + $0x48] sm:$0xff]
        %v1721 = vld [vmem:[#allocation3 + $0x50] sm:$0xff]
        %v1722 = vld [vmem:[#allocation3 + $0x58] sm:$0xff]
        %v1723 = vld [vmem:[#allocation3 + $0x60] sm:$0xff]
        %v1724 = vld [vmem:[#allocation3 + $0x68] sm:$0xff]
        %v1725 = vld [vmem:[#allocation3 + $0x70] sm:$0xff]
        %v1726 = vld [vmem:[#allocation3 + $0x78] sm:$0xff]
        %s1727 = scalar_lea.vmem [#allocation12], 8
        %v1728 = vld [vmem:[%s1727] sm:$0xf]
        %v1730 = vsel %vm1152, %v1695, 0
        %v1733 = vsel %vm1152, %v1696, 0
        %v1736 = vsel %vm1152, %v1697, 0
        %v1739 = vsel %vm1152, %v1698, 0
        %v1742 = vsel %vm1152, %v1699, 0
        %v1745 = vsel %vm1152, %v1700, 0
        %v1748 = vsel %vm1152, %v1701, 0
        %v1751 = vsel %vm1152, %v1702, 0
        %v1754 = vsel %vm1152, %v1703, 0
        %v1757 = vsel %vm1152, %v1704, 0
        %v1760 = vsel %vm1152, %v1705, 0
        %v1763 = vsel %vm1152, %v1706, 0
        %v1766 = vsel %vm1152, %v1707, 0
        %v1769 = vsel %vm1152, %v1708, 0
        %v1772 = vsel %vm1152, %v1709, 0
        %v1775 = vsel %vm1152, %v1710, 0
        %v1778 = vsel %vm1252, %v1728, 0
        %1780 = vmatprep.subr.mxu0 0.0
        %1781 = vmatpush1.msra.mxu0 %v1778
        %1782 = vmatprep.subr.mxu0 0.0
        %1783 = vmatpush1.msra.mxu0 0.0
        %1784 = vmatprep.subr.mxu0 0.0
        %1785 = vmatpush1.msra.mxu0 0.0
        %1786 = vmatprep.subr.mxu0 0.0
        %1787 = vmatpush1.msra.mxu0 0.0
        %1788 = vmatprep.subr.mxu0 0.0
        %1789 = vmatpush1.msra.mxu0 0.0
        %1790 = vmatprep.subr.mxu0 0.0
        %1791 = vmatpush1.msra.mxu0 0.0
        %1792 = vmatprep.subr.mxu0 0.0
        %1793 = vmatpush1.msra.mxu0 0.0
        %1794 = vmatprep.subr.mxu0 0.0
        %1795 = vmatpush1.msra.mxu0 0.0
        %1796 = vmatprep.subr.mxu0 0.0
        %1797 = vmatpush1.msra.mxu0 0.0
        %1798 = vmatprep.subr.mxu0 0.0
        %1799 = vmatpush1.msra.mxu0 0.0
        %1800 = vmatprep.subr.mxu0 0.0
        %1801 = vmatpush1.msra.mxu0 0.0
        %1802 = vmatprep.subr.mxu0 0.0
        %1803 = vmatpush1.msra.mxu0 0.0
        %1804 = vmatprep.subr.mxu0 0.0
        %1805 = vmatpush1.msra.mxu0 0.0
        %1806 = vmatprep.subr.mxu0 0.0
        %1807 = vmatpush1.msra.mxu0 0.0
        %1808 = vmatprep.subr.mxu0 0.0
        %1809 = vmatpush1.msra.mxu0 0.0
        %1810 = vmatprep.subr.mxu0 0.0
        %1811 = vmatpush1.msra.mxu0 0.0
        %1812 = vmatprep.subr.mxu0 0.0
        %1813 = vmatpush1.msra.mxu0 0.0
        %1814 = vmatprep.subr.mxu0 0.0
        %1815 = vmatpush1.msra.mxu0 0.0
        %1816 = vmatprep.subr.mxu0 0.0
        %1817 = vmatpush1.msra.mxu0 0.0
        %1818 = vmatprep.subr.mxu0 0.0
        %1819 = vmatpush1.msra.mxu0 0.0
        %1820 = vmatprep.subr.mxu0 0.0
        %1821 = vmatpush1.msra.mxu0 0.0
        %1822 = vmatprep.subr.mxu0 0.0
        %1823 = vmatpush1.msra.mxu0 0.0
        %1824 = vmatprep.subr.mxu0 0.0
        %1825 = vmatpush1.msra.mxu0 0.0
        %1826 = vmatprep.subr.mxu0 0.0
        %1827 = vmatpush1.msra.mxu0 0.0
        %1828 = vmatprep.subr.mxu0 0.0
        %1829 = vmatpush1.msra.mxu0 0.0
        %1830 = vmatprep.subr.mxu0 0.0
        %1831 = vmatpush1.msra.mxu0 0.0
        %1832 = vmatprep.subr.mxu0 0.0
        %1833 = vmatpush1.msra.mxu0 0.0
        %1834 = vmatprep.subr.mxu0 0.0
        %1835 = vmatpush1.msra.mxu0 0.0
        %1836 = vmatprep.subr.mxu0 0.0
        %1837 = vmatpush1.msra.mxu0 0.0
        %1838 = vmatprep.subr.mxu0 0.0
        %1839 = vmatpush1.msra.mxu0 0.0
        %1840 = vmatprep.subr.mxu0 0.0
        %1841 = vmatpush1.msra.mxu0 0.0
        %1842 = vmatprep.subr.mxu0 0.0
        %1843 = vmatpush1.msra.mxu0 0.0
        %1844 = vmatprep.mubr.f32.mxu0 0.0
        %1845 = vmatmul.mubr.f32.gmra.mrb[0].mxu0 %v1730
        %v1846 = vpop.f32.mrb[0].mxu0
        %v1847 = vadd.f32 0.0, %v1846
        %v1848 = vpop.f32.mrb[0].mxu0
        %1849 = vmatprep.mubr.f32.mxu0 0.0
        %1850 = vmatmul.mubr.f32.gmra.mrb[0].mxu0 %v1733
        %v1851 = vpop.f32.mrb[0].mxu0
        %v1852 = vadd.f32 0.0, %v1851
        %v1853 = vpop.f32.mrb[0].mxu0
        %1854 = vmatprep.mubr.f32.mxu0 0.0
        %1855 = vmatmul.mubr.f32.gmra.mrb[0].mxu0 %v1736
        %v1856 = vpop.f32.mrb[0].mxu0
        %v1857 = vadd.f32 0.0, %v1856
        %v1858 = vpop.f32.mrb[0].mxu0
        %1859 = vmatprep.mubr.f32.mxu0 0.0
        %1860 = vmatmul.mubr.f32.gmra.mrb[0].mxu0 %v1739
        %v1861 = vpop.f32.mrb[0].mxu0
        %v1862 = vadd.f32 0.0, %v1861
        %v1863 = vpop.f32.mrb[0].mxu0
        %1864 = vmatprep.mubr.f32.mxu0 0.0
        %1865 = vmatmul.mubr.f32.gmra.mrb[0].mxu0 %v1742
        %v1866 = vpop.f32.mrb[0].mxu0
        %v1867 = vadd.f32 0.0, %v1866
        %v1868 = vpop.f32.mrb[0].mxu0
        %1869 = vmatprep.mubr.f32.mxu0 0.0
        %1870 = vmatmul.mubr.f32.gmra.mrb[0].mxu0 %v1745
        %v1871 = vpop.f32.mrb[0].mxu0
        %v1872 = vadd.f32 0.0, %v1871
        %v1873 = vpop.f32.mrb[0].mxu0
        %1874 = vmatprep.mubr.f32.mxu0 0.0
        %1875 = vmatmul.mubr.f32.gmra.mrb[0].mxu0 %v1748
        %v1876 = vpop.f32.mrb[0].mxu0
        %v1877 = vadd.f32 0.0, %v1876
        %v1878 = vpop.f32.mrb[0].mxu0
        %1879 = vmatprep.mubr.f32.mxu0 0.0
        %1880 = vmatmul.mubr.f32.gmra.mrb[0].mxu0 %v1751
        %v1881 = vpop.f32.mrb[0].mxu0
        %v1882 = vadd.f32 0.0, %v1881
        %v1883 = vpop.f32.mrb[0].mxu0
        %1884 = vmatprep.mubr.f32.mxu0 0.0
        %1885 = vmatmul.mubr.f32.gmra.mrb[0].mxu0 %v1754
        %v1886 = vpop.f32.mrb[0].mxu0
        %v1887 = vadd.f32 0.0, %v1886
        %v1888 = vpop.f32.mrb[0].mxu0
        %1889 = vmatprep.mubr.f32.mxu0 0.0
        %1890 = vmatmul.mubr.f32.gmra.mrb[0].mxu0 %v1757
        %v1891 = vpop.f32.mrb[0].mxu0
        %v1892 = vadd.f32 0.0, %v1891
        %v1893 = vpop.f32.mrb[0].mxu0
        %1894 = vmatprep.mubr.f32.mxu0 0.0
        %1895 = vmatmul.mubr.f32.gmra.mrb[0].mxu0 %v1760
        %v1896 = vpop.f32.mrb[0].mxu0
        %v1897 = vadd.f32 0.0, %v1896
        %v1898 = vpop.f32.mrb[0].mxu0
        %1899 = vmatprep.mubr.f32.mxu0 0.0
        %1900 = vmatmul.mubr.f32.gmra.mrb[0].mxu0 %v1763
        %v1901 = vpop.f32.mrb[0].mxu0
        %v1902 = vadd.f32 0.0, %v1901
        %v1903 = vpop.f32.mrb[0].mxu0
        %1904 = vmatprep.mubr.f32.mxu0 0.0
        %1905 = vmatmul.mubr.f32.gmra.mrb[0].mxu0 %v1766
        %v1906 = vpop.f32.mrb[0].mxu0
        %v1907 = vadd.f32 0.0, %v1906
        %v1908 = vpop.f32.mrb[0].mxu0
        %1909 = vmatprep.mubr.f32.mxu0 0.0
        %1910 = vmatmul.mubr.f32.gmra.mrb[0].mxu0 %v1769
        %v1911 = vpop.f32.mrb[0].mxu0
        %v1912 = vadd.f32 0.0, %v1911
        %v1913 = vpop.f32.mrb[0].mxu0
        %1914 = vmatprep.mubr.f32.mxu0 0.0
        %1915 = vmatmul.mubr.f32.gmra.mrb[0].mxu0 %v1772
        %v1916 = vpop.f32.mrb[0].mxu0
        %v1917 = vadd.f32 0.0, %v1916
        %v1918 = vpop.f32.mrb[0].mxu0
        %1919 = vmatprep.mubr.f32.mxu0 0.0
        %1920 = vmatmul.mubr.f32.gmra.mrb[0].mxu0 %v1775
        %v1921 = vpop.f32.mrb[0].mxu0
        %v1922 = vadd.f32 0.0, %v1921
        %v1923 = vpop.f32.mrb[0].mxu0
        %1924 = vdwg.mxu0
        %v1925 = vadd.f32 %v1711, %v1847
        %v1926 = vadd.f32 %v1712, %v1852
        %v1927 = vadd.f32 %v1713, %v1857
        %v1928 = vadd.f32 %v1714, %v1862
        %v1929 = vadd.f32 %v1715, %v1867
        %v1930 = vadd.f32 %v1716, %v1872
        %v1931 = vadd.f32 %v1717, %v1877
        %v1932 = vadd.f32 %v1718, %v1882
        %v1933 = vadd.f32 %v1719, %v1887
        %v1934 = vadd.f32 %v1720, %v1892
        %v1935 = vadd.f32 %v1721, %v1897
        %v1936 = vadd.f32 %v1722, %v1902
        %v1937 = vadd.f32 %v1723, %v1907
        %v1938 = vadd.f32 %v1724, %v1912
        %v1939 = vadd.f32 %v1725, %v1917
        %v1940 = vadd.f32 %v1726, %v1922
        %1941 = vst.msk [vmem:[#allocation3] sm:$0xff] %vm1152, %v1925
        %1942 = vst.msk [vmem:[#allocation3 + $0x8] sm:$0xff] %vm1152, %v1926
        %1943 = vst.msk [vmem:[#allocation3 + $0x10] sm:$0xff] %vm1152, %v1927
        %1944 = vst.msk [vmem:[#allocation3 + $0x18] sm:$0xff] %vm1152, %v1928
        %1945 = vst.msk [vmem:[#allocation3 + $0x20] sm:$0xff] %vm1152, %v1929
        %1946 = vst.msk [vmem:[#allocation3 + $0x28] sm:$0xff] %vm1152, %v1930
        %1947 = vst.msk [vmem:[#allocation3 + $0x30] sm:$0xff] %vm1152, %v1931
        %1948 = vst.msk [vmem:[#allocation3 + $0x38] sm:$0xff] %vm1152, %v1932
        %1949 = vst.msk [vmem:[#allocation3 + $0x40] sm:$0xff] %vm1152, %v1933
        %1950 = vst.msk [vmem:[#allocation3 + $0x48] sm:$0xff] %vm1152, %v1934
        %1951 = vst.msk [vmem:[#allocation3 + $0x50] sm:$0xff] %vm1152, %v1935
        %1952 = vst.msk [vmem:[#allocation3 + $0x58] sm:$0xff] %vm1152, %v1936
        %1953 = vst.msk [vmem:[#allocation3 + $0x60] sm:$0xff] %vm1152, %v1937
        %1954 = vst.msk [vmem:[#allocation3 + $0x68] sm:$0xff] %vm1152, %v1938
        %1955 = vst.msk [vmem:[#allocation3 + $0x70] sm:$0xff] %vm1152, %v1939
        %1956 = vst.msk [vmem:[#allocation3 + $0x78] sm:$0xff] %vm1152, %v1940
        %s1957 = sadd.s32 %s1151, 1
        %s1958 = smul.u32 %s1957, 24
        %s1959 = scalar_lea.vmem [#allocation2], %s1958
        %v1960 = vld [vmem:[%s1959] sm:$0xff]
        %v1961 = vld [vmem:[%s1959 + $0x8] sm:$0xff]
        %v1962 = vld [vmem:[%s1959 + $0x18] sm:$0xff]
        %v1963 = vld [vmem:[%s1959 + $0x20] sm:$0xff]
        %v1964 = vld [vmem:[%s1959 + $0x30] sm:$0xff]
        %v1965 = vld [vmem:[%s1959 + $0x38] sm:$0xff]
        %v1966 = vld [vmem:[%s1959 + $0x48] sm:$0xff]
        %v1967 = vld [vmem:[%s1959 + $0x50] sm:$0xff]
        %v1968 = vld [vmem:[%s1959 + $0x60] sm:$0xff]
        %v1969 = vld [vmem:[%s1959 + $0x68] sm:$0xff]
        %v1970 = vld [vmem:[%s1959 + $0x78] sm:$0xff]
        %v1971 = vld [vmem:[%s1959 + $0x80] sm:$0xff]
        %v1972 = vld [vmem:[%s1959 + $0x90] sm:$0xff]
        %v1973 = vld [vmem:[%s1959 + $0x98] sm:$0xff]
        %v1974 = vld [vmem:[%s1959 + $0xa8] sm:$0xff]
        %v1975 = vld [vmem:[%s1959 + $0xb0] sm:$0xff]
        %v1976 = vld [vmem:[#allocation3] sm:$0xff]
        %v1977 = vld [vmem:[#allocation3 + $0x8] sm:$0xff]
        %v1978 = vld [vmem:[#allocation3 + $0x10] sm:$0xff]
        %v1979 = vld [vmem:[#allocation3 + $0x18] sm:$0xff]
        %v1980 = vld [vmem:[#allocation3 + $0x20] sm:$0xff]
        %v1981 = vld [vmem:[#allocation3 + $0x28] sm:$0xff]
        %v1982 = vld [vmem:[#allocation3 + $0x30] sm:$0xff]
        %v1983 = vld [vmem:[#allocation3 + $0x38] sm:$0xff]
        %v1984 = vld [vmem:[#allocation3 + $0x40] sm:$0xff]
        %v1985 = vld [vmem:[#allocation3 + $0x48] sm:$0xff]
        %v1986 = vld [vmem:[#allocation3 + $0x50] sm:$0xff]
        %v1987 = vld [vmem:[#allocation3 + $0x58] sm:$0xff]
        %v1988 = vld [vmem:[#allocation3 + $0x60] sm:$0xff]
        %v1989 = vld [vmem:[#allocation3 + $0x68] sm:$0xff]
        %v1990 = vld [vmem:[#allocation3 + $0x70] sm:$0xff]
        %v1991 = vld [vmem:[#allocation3 + $0x78] sm:$0xff]
        %s1992 = scalar_lea.vmem [#allocation12], 12
        %v1993 = vld [vmem:[%s1992] sm:$0xf]
        %v1995 = vsel %vm1152, %v1960, 0
        %v1998 = vsel %vm1152, %v1961, 0
        %v2001 = vsel %vm1152, %v1962, 0
        %v2004 = vsel %vm1152, %v1963, 0
        %v2007 = vsel %vm1152, %v1964, 0
        %v2010 = vsel %vm1152, %v1965, 0
        %v2013 = vsel %vm1152, %v1966, 0
        %v2016 = vsel %vm1152, %v1967, 0
        %v2019 = vsel %vm1152, %v1968, 0
        %v2022 = vsel %vm1152, %v1969, 0
        %v2025 = vsel %vm1152, %v1970, 0
        %v2028 = vsel %vm1152, %v1971, 0
        %v2031 = vsel %vm1152, %v1972, 0
        %v2034 = vsel %vm1152, %v1973, 0
        %v2037 = vsel %vm1152, %v1974, 0
        %v2040 = vsel %vm1152, %v1975, 0
        %v2043 = vsel %vm1252, %v1993, 0
        %2045 = vmatprep.subr.mxu0 0.0
        %2046 = vmatpush1.msra.mxu0 %v2043
        %2047 = vmatprep.subr.mxu0 0.0
        %2048 = vmatpush1.msra.mxu0 0.0
        %2049 = vmatprep.subr.mxu0 0.0
        %2050 = vmatpush1.msra.mxu0 0.0
        %2051 = vmatprep.subr.mxu0 0.0
        %2052 = vmatpush1.msra.mxu0 0.0
        %2053 = vmatprep.subr.mxu0 0.0
        %2054 = vmatpush1.msra.mxu0 0.0
        %2055 = vmatprep.subr.mxu0 0.0
        %2056 = vmatpush1.msra.mxu0 0.0
        %2057 = vmatprep.subr.mxu0 0.0
        %2058 = vmatpush1.msra.mxu0 0.0
        %2059 = vmatprep.subr.mxu0 0.0
        %2060 = vmatpush1.msra.mxu0 0.0
        %2061 = vmatprep.subr.mxu0 0.0
        %2062 = vmatpush1.msra.mxu0 0.0
        %2063 = vmatprep.subr.mxu0 0.0
        %2064 = vmatpush1.msra.mxu0 0.0
        %2065 = vmatprep.subr.mxu0 0.0
        %2066 = vmatpush1.msra.mxu0 0.0
        %2067 = vmatprep.subr.mxu0 0.0
        %2068 = vmatpush1.msra.mxu0 0.0
        %2069 = vmatprep.subr.mxu0 0.0
        %2070 = vmatpush1.msra.mxu0 0.0
        %2071 = vmatprep.subr.mxu0 0.0
        %2072 = vmatpush1.msra.mxu0 0.0
        %2073 = vmatprep.subr.mxu0 0.0
        %2074 = vmatpush1.msra.mxu0 0.0
        %2075 = vmatprep.subr.mxu0 0.0
        %2076 = vmatpush1.msra.mxu0 0.0
        %2077 = vmatprep.subr.mxu0 0.0
        %2078 = vmatpush1.msra.mxu0 0.0
        %2079 = vmatprep.subr.mxu0 0.0
        %2080 = vmatpush1.msra.mxu0 0.0
        %2081 = vmatprep.subr.mxu0 0.0
        %2082 = vmatpush1.msra.mxu0 0.0
        %2083 = vmatprep.subr.mxu0 0.0
        %2084 = vmatpush1.msra.mxu0 0.0
        %2085 = vmatprep.subr.mxu0 0.0
        %2086 = vmatpush1.msra.mxu0 0.0
        %2087 = vmatprep.subr.mxu0 0.0
        %2088 = vmatpush1.msra.mxu0 0.0
        %2089 = vmatprep.subr.mxu0 0.0
        %2090 = vmatpush1.msra.mxu0 0.0
        %2091 = vmatprep.subr.mxu0 0.0
        %2092 = vmatpush1.msra.mxu0 0.0
        %2093 = vmatprep.subr.mxu0 0.0
        %2094 = vmatpush1.msra.mxu0 0.0
        %2095 = vmatprep.subr.mxu0 0.0
        %2096 = vmatpush1.msra.mxu0 0.0
        %2097 = vmatprep.subr.mxu0 0.0
        %2098 = vmatpush1.msra.mxu0 0.0
        %2099 = vmatprep.subr.mxu0 0.0
        %2100 = vmatpush1.msra.mxu0 0.0
        %2101 = vmatprep.subr.mxu0 0.0
        %2102 = vmatpush1.msra.mxu0 0.0
        %2103 = vmatprep.subr.mxu0 0.0
        %2104 = vmatpush1.msra.mxu0 0.0
        %2105 = vmatprep.subr.mxu0 0.0
        %2106 = vmatpush1.msra.mxu0 0.0
        %2107 = vmatprep.subr.mxu0 0.0
        %2108 = vmatpush1.msra.mxu0 0.0
        %2109 = vmatprep.mubr.f32.mxu0 0.0
        %2110 = vmatmul.mubr.f32.gmra.mrb[0].mxu0 %v1995
        %v2111 = vpop.f32.mrb[0].mxu0
        %v2112 = vadd.f32 0.0, %v2111
        %v2113 = vpop.f32.mrb[0].mxu0
        %2114 = vmatprep.mubr.f32.mxu0 0.0
        %2115 = vmatmul.mubr.f32.gmra.mrb[0].mxu0 %v1998
        %v2116 = vpop.f32.mrb[0].mxu0
        %v2117 = vadd.f32 0.0, %v2116
        %v2118 = vpop.f32.mrb[0].mxu0
        %2119 = vmatprep.mubr.f32.mxu0 0.0
        %2120 = vmatmul.mubr.f32.gmra.mrb[0].mxu0 %v2001
        %v2121 = vpop.f32.mrb[0].mxu0
        %v2122 = vadd.f32 0.0, %v2121
        %v2123 = vpop.f32.mrb[0].mxu0
        %2124 = vmatprep.mubr.f32.mxu0 0.0
        %2125 = vmatmul.mubr.f32.gmra.mrb[0].mxu0 %v2004
        %v2126 = vpop.f32.mrb[0].mxu0
        %v2127 = vadd.f32 0.0, %v2126
        %v2128 = vpop.f32.mrb[0].mxu0
        %2129 = vmatprep.mubr.f32.mxu0 0.0
        %2130 = vmatmul.mubr.f32.gmra.mrb[0].mxu0 %v2007
        %v2131 = vpop.f32.mrb[0].mxu0
        %v2132 = vadd.f32 0.0, %v2131
        %v2133 = vpop.f32.mrb[0].mxu0
        %2134 = vmatprep.mubr.f32.mxu0 0.0
        %2135 = vmatmul.mubr.f32.gmra.mrb[0].mxu0 %v2010
        %v2136 = vpop.f32.mrb[0].mxu0
        %v2137 = vadd.f32 0.0, %v2136
        %v2138 = vpop.f32.mrb[0].mxu0
        %2139 = vmatprep.mubr.f32.mxu0 0.0
        %2140 = vmatmul.mubr.f32.gmra.mrb[0].mxu0 %v2013
        %v2141 = vpop.f32.mrb[0].mxu0
        %v2142 = vadd.f32 0.0, %v2141
        %v2143 = vpop.f32.mrb[0].mxu0
        %2144 = vmatprep.mubr.f32.mxu0 0.0
        %2145 = vmatmul.mubr.f32.gmra.mrb[0].mxu0 %v2016
        %v2146 = vpop.f32.mrb[0].mxu0
        %v2147 = vadd.f32 0.0, %v2146
        %v2148 = vpop.f32.mrb[0].mxu0
        %2149 = vmatprep.mubr.f32.mxu0 0.0
        %2150 = vmatmul.mubr.f32.gmra.mrb[0].mxu0 %v2019
        %v2151 = vpop.f32.mrb[0].mxu0
        %v2152 = vadd.f32 0.0, %v2151
        %v2153 = vpop.f32.mrb[0].mxu0
        %2154 = vmatprep.mubr.f32.mxu0 0.0
        %2155 = vmatmul.mubr.f32.gmra.mrb[0].mxu0 %v2022
        %v2156 = vpop.f32.mrb[0].mxu0
        %v2157 = vadd.f32 0.0, %v2156
        %v2158 = vpop.f32.mrb[0].mxu0
        %2159 = vmatprep.mubr.f32.mxu0 0.0
        %2160 = vmatmul.mubr.f32.gmra.mrb[0].mxu0 %v2025
        %v2161 = vpop.f32.mrb[0].mxu0
        %v2162 = vadd.f32 0.0, %v2161
        %v2163 = vpop.f32.mrb[0].mxu0
        %2164 = vmatprep.mubr.f32.mxu0 0.0
        %2165 = vmatmul.mubr.f32.gmra.mrb[0].mxu0 %v2028
        %v2166 = vpop.f32.mrb[0].mxu0
        %v2167 = vadd.f32 0.0, %v2166
        %v2168 = vpop.f32.mrb[0].mxu0
        %2169 = vmatprep.mubr.f32.mxu0 0.0
        %2170 = vmatmul.mubr.f32.gmra.mrb[0].mxu0 %v2031
        %v2171 = vpop.f32.mrb[0].mxu0
        %v2172 = vadd.f32 0.0, %v2171
        %v2173 = vpop.f32.mrb[0].mxu0
        %2174 = vmatprep.mubr.f32.mxu0 0.0
        %2175 = vmatmul.mubr.f32.gmra.mrb[0].mxu0 %v2034
        %v2176 = vpop.f32.mrb[0].mxu0
        %v2177 = vadd.f32 0.0, %v2176
        %v2178 = vpop.f32.mrb[0].mxu0
        %2179 = vmatprep.mubr.f32.mxu0 0.0
        %2180 = vmatmul.mubr.f32.gmra.mrb[0].mxu0 %v2037
        %v2181 = vpop.f32.mrb[0].mxu0
        %v2182 = vadd.f32 0.0, %v2181
        %v2183 = vpop.f32.mrb[0].mxu0
        %2184 = vmatprep.mubr.f32.mxu0 0.0
        %2185 = vmatmul.mubr.f32.gmra.mrb[0].mxu0 %v2040
        %v2186 = vpop.f32.mrb[0].mxu0
        %v2187 = vadd.f32 0.0, %v2186
        %v2188 = vpop.f32.mrb[0].mxu0
        %2189 = vdwg.mxu0
        %v2190 = vadd.f32 %v1976, %v2112
        %v2191 = vadd.f32 %v1977, %v2117
        %v2192 = vadd.f32 %v1978, %v2122
        %v2193 = vadd.f32 %v1979, %v2127
        %v2194 = vadd.f32 %v1980, %v2132
        %v2195 = vadd.f32 %v1981, %v2137
        %v2196 = vadd.f32 %v1982, %v2142
        %v2197 = vadd.f32 %v1983, %v2147
        %v2198 = vadd.f32 %v1984, %v2152
        %v2199 = vadd.f32 %v1985, %v2157
        %v2200 = vadd.f32 %v1986, %v2162
        %v2201 = vadd.f32 %v1987, %v2167
        %v2202 = vadd.f32 %v1988, %v2172
        %v2203 = vadd.f32 %v1989, %v2177
        %v2204 = vadd.f32 %v1990, %v2182
        %v2205 = vadd.f32 %v1991, %v2187
        %2206 = vst.msk [vmem:[#allocation3] sm:$0xff] %vm1152, %v2190
        %2207 = vst.msk [vmem:[#allocation3 + $0x8] sm:$0xff] %vm1152, %v2191
        %2208 = vst.msk [vmem:[#allocation3 + $0x10] sm:$0xff] %vm1152, %v2192
        %2209 = vst.msk [vmem:[#allocation3 + $0x18] sm:$0xff] %vm1152, %v2193
        %2210 = vst.msk [vmem:[#allocation3 + $0x20] sm:$0xff] %vm1152, %v2194
        %2211 = vst.msk [vmem:[#allocation3 + $0x28] sm:$0xff] %vm1152, %v2195
        %2212 = vst.msk [vmem:[#allocation3 + $0x30] sm:$0xff] %vm1152, %v2196
        %2213 = vst.msk [vmem:[#allocation3 + $0x38] sm:$0xff] %vm1152, %v2197
        %2214 = vst.msk [vmem:[#allocation3 + $0x40] sm:$0xff] %vm1152, %v2198
        %2215 = vst.msk [vmem:[#allocation3 + $0x48] sm:$0xff] %vm1152, %v2199
        %2216 = vst.msk [vmem:[#allocation3 + $0x50] sm:$0xff] %vm1152, %v2200
        %2217 = vst.msk [vmem:[#allocation3 + $0x58] sm:$0xff] %vm1152, %v2201
        %2218 = vst.msk [vmem:[#allocation3 + $0x60] sm:$0xff] %vm1152, %v2202
        %2219 = vst.msk [vmem:[#allocation3 + $0x68] sm:$0xff] %vm1152, %v2203
        %2220 = vst.msk [vmem:[#allocation3 + $0x70] sm:$0xff] %vm1152, %v2204
        %2221 = vst.msk [vmem:[#allocation3 + $0x78] sm:$0xff] %vm1152, %v2205
        %v2222 = vld [vmem:[%s1959 + $0x1] sm:$0xff]
        %v2223 = vld [vmem:[%s1959 + $0x9] sm:$0xff]
        %v2224 = vld [vmem:[%s1959 + $0x19] sm:$0xff]
        %v2225 = vld [vmem:[%s1959 + $0x21] sm:$0xff]
        %v2226 = vld [vmem:[%s1959 + $0x31] sm:$0xff]
        %v2227 = vld [vmem:[%s1959 + $0x39] sm:$0xff]
        %v2228 = vld [vmem:[%s1959 + $0x49] sm:$0xff]
        %v2229 = vld [vmem:[%s1959 + $0x51] sm:$0xff]
        %v2230 = vld [vmem:[%s1959 + $0x61] sm:$0xff]
        %v2231 = vld [vmem:[%s1959 + $0x69] sm:$0xff]
        %v2232 = vld [vmem:[%s1959 + $0x79] sm:$0xff]
        %v2233 = vld [vmem:[%s1959 + $0x81] sm:$0xff]
        %v2234 = vld [vmem:[%s1959 + $0x91] sm:$0xff]
        %v2235 = vld [vmem:[%s1959 + $0x99] sm:$0xff]
        %v2236 = vld [vmem:[%s1959 + $0xa9] sm:$0xff]
        %v2237 = vld [vmem:[%s1959 + $0xb1] sm:$0xff]
        %v2238 = vld [vmem:[#allocation3] sm:$0xff]
        %v2239 = vld [vmem:[#allocation3 + $0x8] sm:$0xff]
        %v2240 = vld [vmem:[#allocation3 + $0x10] sm:$0xff]
        %v2241 = vld [vmem:[#allocation3 + $0x18] sm:$0xff]
        %v2242 = vld [vmem:[#allocation3 + $0x20] sm:$0xff]
        %v2243 = vld [vmem:[#allocation3 + $0x28] sm:$0xff]
        %v2244 = vld [vmem:[#allocation3 + $0x30] sm:$0xff]
        %v2245 = vld [vmem:[#allocation3 + $0x38] sm:$0xff]
        %v2246 = vld [vmem:[#allocation3 + $0x40] sm:$0xff]
        %v2247 = vld [vmem:[#allocation3 + $0x48] sm:$0xff]
        %v2248 = vld [vmem:[#allocation3 + $0x50] sm:$0xff]
        %v2249 = vld [vmem:[#allocation3 + $0x58] sm:$0xff]
        %v2250 = vld [vmem:[#allocation3 + $0x60] sm:$0xff]
        %v2251 = vld [vmem:[#allocation3 + $0x68] sm:$0xff]
        %v2252 = vld [vmem:[#allocation3 + $0x70] sm:$0xff]
        %v2253 = vld [vmem:[#allocation3 + $0x78] sm:$0xff]
        %s2254 = scalar_lea.vmem [#allocation12], 16
        %v2255 = vld [vmem:[%s2254] sm:$0xf]
        %v2257 = vsel %vm1152, %v2222, 0
        %v2260 = vsel %vm1152, %v2223, 0
        %v2263 = vsel %vm1152, %v2224, 0
        %v2266 = vsel %vm1152, %v2225, 0
        %v2269 = vsel %vm1152, %v2226, 0
        %v2272 = vsel %vm1152, %v2227, 0
        %v2275 = vsel %vm1152, %v2228, 0
        %v2278 = vsel %vm1152, %v2229, 0
        %v2281 = vsel %vm1152, %v2230, 0
        %v2284 = vsel %vm1152, %v2231, 0
        %v2287 = vsel %vm1152, %v2232, 0
        %v2290 = vsel %vm1152, %v2233, 0
        %v2293 = vsel %vm1152, %v2234, 0
        %v2296 = vsel %vm1152, %v2235, 0
        %v2299 = vsel %vm1152, %v2236, 0
        %v2302 = vsel %vm1152, %v2237, 0
        %v2305 = vsel %vm1252, %v2255, 0
        %2307 = vmatprep.subr.mxu0 0.0
        %2308 = vmatpush1.msra.mxu0 %v2305
        %2309 = vmatprep.subr.mxu0 0.0
        %2310 = vmatpush1.msra.mxu0 0.0
        %2311 = vmatprep.subr.mxu0 0.0
        %2312 = vmatpush1.msra.mxu0 0.0
        %2313 = vmatprep.subr.mxu0 0.0
        %2314 = vmatpush1.msra.mxu0 0.0
        %2315 = vmatprep.subr.mxu0 0.0
        %2316 = vmatpush1.msra.mxu0 0.0
        %2317 = vmatprep.subr.mxu0 0.0
        %2318 = vmatpush1.msra.mxu0 0.0
        %2319 = vmatprep.subr.mxu0 0.0
        %2320 = vmatpush1.msra.mxu0 0.0
        %2321 = vmatprep.subr.mxu0 0.0
        %2322 = vmatpush1.msra.mxu0 0.0
        %2323 = vmatprep.subr.mxu0 0.0
        %2324 = vmatpush1.msra.mxu0 0.0
        %2325 = vmatprep.subr.mxu0 0.0
        %2326 = vmatpush1.msra.mxu0 0.0
        %2327 = vmatprep.subr.mxu0 0.0
        %2328 = vmatpush1.msra.mxu0 0.0
        %2329 = vmatprep.subr.mxu0 0.0
        %2330 = vmatpush1.msra.mxu0 0.0
        %2331 = vmatprep.subr.mxu0 0.0
        %2332 = vmatpush1.msra.mxu0 0.0
        %2333 = vmatprep.subr.mxu0 0.0
        %2334 = vmatpush1.msra.mxu0 0.0
        %2335 = vmatprep.subr.mxu0 0.0
        %2336 = vmatpush1.msra.mxu0 0.0
        %2337 = vmatprep.subr.mxu0 0.0
        %2338 = vmatpush1.msra.mxu0 0.0
        %2339 = vmatprep.subr.mxu0 0.0
        %2340 = vmatpush1.msra.mxu0 0.0
        %2341 = vmatprep.subr.mxu0 0.0
        %2342 = vmatpush1.msra.mxu0 0.0
        %2343 = vmatprep.subr.mxu0 0.0
        %2344 = vmatpush1.msra.mxu0 0.0
        %2345 = vmatprep.subr.mxu0 0.0
        %2346 = vmatpush1.msra.mxu0 0.0
        %2347 = vmatprep.subr.mxu0 0.0
        %2348 = vmatpush1.msra.mxu0 0.0
        %2349 = vmatprep.subr.mxu0 0.0
        %2350 = vmatpush1.msra.mxu0 0.0
        %2351 = vmatprep.subr.mxu0 0.0
        %2352 = vmatpush1.msra.mxu0 0.0
        %2353 = vmatprep.subr.mxu0 0.0
        %2354 = vmatpush1.msra.mxu0 0.0
        %2355 = vmatprep.subr.mxu0 0.0
        %2356 = vmatpush1.msra.mxu0 0.0
        %2357 = vmatprep.subr.mxu0 0.0
        %2358 = vmatpush1.msra.mxu0 0.0
        %2359 = vmatprep.subr.mxu0 0.0
        %2360 = vmatpush1.msra.mxu0 0.0
        %2361 = vmatprep.subr.mxu0 0.0
        %2362 = vmatpush1.msra.mxu0 0.0
        %2363 = vmatprep.subr.mxu0 0.0
        %2364 = vmatpush1.msra.mxu0 0.0
        %2365 = vmatprep.subr.mxu0 0.0
        %2366 = vmatpush1.msra.mxu0 0.0
        %2367 = vmatprep.subr.mxu0 0.0
        %2368 = vmatpush1.msra.mxu0 0.0
        %2369 = vmatprep.subr.mxu0 0.0
        %2370 = vmatpush1.msra.mxu0 0.0
        %2371 = vmatprep.mubr.f32.mxu0 0.0
        %2372 = vmatmul.mubr.f32.gmra.mrb[0].mxu0 %v2257
        %v2373 = vpop.f32.mrb[0].mxu0
        %v2374 = vadd.f32 0.0, %v2373
        %v2375 = vpop.f32.mrb[0].mxu0
        %2376 = vmatprep.mubr.f32.mxu0 0.0
        %2377 = vmatmul.mubr.f32.gmra.mrb[0].mxu0 %v2260
        %v2378 = vpop.f32.mrb[0].mxu0
        %v2379 = vadd.f32 0.0, %v2378
        %v2380 = vpop.f32.mrb[0].mxu0
        %2381 = vmatprep.mubr.f32.mxu0 0.0
        %2382 = vmatmul.mubr.f32.gmra.mrb[0].mxu0 %v2263
        %v2383 = vpop.f32.mrb[0].mxu0
        %v2384 = vadd.f32 0.0, %v2383
        %v2385 = vpop.f32.mrb[0].mxu0
        %2386 = vmatprep.mubr.f32.mxu0 0.0
        %2387 = vmatmul.mubr.f32.gmra.mrb[0].mxu0 %v2266
        %v2388 = vpop.f32.mrb[0].mxu0
        %v2389 = vadd.f32 0.0, %v2388
        %v2390 = vpop.f32.mrb[0].mxu0
        %2391 = vmatprep.mubr.f32.mxu0 0.0
        %2392 = vmatmul.mubr.f32.gmra.mrb[0].mxu0 %v2269
        %v2393 = vpop.f32.mrb[0].mxu0
        %v2394 = vadd.f32 0.0, %v2393
        %v2395 = vpop.f32.mrb[0].mxu0
        %2396 = vmatprep.mubr.f32.mxu0 0.0
        %2397 = vmatmul.mubr.f32.gmra.mrb[0].mxu0 %v2272
        %v2398 = vpop.f32.mrb[0].mxu0
        %v2399 = vadd.f32 0.0, %v2398
        %v2400 = vpop.f32.mrb[0].mxu0
        %2401 = vmatprep.mubr.f32.mxu0 0.0
        %2402 = vmatmul.mubr.f32.gmra.mrb[0].mxu0 %v2275
        %v2403 = vpop.f32.mrb[0].mxu0
        %v2404 = vadd.f32 0.0, %v2403
        %v2405 = vpop.f32.mrb[0].mxu0
        %2406 = vmatprep.mubr.f32.mxu0 0.0
        %2407 = vmatmul.mubr.f32.gmra.mrb[0].mxu0 %v2278
        %v2408 = vpop.f32.mrb[0].mxu0
        %v2409 = vadd.f32 0.0, %v2408
        %v2410 = vpop.f32.mrb[0].mxu0
        %2411 = vmatprep.mubr.f32.mxu0 0.0
        %2412 = vmatmul.mubr.f32.gmra.mrb[0].mxu0 %v2281
        %v2413 = vpop.f32.mrb[0].mxu0
        %v2414 = vadd.f32 0.0, %v2413
        %v2415 = vpop.f32.mrb[0].mxu0
        %2416 = vmatprep.mubr.f32.mxu0 0.0
        %2417 = vmatmul.mubr.f32.gmra.mrb[0].mxu0 %v2284
        %v2418 = vpop.f32.mrb[0].mxu0
        %v2419 = vadd.f32 0.0, %v2418
        %v2420 = vpop.f32.mrb[0].mxu0
        %2421 = vmatprep.mubr.f32.mxu0 0.0
        %2422 = vmatmul.mubr.f32.gmra.mrb[0].mxu0 %v2287
        %v2423 = vpop.f32.mrb[0].mxu0
        %v2424 = vadd.f32 0.0, %v2423
        %v2425 = vpop.f32.mrb[0].mxu0
        %2426 = vmatprep.mubr.f32.mxu0 0.0
        %2427 = vmatmul.mubr.f32.gmra.mrb[0].mxu0 %v2290
        %v2428 = vpop.f32.mrb[0].mxu0
        %v2429 = vadd.f32 0.0, %v2428
        %v2430 = vpop.f32.mrb[0].mxu0
        %2431 = vmatprep.mubr.f32.mxu0 0.0
        %2432 = vmatmul.mubr.f32.gmra.mrb[0].mxu0 %v2293
        %v2433 = vpop.f32.mrb[0].mxu0
        %v2434 = vadd.f32 0.0, %v2433
        %v2435 = vpop.f32.mrb[0].mxu0
        %2436 = vmatprep.mubr.f32.mxu0 0.0
        %2437 = vmatmul.mubr.f32.gmra.mrb[0].mxu0 %v2296
        %v2438 = vpop.f32.mrb[0].mxu0
        %v2439 = vadd.f32 0.0, %v2438
        %v2440 = vpop.f32.mrb[0].mxu0
        %2441 = vmatprep.mubr.f32.mxu0 0.0
        %2442 = vmatmul.mubr.f32.gmra.mrb[0].mxu0 %v2299
        %v2443 = vpop.f32.mrb[0].mxu0
        %v2444 = vadd.f32 0.0, %v2443
        %v2445 = vpop.f32.mrb[0].mxu0
        %2446 = vmatprep.mubr.f32.mxu0 0.0
        %2447 = vmatmul.mubr.f32.gmra.mrb[0].mxu0 %v2302
        %v2448 = vpop.f32.mrb[0].mxu0
        %v2449 = vadd.f32 0.0, %v2448
        %v2450 = vpop.f32.mrb[0].mxu0
        %2451 = vdwg.mxu0
        %v2452 = vadd.f32 %v2238, %v2374
        %v2453 = vadd.f32 %v2239, %v2379
        %v2454 = vadd.f32 %v2240, %v2384
        %v2455 = vadd.f32 %v2241, %v2389
        %v2456 = vadd.f32 %v2242, %v2394
        %v2457 = vadd.f32 %v2243, %v2399
        %v2458 = vadd.f32 %v2244, %v2404
        %v2459 = vadd.f32 %v2245, %v2409
        %v2460 = vadd.f32 %v2246, %v2414
        %v2461 = vadd.f32 %v2247, %v2419
        %v2462 = vadd.f32 %v2248, %v2424
        %v2463 = vadd.f32 %v2249, %v2429
        %v2464 = vadd.f32 %v2250, %v2434
        %v2465 = vadd.f32 %v2251, %v2439
        %v2466 = vadd.f32 %v2252, %v2444
        %v2467 = vadd.f32 %v2253, %v2449
        %2468 = vst.msk [vmem:[#allocation3] sm:$0xff] %vm1152, %v2452
        %2469 = vst.msk [vmem:[#allocation3 + $0x8] sm:$0xff] %vm1152, %v2453
        %2470 = vst.msk [vmem:[#allocation3 + $0x10] sm:$0xff] %vm1152, %v2454
        %2471 = vst.msk [vmem:[#allocation3 + $0x18] sm:$0xff] %vm1152, %v2455
        %2472 = vst.msk [vmem:[#allocation3 + $0x20] sm:$0xff] %vm1152, %v2456
        %2473 = vst.msk [vmem:[#allocation3 + $0x28] sm:$0xff] %vm1152, %v2457
        %2474 = vst.msk [vmem:[#allocation3 + $0x30] sm:$0xff] %vm1152, %v2458
        %2475 = vst.msk [vmem:[#allocation3 + $0x38] sm:$0xff] %vm1152, %v2459
        %2476 = vst.msk [vmem:[#allocation3 + $0x40] sm:$0xff] %vm1152, %v2460
        %2477 = vst.msk [vmem:[#allocation3 + $0x48] sm:$0xff] %vm1152, %v2461
        %2478 = vst.msk [vmem:[#allocation3 + $0x50] sm:$0xff] %vm1152, %v2462
        %2479 = vst.msk [vmem:[#allocation3 + $0x58] sm:$0xff] %vm1152, %v2463
        %2480 = vst.msk [vmem:[#allocation3 + $0x60] sm:$0xff] %vm1152, %v2464
        %2481 = vst.msk [vmem:[#allocation3 + $0x68] sm:$0xff] %vm1152, %v2465
        %2482 = vst.msk [vmem:[#allocation3 + $0x70] sm:$0xff] %vm1152, %v2466
        %2483 = vst.msk [vmem:[#allocation3 + $0x78] sm:$0xff] %vm1152, %v2467
        %v2484 = vld [vmem:[%s1959 + $0x2] sm:$0xff]
        %v2485 = vld [vmem:[%s1959 + $0xa] sm:$0xff]
        %v2486 = vld [vmem:[%s1959 + $0x1a] sm:$0xff]
        %v2487 = vld [vmem:[%s1959 + $0x22] sm:$0xff]
        %v2488 = vld [vmem:[%s1959 + $0x32] sm:$0xff]
        %v2489 = vld [vmem:[%s1959 + $0x3a] sm:$0xff]
        %v2490 = vld [vmem:[%s1959 + $0x4a] sm:$0xff]
        %v2491 = vld [vmem:[%s1959 + $0x52] sm:$0xff]
        %v2492 = vld [vmem:[%s1959 + $0x62] sm:$0xff]
        %v2493 = vld [vmem:[%s1959 + $0x6a] sm:$0xff]
        %v2494 = vld [vmem:[%s1959 + $0x7a] sm:$0xff]
        %v2495 = vld [vmem:[%s1959 + $0x82] sm:$0xff]
        %v2496 = vld [vmem:[%s1959 + $0x92] sm:$0xff]
        %v2497 = vld [vmem:[%s1959 + $0x9a] sm:$0xff]
        %v2498 = vld [vmem:[%s1959 + $0xaa] sm:$0xff]
        %v2499 = vld [vmem:[%s1959 + $0xb2] sm:$0xff]
        %v2500 = vld [vmem:[#allocation3] sm:$0xff]
        %v2501 = vld [vmem:[#allocation3 + $0x8] sm:$0xff]
        %v2502 = vld [vmem:[#allocation3 + $0x10] sm:$0xff]
        %v2503 = vld [vmem:[#allocation3 + $0x18] sm:$0xff]
        %v2504 = vld [vmem:[#allocation3 + $0x20] sm:$0xff]
        %v2505 = vld [vmem:[#allocation3 + $0x28] sm:$0xff]
        %v2506 = vld [vmem:[#allocation3 + $0x30] sm:$0xff]
        %v2507 = vld [vmem:[#allocation3 + $0x38] sm:$0xff]
        %v2508 = vld [vmem:[#allocation3 + $0x40] sm:$0xff]
        %v2509 = vld [vmem:[#allocation3 + $0x48] sm:$0xff]
        %v2510 = vld [vmem:[#allocation3 + $0x50] sm:$0xff]
        %v2511 = vld [vmem:[#allocation3 + $0x58] sm:$0xff]
        %v2512 = vld [vmem:[#allocation3 + $0x60] sm:$0xff]
        %v2513 = vld [vmem:[#allocation3 + $0x68] sm:$0xff]
        %v2514 = vld [vmem:[#allocation3 + $0x70] sm:$0xff]
        %v2515 = vld [vmem:[#allocation3 + $0x78] sm:$0xff]
        %s2516 = scalar_lea.vmem [#allocation12], 20
        %v2517 = vld [vmem:[%s2516] sm:$0xf]
        %v2519 = vsel %vm1152, %v2484, 0
        %v2522 = vsel %vm1152, %v2485, 0
        %v2525 = vsel %vm1152, %v2486, 0
        %v2528 = vsel %vm1152, %v2487, 0
        %v2531 = vsel %vm1152, %v2488, 0
        %v2534 = vsel %vm1152, %v2489, 0
        %v2537 = vsel %vm1152, %v2490, 0
        %v2540 = vsel %vm1152, %v2491, 0
        %v2543 = vsel %vm1152, %v2492, 0
        %v2546 = vsel %vm1152, %v2493, 0
        %v2549 = vsel %vm1152, %v2494, 0
        %v2552 = vsel %vm1152, %v2495, 0
        %v2555 = vsel %vm1152, %v2496, 0
        %v2558 = vsel %vm1152, %v2497, 0
        %v2561 = vsel %vm1152, %v2498, 0
        %v2564 = vsel %vm1152, %v2499, 0
        %v2567 = vsel %vm1252, %v2517, 0
        %2569 = vmatprep.subr.mxu0 0.0
        %2570 = vmatpush1.msra.mxu0 %v2567
        %2571 = vmatprep.subr.mxu0 0.0
        %2572 = vmatpush1.msra.mxu0 0.0
        %2573 = vmatprep.subr.mxu0 0.0
        %2574 = vmatpush1.msra.mxu0 0.0
        %2575 = vmatprep.subr.mxu0 0.0
        %2576 = vmatpush1.msra.mxu0 0.0
        %2577 = vmatprep.subr.mxu0 0.0
        %2578 = vmatpush1.msra.mxu0 0.0
        %2579 = vmatprep.subr.mxu0 0.0
        %2580 = vmatpush1.msra.mxu0 0.0
        %2581 = vmatprep.subr.mxu0 0.0
        %2582 = vmatpush1.msra.mxu0 0.0
        %2583 = vmatprep.subr.mxu0 0.0
        %2584 = vmatpush1.msra.mxu0 0.0
        %2585 = vmatprep.subr.mxu0 0.0
        %2586 = vmatpush1.msra.mxu0 0.0
        %2587 = vmatprep.subr.mxu0 0.0
        %2588 = vmatpush1.msra.mxu0 0.0
        %2589 = vmatprep.subr.mxu0 0.0
        %2590 = vmatpush1.msra.mxu0 0.0
        %2591 = vmatprep.subr.mxu0 0.0
        %2592 = vmatpush1.msra.mxu0 0.0
        %2593 = vmatprep.subr.mxu0 0.0
        %2594 = vmatpush1.msra.mxu0 0.0
        %2595 = vmatprep.subr.mxu0 0.0
        %2596 = vmatpush1.msra.mxu0 0.0
        %2597 = vmatprep.subr.mxu0 0.0
        %2598 = vmatpush1.msra.mxu0 0.0
        %2599 = vmatprep.subr.mxu0 0.0
        %2600 = vmatpush1.msra.mxu0 0.0
        %2601 = vmatprep.subr.mxu0 0.0
        %2602 = vmatpush1.msra.mxu0 0.0
        %2603 = vmatprep.subr.mxu0 0.0
        %2604 = vmatpush1.msra.mxu0 0.0
        %2605 = vmatprep.subr.mxu0 0.0
        %2606 = vmatpush1.msra.mxu0 0.0
        %2607 = vmatprep.subr.mxu0 0.0
        %2608 = vmatpush1.msra.mxu0 0.0
        %2609 = vmatprep.subr.mxu0 0.0
        %2610 = vmatpush1.msra.mxu0 0.0
        %2611 = vmatprep.subr.mxu0 0.0
        %2612 = vmatpush1.msra.mxu0 0.0
        %2613 = vmatprep.subr.mxu0 0.0
        %2614 = vmatpush1.msra.mxu0 0.0
        %2615 = vmatprep.subr.mxu0 0.0
        %2616 = vmatpush1.msra.mxu0 0.0
        %2617 = vmatprep.subr.mxu0 0.0
        %2618 = vmatpush1.msra.mxu0 0.0
        %2619 = vmatprep.subr.mxu0 0.0
        %2620 = vmatpush1.msra.mxu0 0.0
        %2621 = vmatprep.subr.mxu0 0.0
        %2622 = vmatpush1.msra.mxu0 0.0
        %2623 = vmatprep.subr.mxu0 0.0
        %2624 = vmatpush1.msra.mxu0 0.0
        %2625 = vmatprep.subr.mxu0 0.0
        %2626 = vmatpush1.msra.mxu0 0.0
        %2627 = vmatprep.subr.mxu0 0.0
        %2628 = vmatpush1.msra.mxu0 0.0
        %2629 = vmatprep.subr.mxu0 0.0
        %2630 = vmatpush1.msra.mxu0 0.0
        %2631 = vmatprep.subr.mxu0 0.0
        %2632 = vmatpush1.msra.mxu0 0.0
        %2633 = vmatprep.mubr.f32.mxu0 0.0
        %2634 = vmatmul.mubr.f32.gmra.mrb[0].mxu0 %v2519
        %v2635 = vpop.f32.mrb[0].mxu0
        %v2636 = vadd.f32 0.0, %v2635
        %v2637 = vpop.f32.mrb[0].mxu0
        %2638 = vmatprep.mubr.f32.mxu0 0.0
        %2639 = vmatmul.mubr.f32.gmra.mrb[0].mxu0 %v2522
        %v2640 = vpop.f32.mrb[0].mxu0
        %v2641 = vadd.f32 0.0, %v2640
        %v2642 = vpop.f32.mrb[0].mxu0
        %2643 = vmatprep.mubr.f32.mxu0 0.0
        %2644 = vmatmul.mubr.f32.gmra.mrb[0].mxu0 %v2525
        %v2645 = vpop.f32.mrb[0].mxu0
        %v2646 = vadd.f32 0.0, %v2645
        %v2647 = vpop.f32.mrb[0].mxu0
        %2648 = vmatprep.mubr.f32.mxu0 0.0
        %2649 = vmatmul.mubr.f32.gmra.mrb[0].mxu0 %v2528
        %v2650 = vpop.f32.mrb[0].mxu0
        %v2651 = vadd.f32 0.0, %v2650
        %v2652 = vpop.f32.mrb[0].mxu0
        %2653 = vmatprep.mubr.f32.mxu0 0.0
        %2654 = vmatmul.mubr.f32.gmra.mrb[0].mxu0 %v2531
        %v2655 = vpop.f32.mrb[0].mxu0
        %v2656 = vadd.f32 0.0, %v2655
        %v2657 = vpop.f32.mrb[0].mxu0
        %2658 = vmatprep.mubr.f32.mxu0 0.0
        %2659 = vmatmul.mubr.f32.gmra.mrb[0].mxu0 %v2534
        %v2660 = vpop.f32.mrb[0].mxu0
        %v2661 = vadd.f32 0.0, %v2660
        %v2662 = vpop.f32.mrb[0].mxu0
        %2663 = vmatprep.mubr.f32.mxu0 0.0
        %2664 = vmatmul.mubr.f32.gmra.mrb[0].mxu0 %v2537
        %v2665 = vpop.f32.mrb[0].mxu0
        %v2666 = vadd.f32 0.0, %v2665
        %v2667 = vpop.f32.mrb[0].mxu0
        %2668 = vmatprep.mubr.f32.mxu0 0.0
        %2669 = vmatmul.mubr.f32.gmra.mrb[0].mxu0 %v2540
        %v2670 = vpop.f32.mrb[0].mxu0
        %v2671 = vadd.f32 0.0, %v2670
        %v2672 = vpop.f32.mrb[0].mxu0
        %2673 = vmatprep.mubr.f32.mxu0 0.0
        %2674 = vmatmul.mubr.f32.gmra.mrb[0].mxu0 %v2543
        %v2675 = vpop.f32.mrb[0].mxu0
        %v2676 = vadd.f32 0.0, %v2675
        %v2677 = vpop.f32.mrb[0].mxu0
        %2678 = vmatprep.mubr.f32.mxu0 0.0
        %2679 = vmatmul.mubr.f32.gmra.mrb[0].mxu0 %v2546
        %v2680 = vpop.f32.mrb[0].mxu0
        %v2681 = vadd.f32 0.0, %v2680
        %v2682 = vpop.f32.mrb[0].mxu0
        %2683 = vmatprep.mubr.f32.mxu0 0.0
        %2684 = vmatmul.mubr.f32.gmra.mrb[0].mxu0 %v2549
        %v2685 = vpop.f32.mrb[0].mxu0
        %v2686 = vadd.f32 0.0, %v2685
        %v2687 = vpop.f32.mrb[0].mxu0
        %2688 = vmatprep.mubr.f32.mxu0 0.0
        %2689 = vmatmul.mubr.f32.gmra.mrb[0].mxu0 %v2552
        %v2690 = vpop.f32.mrb[0].mxu0
        %v2691 = vadd.f32 0.0, %v2690
        %v2692 = vpop.f32.mrb[0].mxu0
        %2693 = vmatprep.mubr.f32.mxu0 0.0
        %2694 = vmatmul.mubr.f32.gmra.mrb[0].mxu0 %v2555
        %v2695 = vpop.f32.mrb[0].mxu0
        %v2696 = vadd.f32 0.0, %v2695
        %v2697 = vpop.f32.mrb[0].mxu0
        %2698 = vmatprep.mubr.f32.mxu0 0.0
        %2699 = vmatmul.mubr.f32.gmra.mrb[0].mxu0 %v2558
        %v2700 = vpop.f32.mrb[0].mxu0
        %v2701 = vadd.f32 0.0, %v2700
        %v2702 = vpop.f32.mrb[0].mxu0
        %2703 = vmatprep.mubr.f32.mxu0 0.0
        %2704 = vmatmul.mubr.f32.gmra.mrb[0].mxu0 %v2561
        %v2705 = vpop.f32.mrb[0].mxu0
        %v2706 = vadd.f32 0.0, %v2705
        %v2707 = vpop.f32.mrb[0].mxu0
        %2708 = vmatprep.mubr.f32.mxu0 0.0
        %2709 = vmatmul.mubr.f32.gmra.mrb[0].mxu0 %v2564
        %v2710 = vpop.f32.mrb[0].mxu0
        %v2711 = vadd.f32 0.0, %v2710
        %v2712 = vpop.f32.mrb[0].mxu0
        %2713 = vdwg.mxu0
        %v2714 = vadd.f32 %v2500, %v2636
        %v2715 = vadd.f32 %v2501, %v2641
        %v2716 = vadd.f32 %v2502, %v2646
        %v2717 = vadd.f32 %v2503, %v2651
        %v2718 = vadd.f32 %v2504, %v2656
        %v2719 = vadd.f32 %v2505, %v2661
        %v2720 = vadd.f32 %v2506, %v2666
        %v2721 = vadd.f32 %v2507, %v2671
        %v2722 = vadd.f32 %v2508, %v2676
        %v2723 = vadd.f32 %v2509, %v2681
        %v2724 = vadd.f32 %v2510, %v2686
        %v2725 = vadd.f32 %v2511, %v2691
        %v2726 = vadd.f32 %v2512, %v2696
        %v2727 = vadd.f32 %v2513, %v2701
        %v2728 = vadd.f32 %v2514, %v2706
        %v2729 = vadd.f32 %v2515, %v2711
        %2730 = vst.msk [vmem:[#allocation3] sm:$0xff] %vm1152, %v2714
        %2731 = vst.msk [vmem:[#allocation3 + $0x8] sm:$0xff] %vm1152, %v2715
        %2732 = vst.msk [vmem:[#allocation3 + $0x10] sm:$0xff] %vm1152, %v2716
        %2733 = vst.msk [vmem:[#allocation3 + $0x18] sm:$0xff] %vm1152, %v2717
        %2734 = vst.msk [vmem:[#allocation3 + $0x20] sm:$0xff] %vm1152, %v2718
        %2735 = vst.msk [vmem:[#allocation3 + $0x28] sm:$0xff] %vm1152, %v2719
        %2736 = vst.msk [vmem:[#allocation3 + $0x30] sm:$0xff] %vm1152, %v2720
        %2737 = vst.msk [vmem:[#allocation3 + $0x38] sm:$0xff] %vm1152, %v2721
        %2738 = vst.msk [vmem:[#allocation3 + $0x40] sm:$0xff] %vm1152, %v2722
        %2739 = vst.msk [vmem:[#allocation3 + $0x48] sm:$0xff] %vm1152, %v2723
        %2740 = vst.msk [vmem:[#allocation3 + $0x50] sm:$0xff] %vm1152, %v2724
        %2741 = vst.msk [vmem:[#allocation3 + $0x58] sm:$0xff] %vm1152, %v2725
        %2742 = vst.msk [vmem:[#allocation3 + $0x60] sm:$0xff] %vm1152, %v2726
        %2743 = vst.msk [vmem:[#allocation3 + $0x68] sm:$0xff] %vm1152, %v2727
        %2744 = vst.msk [vmem:[#allocation3 + $0x70] sm:$0xff] %vm1152, %v2728
        %2745 = vst.msk [vmem:[#allocation3 + $0x78] sm:$0xff] %vm1152, %v2729
        %s2746 = sadd.s32 %s1151, 2
        %s2747 = smul.u32 %s2746, 24
        %s2748 = scalar_lea.vmem [#allocation2], %s2747
        %v2749 = vld [vmem:[%s2748] sm:$0xff]
        %v2750 = vld [vmem:[%s2748 + $0x8] sm:$0xff]
        %v2751 = vld [vmem:[%s2748 + $0x18] sm:$0xff]
        %v2752 = vld [vmem:[%s2748 + $0x20] sm:$0xff]
        %v2753 = vld [vmem:[%s2748 + $0x30] sm:$0xff]
        %v2754 = vld [vmem:[%s2748 + $0x38] sm:$0xff]
        %v2755 = vld [vmem:[%s2748 + $0x48] sm:$0xff]
        %v2756 = vld [vmem:[%s2748 + $0x50] sm:$0xff]
        %v2757 = vld [vmem:[%s2748 + $0x60] sm:$0xff]
        %v2758 = vld [vmem:[%s2748 + $0x68] sm:$0xff]
        %v2759 = vld [vmem:[%s2748 + $0x78] sm:$0xff]
        %v2760 = vld [vmem:[%s2748 + $0x80] sm:$0xff]
        %v2761 = vld [vmem:[%s2748 + $0x90] sm:$0xff]
        %v2762 = vld [vmem:[%s2748 + $0x98] sm:$0xff]
        %v2763 = vld [vmem:[%s2748 + $0xa8] sm:$0xff]
        %v2764 = vld [vmem:[%s2748 + $0xb0] sm:$0xff]
        %v2765 = vld [vmem:[#allocation3] sm:$0xff]
        %v2766 = vld [vmem:[#allocation3 + $0x8] sm:$0xff]
        %v2767 = vld [vmem:[#allocation3 + $0x10] sm:$0xff]
        %v2768 = vld [vmem:[#allocation3 + $0x18] sm:$0xff]
        %v2769 = vld [vmem:[#allocation3 + $0x20] sm:$0xff]
        %v2770 = vld [vmem:[#allocation3 + $0x28] sm:$0xff]
        %v2771 = vld [vmem:[#allocation3 + $0x30] sm:$0xff]
        %v2772 = vld [vmem:[#allocation3 + $0x38] sm:$0xff]
        %v2773 = vld [vmem:[#allocation3 + $0x40] sm:$0xff]
        %v2774 = vld [vmem:[#allocation3 + $0x48] sm:$0xff]
        %v2775 = vld [vmem:[#allocation3 + $0x50] sm:$0xff]
        %v2776 = vld [vmem:[#allocation3 + $0x58] sm:$0xff]
        %v2777 = vld [vmem:[#allocation3 + $0x60] sm:$0xff]
        %v2778 = vld [vmem:[#allocation3 + $0x68] sm:$0xff]
        %v2779 = vld [vmem:[#allocation3 + $0x70] sm:$0xff]
        %v2780 = vld [vmem:[#allocation3 + $0x78] sm:$0xff]
        %s2781 = scalar_lea.vmem [#allocation12], 24
        %v2782 = vld [vmem:[%s2781] sm:$0xf]
        %v2784 = vsel %vm1152, %v2749, 0
        %v2787 = vsel %vm1152, %v2750, 0
        %v2790 = vsel %vm1152, %v2751, 0
        %v2793 = vsel %vm1152, %v2752, 0
        %v2796 = vsel %vm1152, %v2753, 0
        %v2799 = vsel %vm1152, %v2754, 0
        %v2802 = vsel %vm1152, %v2755, 0
        %v2805 = vsel %vm1152, %v2756, 0
        %v2808 = vsel %vm1152, %v2757, 0
        %v2811 = vsel %vm1152, %v2758, 0
        %v2814 = vsel %vm1152, %v2759, 0
        %v2817 = vsel %vm1152, %v2760, 0
        %v2820 = vsel %vm1152, %v2761, 0
        %v2823 = vsel %vm1152, %v2762, 0
        %v2826 = vsel %vm1152, %v2763, 0
        %v2829 = vsel %vm1152, %v2764, 0
        %v2832 = vsel %vm1252, %v2782, 0
        %2834 = vmatprep.subr.mxu0 0.0
        %2835 = vmatpush1.msra.mxu0 %v2832
        %2836 = vmatprep.subr.mxu0 0.0
        %2837 = vmatpush1.msra.mxu0 0.0
        %2838 = vmatprep.subr.mxu0 0.0
        %2839 = vmatpush1.msra.mxu0 0.0
        %2840 = vmatprep.subr.mxu0 0.0
        %2841 = vmatpush1.msra.mxu0 0.0
        %2842 = vmatprep.subr.mxu0 0.0
        %2843 = vmatpush1.msra.mxu0 0.0
        %2844 = vmatprep.subr.mxu0 0.0
        %2845 = vmatpush1.msra.mxu0 0.0
        %2846 = vmatprep.subr.mxu0 0.0
        %2847 = vmatpush1.msra.mxu0 0.0
        %2848 = vmatprep.subr.mxu0 0.0
        %2849 = vmatpush1.msra.mxu0 0.0
        %2850 = vmatprep.subr.mxu0 0.0
        %2851 = vmatpush1.msra.mxu0 0.0
        %2852 = vmatprep.subr.mxu0 0.0
        %2853 = vmatpush1.msra.mxu0 0.0
        %2854 = vmatprep.subr.mxu0 0.0
        %2855 = vmatpush1.msra.mxu0 0.0
        %2856 = vmatprep.subr.mxu0 0.0
        %2857 = vmatpush1.msra.mxu0 0.0
        %2858 = vmatprep.subr.mxu0 0.0
        %2859 = vmatpush1.msra.mxu0 0.0
        %2860 = vmatprep.subr.mxu0 0.0
        %2861 = vmatpush1.msra.mxu0 0.0
        %2862 = vmatprep.subr.mxu0 0.0
        %2863 = vmatpush1.msra.mxu0 0.0
        %2864 = vmatprep.subr.mxu0 0.0
        %2865 = vmatpush1.msra.mxu0 0.0
        %2866 = vmatprep.subr.mxu0 0.0
        %2867 = vmatpush1.msra.mxu0 0.0
        %2868 = vmatprep.subr.mxu0 0.0
        %2869 = vmatpush1.msra.mxu0 0.0
        %2870 = vmatprep.subr.mxu0 0.0
        %2871 = vmatpush1.msra.mxu0 0.0
        %2872 = vmatprep.subr.mxu0 0.0
        %2873 = vmatpush1.msra.mxu0 0.0
        %2874 = vmatprep.subr.mxu0 0.0
        %2875 = vmatpush1.msra.mxu0 0.0
        %2876 = vmatprep.subr.mxu0 0.0
        %2877 = vmatpush1.msra.mxu0 0.0
        %2878 = vmatprep.subr.mxu0 0.0
        %2879 = vmatpush1.msra.mxu0 0.0
        %2880 = vmatprep.subr.mxu0 0.0
        %2881 = vmatpush1.msra.mxu0 0.0
        %2882 = vmatprep.subr.mxu0 0.0
        %2883 = vmatpush1.msra.mxu0 0.0
        %2884 = vmatprep.subr.mxu0 0.0
        %2885 = vmatpush1.msra.mxu0 0.0
        %2886 = vmatprep.subr.mxu0 0.0
        %2887 = vmatpush1.msra.mxu0 0.0
        %2888 = vmatprep.subr.mxu0 0.0
        %2889 = vmatpush1.msra.mxu0 0.0
        %2890 = vmatprep.subr.mxu0 0.0
        %2891 = vmatpush1.msra.mxu0 0.0
        %2892 = vmatprep.subr.mxu0 0.0
        %2893 = vmatpush1.msra.mxu0 0.0
        %2894 = vmatprep.subr.mxu0 0.0
        %2895 = vmatpush1.msra.mxu0 0.0
        %2896 = vmatprep.subr.mxu0 0.0
        %2897 = vmatpush1.msra.mxu0 0.0
        %2898 = vmatprep.mubr.f32.mxu0 0.0
        %2899 = vmatmul.mubr.f32.gmra.mrb[0].mxu0 %v2784
        %v2900 = vpop.f32.mrb[0].mxu0
        %v2901 = vadd.f32 0.0, %v2900
        %v2902 = vpop.f32.mrb[0].mxu0
        %2903 = vmatprep.mubr.f32.mxu0 0.0
        %2904 = vmatmul.mubr.f32.gmra.mrb[0].mxu0 %v2787
        %v2905 = vpop.f32.mrb[0].mxu0
        %v2906 = vadd.f32 0.0, %v2905
        %v2907 = vpop.f32.mrb[0].mxu0
        %2908 = vmatprep.mubr.f32.mxu0 0.0
        %2909 = vmatmul.mubr.f32.gmra.mrb[0].mxu0 %v2790
        %v2910 = vpop.f32.mrb[0].mxu0
        %v2911 = vadd.f32 0.0, %v2910
        %v2912 = vpop.f32.mrb[0].mxu0
        %2913 = vmatprep.mubr.f32.mxu0 0.0
        %2914 = vmatmul.mubr.f32.gmra.mrb[0].mxu0 %v2793
        %v2915 = vpop.f32.mrb[0].mxu0
        %v2916 = vadd.f32 0.0, %v2915
        %v2917 = vpop.f32.mrb[0].mxu0
        %2918 = vmatprep.mubr.f32.mxu0 0.0
        %2919 = vmatmul.mubr.f32.gmra.mrb[0].mxu0 %v2796
        %v2920 = vpop.f32.mrb[0].mxu0
        %v2921 = vadd.f32 0.0, %v2920
        %v2922 = vpop.f32.mrb[0].mxu0
        %2923 = vmatprep.mubr.f32.mxu0 0.0
        %2924 = vmatmul.mubr.f32.gmra.mrb[0].mxu0 %v2799
        %v2925 = vpop.f32.mrb[0].mxu0
        %v2926 = vadd.f32 0.0, %v2925
        %v2927 = vpop.f32.mrb[0].mxu0
        %2928 = vmatprep.mubr.f32.mxu0 0.0
        %2929 = vmatmul.mubr.f32.gmra.mrb[0].mxu0 %v2802
        %v2930 = vpop.f32.mrb[0].mxu0
        %v2931 = vadd.f32 0.0, %v2930
        %v2932 = vpop.f32.mrb[0].mxu0
        %2933 = vmatprep.mubr.f32.mxu0 0.0
        %2934 = vmatmul.mubr.f32.gmra.mrb[0].mxu0 %v2805
        %v2935 = vpop.f32.mrb[0].mxu0
        %v2936 = vadd.f32 0.0, %v2935
        %v2937 = vpop.f32.mrb[0].mxu0
        %2938 = vmatprep.mubr.f32.mxu0 0.0
        %2939 = vmatmul.mubr.f32.gmra.mrb[0].mxu0 %v2808
        %v2940 = vpop.f32.mrb[0].mxu0
        %v2941 = vadd.f32 0.0, %v2940
        %v2942 = vpop.f32.mrb[0].mxu0
        %2943 = vmatprep.mubr.f32.mxu0 0.0
        %2944 = vmatmul.mubr.f32.gmra.mrb[0].mxu0 %v2811
        %v2945 = vpop.f32.mrb[0].mxu0
        %v2946 = vadd.f32 0.0, %v2945
        %v2947 = vpop.f32.mrb[0].mxu0
        %2948 = vmatprep.mubr.f32.mxu0 0.0
        %2949 = vmatmul.mubr.f32.gmra.mrb[0].mxu0 %v2814
        %v2950 = vpop.f32.mrb[0].mxu0
        %v2951 = vadd.f32 0.0, %v2950
        %v2952 = vpop.f32.mrb[0].mxu0
        %2953 = vmatprep.mubr.f32.mxu0 0.0
        %2954 = vmatmul.mubr.f32.gmra.mrb[0].mxu0 %v2817
        %v2955 = vpop.f32.mrb[0].mxu0
        %v2956 = vadd.f32 0.0, %v2955
        %v2957 = vpop.f32.mrb[0].mxu0
        %2958 = vmatprep.mubr.f32.mxu0 0.0
        %2959 = vmatmul.mubr.f32.gmra.mrb[0].mxu0 %v2820
        %v2960 = vpop.f32.mrb[0].mxu0
        %v2961 = vadd.f32 0.0, %v2960
        %v2962 = vpop.f32.mrb[0].mxu0
        %2963 = vmatprep.mubr.f32.mxu0 0.0
        %2964 = vmatmul.mubr.f32.gmra.mrb[0].mxu0 %v2823
        %v2965 = vpop.f32.mrb[0].mxu0
        %v2966 = vadd.f32 0.0, %v2965
        %v2967 = vpop.f32.mrb[0].mxu0
        %2968 = vmatprep.mubr.f32.mxu0 0.0
        %2969 = vmatmul.mubr.f32.gmra.mrb[0].mxu0 %v2826
        %v2970 = vpop.f32.mrb[0].mxu0
        %v2971 = vadd.f32 0.0, %v2970
        %v2972 = vpop.f32.mrb[0].mxu0
        %2973 = vmatprep.mubr.f32.mxu0 0.0
        %2974 = vmatmul.mubr.f32.gmra.mrb[0].mxu0 %v2829
        %v2975 = vpop.f32.mrb[0].mxu0
        %v2976 = vadd.f32 0.0, %v2975
        %v2977 = vpop.f32.mrb[0].mxu0
        %2978 = vdwg.mxu0
        %v2979 = vadd.f32 %v2765, %v2901
        %v2980 = vadd.f32 %v2766, %v2906
        %v2981 = vadd.f32 %v2767, %v2911
        %v2982 = vadd.f32 %v2768, %v2916
        %v2983 = vadd.f32 %v2769, %v2921
        %v2984 = vadd.f32 %v2770, %v2926
        %v2985 = vadd.f32 %v2771, %v2931
        %v2986 = vadd.f32 %v2772, %v2936
        %v2987 = vadd.f32 %v2773, %v2941
        %v2988 = vadd.f32 %v2774, %v2946
        %v2989 = vadd.f32 %v2775, %v2951
        %v2990 = vadd.f32 %v2776, %v2956
        %v2991 = vadd.f32 %v2777, %v2961
        %v2992 = vadd.f32 %v2778, %v2966
        %v2993 = vadd.f32 %v2779, %v2971
        %v2994 = vadd.f32 %v2780, %v2976
        %2995 = vst.msk [vmem:[#allocation3] sm:$0xff] %vm1152, %v2979
        %2996 = vst.msk [vmem:[#allocation3 + $0x8] sm:$0xff] %vm1152, %v2980
        %2997 = vst.msk [vmem:[#allocation3 + $0x10] sm:$0xff] %vm1152, %v2981
        %2998 = vst.msk [vmem:[#allocation3 + $0x18] sm:$0xff] %vm1152, %v2982
        %2999 = vst.msk [vmem:[#allocation3 + $0x20] sm:$0xff] %vm1152, %v2983
        %3000 = vst.msk [vmem:[#allocation3 + $0x28] sm:$0xff] %vm1152, %v2984
        %3001 = vst.msk [vmem:[#allocation3 + $0x30] sm:$0xff] %vm1152, %v2985
        %3002 = vst.msk [vmem:[#allocation3 + $0x38] sm:$0xff] %vm1152, %v2986
        %3003 = vst.msk [vmem:[#allocation3 + $0x40] sm:$0xff] %vm1152, %v2987
        %3004 = vst.msk [vmem:[#allocation3 + $0x48] sm:$0xff] %vm1152, %v2988
        %3005 = vst.msk [vmem:[#allocation3 + $0x50] sm:$0xff] %vm1152, %v2989
        %3006 = vst.msk [vmem:[#allocation3 + $0x58] sm:$0xff] %vm1152, %v2990
        %3007 = vst.msk [vmem:[#allocation3 + $0x60] sm:$0xff] %vm1152, %v2991
        %3008 = vst.msk [vmem:[#allocation3 + $0x68] sm:$0xff] %vm1152, %v2992
        %3009 = vst.msk [vmem:[#allocation3 + $0x70] sm:$0xff] %vm1152, %v2993
        %3010 = vst.msk [vmem:[#allocation3 + $0x78] sm:$0xff] %vm1152, %v2994
        %v3011 = vld [vmem:[%s2748 + $0x1] sm:$0xff]
        %v3012 = vld [vmem:[%s2748 + $0x9] sm:$0xff]
        %v3013 = vld [vmem:[%s2748 + $0x19] sm:$0xff]
        %v3014 = vld [vmem:[%s2748 + $0x21] sm:$0xff]
        %v3015 = vld [vmem:[%s2748 + $0x31] sm:$0xff]
        %v3016 = vld [vmem:[%s2748 + $0x39] sm:$0xff]
        %v3017 = vld [vmem:[%s2748 + $0x49] sm:$0xff]
        %v3018 = vld [vmem:[%s2748 + $0x51] sm:$0xff]
        %v3019 = vld [vmem:[%s2748 + $0x61] sm:$0xff]
        %v3020 = vld [vmem:[%s2748 + $0x69] sm:$0xff]
        %v3021 = vld [vmem:[%s2748 + $0x79] sm:$0xff]
        %v3022 = vld [vmem:[%s2748 + $0x81] sm:$0xff]
        %v3023 = vld [vmem:[%s2748 + $0x91] sm:$0xff]
        %v3024 = vld [vmem:[%s2748 + $0x99] sm:$0xff]
        %v3025 = vld [vmem:[%s2748 + $0xa9] sm:$0xff]
        %v3026 = vld [vmem:[%s2748 + $0xb1] sm:$0xff]
        %v3027 = vld [vmem:[#allocation3] sm:$0xff]
        %v3028 = vld [vmem:[#allocation3 + $0x8] sm:$0xff]
        %v3029 = vld [vmem:[#allocation3 + $0x10] sm:$0xff]
        %v3030 = vld [vmem:[#allocation3 + $0x18] sm:$0xff]
        %v3031 = vld [vmem:[#allocation3 + $0x20] sm:$0xff]
        %v3032 = vld [vmem:[#allocation3 + $0x28] sm:$0xff]
        %v3033 = vld [vmem:[#allocation3 + $0x30] sm:$0xff]
        %v3034 = vld [vmem:[#allocation3 + $0x38] sm:$0xff]
        %v3035 = vld [vmem:[#allocation3 + $0x40] sm:$0xff]
        %v3036 = vld [vmem:[#allocation3 + $0x48] sm:$0xff]
        %v3037 = vld [vmem:[#allocation3 + $0x50] sm:$0xff]
        %v3038 = vld [vmem:[#allocation3 + $0x58] sm:$0xff]
        %v3039 = vld [vmem:[#allocation3 + $0x60] sm:$0xff]
        %v3040 = vld [vmem:[#allocation3 + $0x68] sm:$0xff]
        %v3041 = vld [vmem:[#allocation3 + $0x70] sm:$0xff]
        %v3042 = vld [vmem:[#allocation3 + $0x78] sm:$0xff]
        %s3043 = scalar_lea.vmem [#allocation12], 28
        %v3044 = vld [vmem:[%s3043] sm:$0xf]
        %v3046 = vsel %vm1152, %v3011, 0
        %v3049 = vsel %vm1152, %v3012, 0
        %v3052 = vsel %vm1152, %v3013, 0
        %v3055 = vsel %vm1152, %v3014, 0
        %v3058 = vsel %vm1152, %v3015, 0
        %v3061 = vsel %vm1152, %v3016, 0
        %v3064 = vsel %vm1152, %v3017, 0
        %v3067 = vsel %vm1152, %v3018, 0
        %v3070 = vsel %vm1152, %v3019, 0
        %v3073 = vsel %vm1152, %v3020, 0
        %v3076 = vsel %vm1152, %v3021, 0
        %v3079 = vsel %vm1152, %v3022, 0
        %v3082 = vsel %vm1152, %v3023, 0
        %v3085 = vsel %vm1152, %v3024, 0
        %v3088 = vsel %vm1152, %v3025, 0
        %v3091 = vsel %vm1152, %v3026, 0
        %v3094 = vsel %vm1252, %v3044, 0
        %3096 = vmatprep.subr.mxu0 0.0
        %3097 = vmatpush1.msra.mxu0 %v3094
        %3098 = vmatprep.subr.mxu0 0.0
        %3099 = vmatpush1.msra.mxu0 0.0
        %3100 = vmatprep.subr.mxu0 0.0
        %3101 = vmatpush1.msra.mxu0 0.0
        %3102 = vmatprep.subr.mxu0 0.0
        %3103 = vmatpush1.msra.mxu0 0.0
        %3104 = vmatprep.subr.mxu0 0.0
        %3105 = vmatpush1.msra.mxu0 0.0
        %3106 = vmatprep.subr.mxu0 0.0
        %3107 = vmatpush1.msra.mxu0 0.0
        %3108 = vmatprep.subr.mxu0 0.0
        %3109 = vmatpush1.msra.mxu0 0.0
        %3110 = vmatprep.subr.mxu0 0.0
        %3111 = vmatpush1.msra.mxu0 0.0
        %3112 = vmatprep.subr.mxu0 0.0
        %3113 = vmatpush1.msra.mxu0 0.0
        %3114 = vmatprep.subr.mxu0 0.0
        %3115 = vmatpush1.msra.mxu0 0.0
        %3116 = vmatprep.subr.mxu0 0.0
        %3117 = vmatpush1.msra.mxu0 0.0
        %3118 = vmatprep.subr.mxu0 0.0
        %3119 = vmatpush1.msra.mxu0 0.0
        %3120 = vmatprep.subr.mxu0 0.0
        %3121 = vmatpush1.msra.mxu0 0.0
        %3122 = vmatprep.subr.mxu0 0.0
        %3123 = vmatpush1.msra.mxu0 0.0
        %3124 = vmatprep.subr.mxu0 0.0
        %3125 = vmatpush1.msra.mxu0 0.0
        %3126 = vmatprep.subr.mxu0 0.0
        %3127 = vmatpush1.msra.mxu0 0.0
        %3128 = vmatprep.subr.mxu0 0.0
        %3129 = vmatpush1.msra.mxu0 0.0
        %3130 = vmatprep.subr.mxu0 0.0
        %3131 = vmatpush1.msra.mxu0 0.0
        %3132 = vmatprep.subr.mxu0 0.0
        %3133 = vmatpush1.msra.mxu0 0.0
        %3134 = vmatprep.subr.mxu0 0.0
        %3135 = vmatpush1.msra.mxu0 0.0
        %3136 = vmatprep.subr.mxu0 0.0
        %3137 = vmatpush1.msra.mxu0 0.0
        %3138 = vmatprep.subr.mxu0 0.0
        %3139 = vmatpush1.msra.mxu0 0.0
        %3140 = vmatprep.subr.mxu0 0.0
        %3141 = vmatpush1.msra.mxu0 0.0
        %3142 = vmatprep.subr.mxu0 0.0
        %3143 = vmatpush1.msra.mxu0 0.0
        %3144 = vmatprep.subr.mxu0 0.0
        %3145 = vmatpush1.msra.mxu0 0.0
        %3146 = vmatprep.subr.mxu0 0.0
        %3147 = vmatpush1.msra.mxu0 0.0
        %3148 = vmatprep.subr.mxu0 0.0
        %3149 = vmatpush1.msra.mxu0 0.0
        %3150 = vmatprep.subr.mxu0 0.0
        %3151 = vmatpush1.msra.mxu0 0.0
        %3152 = vmatprep.subr.mxu0 0.0
        %3153 = vmatpush1.msra.mxu0 0.0
        %3154 = vmatprep.subr.mxu0 0.0
        %3155 = vmatpush1.msra.mxu0 0.0
        %3156 = vmatprep.subr.mxu0 0.0
        %3157 = vmatpush1.msra.mxu0 0.0
        %3158 = vmatprep.subr.mxu0 0.0
        %3159 = vmatpush1.msra.mxu0 0.0
        %3160 = vmatprep.mubr.f32.mxu0 0.0
        %3161 = vmatmul.mubr.f32.gmra.mrb[0].mxu0 %v3046
        %v3162 = vpop.f32.mrb[0].mxu0
        %v3163 = vadd.f32 0.0, %v3162
        %v3164 = vpop.f32.mrb[0].mxu0
        %3165 = vmatprep.mubr.f32.mxu0 0.0
        %3166 = vmatmul.mubr.f32.gmra.mrb[0].mxu0 %v3049
        %v3167 = vpop.f32.mrb[0].mxu0
        %v3168 = vadd.f32 0.0, %v3167
        %v3169 = vpop.f32.mrb[0].mxu0
        %3170 = vmatprep.mubr.f32.mxu0 0.0
        %3171 = vmatmul.mubr.f32.gmra.mrb[0].mxu0 %v3052
        %v3172 = vpop.f32.mrb[0].mxu0
        %v3173 = vadd.f32 0.0, %v3172
        %v3174 = vpop.f32.mrb[0].mxu0
        %3175 = vmatprep.mubr.f32.mxu0 0.0
        %3176 = vmatmul.mubr.f32.gmra.mrb[0].mxu0 %v3055
        %v3177 = vpop.f32.mrb[0].mxu0
        %v3178 = vadd.f32 0.0, %v3177
        %v3179 = vpop.f32.mrb[0].mxu0
        %3180 = vmatprep.mubr.f32.mxu0 0.0
        %3181 = vmatmul.mubr.f32.gmra.mrb[0].mxu0 %v3058
        %v3182 = vpop.f32.mrb[0].mxu0
        %v3183 = vadd.f32 0.0, %v3182
        %v3184 = vpop.f32.mrb[0].mxu0
        %3185 = vmatprep.mubr.f32.mxu0 0.0
        %3186 = vmatmul.mubr.f32.gmra.mrb[0].mxu0 %v3061
        %v3187 = vpop.f32.mrb[0].mxu0
        %v3188 = vadd.f32 0.0, %v3187
        %v3189 = vpop.f32.mrb[0].mxu0
        %3190 = vmatprep.mubr.f32.mxu0 0.0
        %3191 = vmatmul.mubr.f32.gmra.mrb[0].mxu0 %v3064
        %v3192 = vpop.f32.mrb[0].mxu0
        %v3193 = vadd.f32 0.0, %v3192
        %v3194 = vpop.f32.mrb[0].mxu0
        %3195 = vmatprep.mubr.f32.mxu0 0.0
        %3196 = vmatmul.mubr.f32.gmra.mrb[0].mxu0 %v3067
        %v3197 = vpop.f32.mrb[0].mxu0
        %v3198 = vadd.f32 0.0, %v3197
        %v3199 = vpop.f32.mrb[0].mxu0
        %3200 = vmatprep.mubr.f32.mxu0 0.0
        %3201 = vmatmul.mubr.f32.gmra.mrb[0].mxu0 %v3070
        %v3202 = vpop.f32.mrb[0].mxu0
        %v3203 = vadd.f32 0.0, %v3202
        %v3204 = vpop.f32.mrb[0].mxu0
        %3205 = vmatprep.mubr.f32.mxu0 0.0
        %3206 = vmatmul.mubr.f32.gmra.mrb[0].mxu0 %v3073
        %v3207 = vpop.f32.mrb[0].mxu0
        %v3208 = vadd.f32 0.0, %v3207
        %v3209 = vpop.f32.mrb[0].mxu0
        %3210 = vmatprep.mubr.f32.mxu0 0.0
        %3211 = vmatmul.mubr.f32.gmra.mrb[0].mxu0 %v3076
        %v3212 = vpop.f32.mrb[0].mxu0
        %v3213 = vadd.f32 0.0, %v3212
        %v3214 = vpop.f32.mrb[0].mxu0
        %3215 = vmatprep.mubr.f32.mxu0 0.0
        %3216 = vmatmul.mubr.f32.gmra.mrb[0].mxu0 %v3079
        %v3217 = vpop.f32.mrb[0].mxu0
        %v3218 = vadd.f32 0.0, %v3217
        %v3219 = vpop.f32.mrb[0].mxu0
        %3220 = vmatprep.mubr.f32.mxu0 0.0
        %3221 = vmatmul.mubr.f32.gmra.mrb[0].mxu0 %v3082
        %v3222 = vpop.f32.mrb[0].mxu0
        %v3223 = vadd.f32 0.0, %v3222
        %v3224 = vpop.f32.mrb[0].mxu0
        %3225 = vmatprep.mubr.f32.mxu0 0.0
        %3226 = vmatmul.mubr.f32.gmra.mrb[0].mxu0 %v3085
        %v3227 = vpop.f32.mrb[0].mxu0
        %v3228 = vadd.f32 0.0, %v3227
        %v3229 = vpop.f32.mrb[0].mxu0
        %3230 = vmatprep.mubr.f32.mxu0 0.0
        %3231 = vmatmul.mubr.f32.gmra.mrb[0].mxu0 %v3088
        %v3232 = vpop.f32.mrb[0].mxu0
        %v3233 = vadd.f32 0.0, %v3232
        %v3234 = vpop.f32.mrb[0].mxu0
        %3235 = vmatprep.mubr.f32.mxu0 0.0
        %3236 = vmatmul.mubr.f32.gmra.mrb[0].mxu0 %v3091
        %v3237 = vpop.f32.mrb[0].mxu0
        %v3238 = vadd.f32 0.0, %v3237
        %v3239 = vpop.f32.mrb[0].mxu0
        %3240 = vdwg.mxu0
        %v3241 = vadd.f32 %v3027, %v3163
        %v3242 = vadd.f32 %v3028, %v3168
        %v3243 = vadd.f32 %v3029, %v3173
        %v3244 = vadd.f32 %v3030, %v3178
        %v3245 = vadd.f32 %v3031, %v3183
        %v3246 = vadd.f32 %v3032, %v3188
        %v3247 = vadd.f32 %v3033, %v3193
        %v3248 = vadd.f32 %v3034, %v3198
        %v3249 = vadd.f32 %v3035, %v3203
        %v3250 = vadd.f32 %v3036, %v3208
        %v3251 = vadd.f32 %v3037, %v3213
        %v3252 = vadd.f32 %v3038, %v3218
        %v3253 = vadd.f32 %v3039, %v3223
        %v3254 = vadd.f32 %v3040, %v3228
        %v3255 = vadd.f32 %v3041, %v3233
        %v3256 = vadd.f32 %v3042, %v3238
        %3257 = vst.msk [vmem:[#allocation3] sm:$0xff] %vm1152, %v3241
        %3258 = vst.msk [vmem:[#allocation3 + $0x8] sm:$0xff] %vm1152, %v3242
        %3259 = vst.msk [vmem:[#allocation3 + $0x10] sm:$0xff] %vm1152, %v3243
        %3260 = vst.msk [vmem:[#allocation3 + $0x18] sm:$0xff] %vm1152, %v3244
        %3261 = vst.msk [vmem:[#allocation3 + $0x20] sm:$0xff] %vm1152, %v3245
        %3262 = vst.msk [vmem:[#allocation3 + $0x28] sm:$0xff] %vm1152, %v3246
        %3263 = vst.msk [vmem:[#allocation3 + $0x30] sm:$0xff] %vm1152, %v3247
        %3264 = vst.msk [vmem:[#allocation3 + $0x38] sm:$0xff] %vm1152, %v3248
        %3265 = vst.msk [vmem:[#allocation3 + $0x40] sm:$0xff] %vm1152, %v3249
        %3266 = vst.msk [vmem:[#allocation3 + $0x48] sm:$0xff] %vm1152, %v3250
        %3267 = vst.msk [vmem:[#allocation3 + $0x50] sm:$0xff] %vm1152, %v3251
        %3268 = vst.msk [vmem:[#allocation3 + $0x58] sm:$0xff] %vm1152, %v3252
        %3269 = vst.msk [vmem:[#allocation3 + $0x60] sm:$0xff] %vm1152, %v3253
        %3270 = vst.msk [vmem:[#allocation3 + $0x68] sm:$0xff] %vm1152, %v3254
        %3271 = vst.msk [vmem:[#allocation3 + $0x70] sm:$0xff] %vm1152, %v3255
        %3272 = vst.msk [vmem:[#allocation3 + $0x78] sm:$0xff] %vm1152, %v3256
        %v3273 = vld [vmem:[%s2748 + $0x2] sm:$0xff]
        %v3274 = vld [vmem:[%s2748 + $0xa] sm:$0xff]
        %v3275 = vld [vmem:[%s2748 + $0x1a] sm:$0xff]
        %v3276 = vld [vmem:[%s2748 + $0x22] sm:$0xff]
        %v3277 = vld [vmem:[%s2748 + $0x32] sm:$0xff]
        %v3278 = vld [vmem:[%s2748 + $0x3a] sm:$0xff]
        %v3279 = vld [vmem:[%s2748 + $0x4a] sm:$0xff]
        %v3280 = vld [vmem:[%s2748 + $0x52] sm:$0xff]
        %v3281 = vld [vmem:[%s2748 + $0x62] sm:$0xff]
        %v3282 = vld [vmem:[%s2748 + $0x6a] sm:$0xff]
        %v3283 = vld [vmem:[%s2748 + $0x7a] sm:$0xff]
        %v3284 = vld [vmem:[%s2748 + $0x82] sm:$0xff]
        %v3285 = vld [vmem:[%s2748 + $0x92] sm:$0xff]
        %v3286 = vld [vmem:[%s2748 + $0x9a] sm:$0xff]
        %v3287 = vld [vmem:[%s2748 + $0xaa] sm:$0xff]
        %v3288 = vld [vmem:[%s2748 + $0xb2] sm:$0xff]
        %v3289 = vld [vmem:[#allocation3] sm:$0xff]
        %v3290 = vld [vmem:[#allocation3 + $0x8] sm:$0xff]
        %v3291 = vld [vmem:[#allocation3 + $0x10] sm:$0xff]
        %v3292 = vld [vmem:[#allocation3 + $0x18] sm:$0xff]
        %v3293 = vld [vmem:[#allocation3 + $0x20] sm:$0xff]
        %v3294 = vld [vmem:[#allocation3 + $0x28] sm:$0xff]
        %v3295 = vld [vmem:[#allocation3 + $0x30] sm:$0xff]
        %v3296 = vld [vmem:[#allocation3 + $0x38] sm:$0xff]
        %v3297 = vld [vmem:[#allocation3 + $0x40] sm:$0xff]
        %v3298 = vld [vmem:[#allocation3 + $0x48] sm:$0xff]
        %v3299 = vld [vmem:[#allocation3 + $0x50] sm:$0xff]
        %v3300 = vld [vmem:[#allocation3 + $0x58] sm:$0xff]
        %v3301 = vld [vmem:[#allocation3 + $0x60] sm:$0xff]
        %v3302 = vld [vmem:[#allocation3 + $0x68] sm:$0xff]
        %v3303 = vld [vmem:[#allocation3 + $0x70] sm:$0xff]
        %v3304 = vld [vmem:[#allocation3 + $0x78] sm:$0xff]
        %s3305 = scalar_lea.vmem [#allocation12], 32
        %v3306 = vld [vmem:[%s3305] sm:$0xf]
        %v3308 = vsel %vm1152, %v3273, 0
        %v3311 = vsel %vm1152, %v3274, 0
        %v3314 = vsel %vm1152, %v3275, 0
        %v3317 = vsel %vm1152, %v3276, 0
        %v3320 = vsel %vm1152, %v3277, 0
        %v3323 = vsel %vm1152, %v3278, 0
        %v3326 = vsel %vm1152, %v3279, 0
        %v3329 = vsel %vm1152, %v3280, 0
        %v3332 = vsel %vm1152, %v3281, 0
        %v3335 = vsel %vm1152, %v3282, 0
        %v3338 = vsel %vm1152, %v3283, 0
        %v3341 = vsel %vm1152, %v3284, 0
        %v3344 = vsel %vm1152, %v3285, 0
        %v3347 = vsel %vm1152, %v3286, 0
        %v3350 = vsel %vm1152, %v3287, 0
        %v3353 = vsel %vm1152, %v3288, 0
        %v3356 = vsel %vm1252, %v3306, 0
        %3358 = vmatprep.subr.mxu0 0.0
        %3359 = vmatpush1.msra.mxu0 %v3356
        %3360 = vmatprep.subr.mxu0 0.0
        %3361 = vmatpush1.msra.mxu0 0.0
        %3362 = vmatprep.subr.mxu0 0.0
        %3363 = vmatpush1.msra.mxu0 0.0
        %3364 = vmatprep.subr.mxu0 0.0
        %3365 = vmatpush1.msra.mxu0 0.0
        %3366 = vmatprep.subr.mxu0 0.0
        %3367 = vmatpush1.msra.mxu0 0.0
        %3368 = vmatprep.subr.mxu0 0.0
        %3369 = vmatpush1.msra.mxu0 0.0
        %3370 = vmatprep.subr.mxu0 0.0
        %3371 = vmatpush1.msra.mxu0 0.0
        %3372 = vmatprep.subr.mxu0 0.0
        %3373 = vmatpush1.msra.mxu0 0.0
        %3374 = vmatprep.subr.mxu0 0.0
        %3375 = vmatpush1.msra.mxu0 0.0
        %3376 = vmatprep.subr.mxu0 0.0
        %3377 = vmatpush1.msra.mxu0 0.0
        %3378 = vmatprep.subr.mxu0 0.0
        %3379 = vmatpush1.msra.mxu0 0.0
        %3380 = vmatprep.subr.mxu0 0.0
        %3381 = vmatpush1.msra.mxu0 0.0
        %3382 = vmatprep.subr.mxu0 0.0
        %3383 = vmatpush1.msra.mxu0 0.0
        %3384 = vmatprep.subr.mxu0 0.0
        %3385 = vmatpush1.msra.mxu0 0.0
        %3386 = vmatprep.subr.mxu0 0.0
        %3387 = vmatpush1.msra.mxu0 0.0
        %3388 = vmatprep.subr.mxu0 0.0
        %3389 = vmatpush1.msra.mxu0 0.0
        %3390 = vmatprep.subr.mxu0 0.0
        %3391 = vmatpush1.msra.mxu0 0.0
        %3392 = vmatprep.subr.mxu0 0.0
        %3393 = vmatpush1.msra.mxu0 0.0
        %3394 = vmatprep.subr.mxu0 0.0
        %3395 = vmatpush1.msra.mxu0 0.0
        %3396 = vmatprep.subr.mxu0 0.0
        %3397 = vmatpush1.msra.mxu0 0.0
        %3398 = vmatprep.subr.mxu0 0.0
        %3399 = vmatpush1.msra.mxu0 0.0
        %3400 = vmatprep.subr.mxu0 0.0
        %3401 = vmatpush1.msra.mxu0 0.0
        %3402 = vmatprep.subr.mxu0 0.0
        %3403 = vmatpush1.msra.mxu0 0.0
        %3404 = vmatprep.subr.mxu0 0.0
        %3405 = vmatpush1.msra.mxu0 0.0
        %3406 = vmatprep.subr.mxu0 0.0
        %3407 = vmatpush1.msra.mxu0 0.0
        %3408 = vmatprep.subr.mxu0 0.0
        %3409 = vmatpush1.msra.mxu0 0.0
        %3410 = vmatprep.subr.mxu0 0.0
        %3411 = vmatpush1.msra.mxu0 0.0
        %3412 = vmatprep.subr.mxu0 0.0
        %3413 = vmatpush1.msra.mxu0 0.0
        %3414 = vmatprep.subr.mxu0 0.0
        %3415 = vmatpush1.msra.mxu0 0.0
        %3416 = vmatprep.subr.mxu0 0.0
        %3417 = vmatpush1.msra.mxu0 0.0
        %3418 = vmatprep.subr.mxu0 0.0
        %3419 = vmatpush1.msra.mxu0 0.0
        %3420 = vmatprep.subr.mxu0 0.0
        %3421 = vmatpush1.msra.mxu0 0.0
        %3422 = vmatprep.mubr.f32.mxu0 0.0
        %3423 = vmatmul.mubr.f32.gmra.mrb[0].mxu0 %v3308
        %v3424 = vpop.f32.mrb[0].mxu0
        %v3425 = vadd.f32 0.0, %v3424
        %v3426 = vpop.f32.mrb[0].mxu0
        %3427 = vmatprep.mubr.f32.mxu0 0.0
        %3428 = vmatmul.mubr.f32.gmra.mrb[0].mxu0 %v3311
        %v3429 = vpop.f32.mrb[0].mxu0
        %v3430 = vadd.f32 0.0, %v3429
        %v3431 = vpop.f32.mrb[0].mxu0
        %3432 = vmatprep.mubr.f32.mxu0 0.0
        %3433 = vmatmul.mubr.f32.gmra.mrb[0].mxu0 %v3314
        %v3434 = vpop.f32.mrb[0].mxu0
        %v3435 = vadd.f32 0.0, %v3434
        %v3436 = vpop.f32.mrb[0].mxu0
        %3437 = vmatprep.mubr.f32.mxu0 0.0
        %3438 = vmatmul.mubr.f32.gmra.mrb[0].mxu0 %v3317
        %v3439 = vpop.f32.mrb[0].mxu0
        %v3440 = vadd.f32 0.0, %v3439
        %v3441 = vpop.f32.mrb[0].mxu0
        %3442 = vmatprep.mubr.f32.mxu0 0.0
        %3443 = vmatmul.mubr.f32.gmra.mrb[0].mxu0 %v3320
        %v3444 = vpop.f32.mrb[0].mxu0
        %v3445 = vadd.f32 0.0, %v3444
        %v3446 = vpop.f32.mrb[0].mxu0
        %3447 = vmatprep.mubr.f32.mxu0 0.0
        %3448 = vmatmul.mubr.f32.gmra.mrb[0].mxu0 %v3323
        %v3449 = vpop.f32.mrb[0].mxu0
        %v3450 = vadd.f32 0.0, %v3449
        %v3451 = vpop.f32.mrb[0].mxu0
        %3452 = vmatprep.mubr.f32.mxu0 0.0
        %3453 = vmatmul.mubr.f32.gmra.mrb[0].mxu0 %v3326
        %v3454 = vpop.f32.mrb[0].mxu0
        %v3455 = vadd.f32 0.0, %v3454
        %v3456 = vpop.f32.mrb[0].mxu0
        %3457 = vmatprep.mubr.f32.mxu0 0.0
        %3458 = vmatmul.mubr.f32.gmra.mrb[0].mxu0 %v3329
        %v3459 = vpop.f32.mrb[0].mxu0
        %v3460 = vadd.f32 0.0, %v3459
        %v3461 = vpop.f32.mrb[0].mxu0
        %3462 = vmatprep.mubr.f32.mxu0 0.0
        %3463 = vmatmul.mubr.f32.gmra.mrb[0].mxu0 %v3332
        %v3464 = vpop.f32.mrb[0].mxu0
        %v3465 = vadd.f32 0.0, %v3464
        %v3466 = vpop.f32.mrb[0].mxu0
        %3467 = vmatprep.mubr.f32.mxu0 0.0
        %3468 = vmatmul.mubr.f32.gmra.mrb[0].mxu0 %v3335
        %v3469 = vpop.f32.mrb[0].mxu0
        %v3470 = vadd.f32 0.0, %v3469
        %v3471 = vpop.f32.mrb[0].mxu0
        %3472 = vmatprep.mubr.f32.mxu0 0.0
        %3473 = vmatmul.mubr.f32.gmra.mrb[0].mxu0 %v3338
        %v3474 = vpop.f32.mrb[0].mxu0
        %v3475 = vadd.f32 0.0, %v3474
        %v3476 = vpop.f32.mrb[0].mxu0
        %3477 = vmatprep.mubr.f32.mxu0 0.0
        %3478 = vmatmul.mubr.f32.gmra.mrb[0].mxu0 %v3341
        %v3479 = vpop.f32.mrb[0].mxu0
        %v3480 = vadd.f32 0.0, %v3479
        %v3481 = vpop.f32.mrb[0].mxu0
        %3482 = vmatprep.mubr.f32.mxu0 0.0
        %3483 = vmatmul.mubr.f32.gmra.mrb[0].mxu0 %v3344
        %v3484 = vpop.f32.mrb[0].mxu0
        %v3485 = vadd.f32 0.0, %v3484
        %v3486 = vpop.f32.mrb[0].mxu0
        %3487 = vmatprep.mubr.f32.mxu0 0.0
        %3488 = vmatmul.mubr.f32.gmra.mrb[0].mxu0 %v3347
        %v3489 = vpop.f32.mrb[0].mxu0
        %v3490 = vadd.f32 0.0, %v3489
        %v3491 = vpop.f32.mrb[0].mxu0
        %3492 = vmatprep.mubr.f32.mxu0 0.0
        %3493 = vmatmul.mubr.f32.gmra.mrb[0].mxu0 %v3350
        %v3494 = vpop.f32.mrb[0].mxu0
        %v3495 = vadd.f32 0.0, %v3494
        %v3496 = vpop.f32.mrb[0].mxu0
        %3497 = vmatprep.mubr.f32.mxu0 0.0
        %3498 = vmatmul.mubr.f32.gmra.mrb[0].mxu0 %v3353
        %v3499 = vpop.f32.mrb[0].mxu0
        %v3500 = vadd.f32 0.0, %v3499
        %v3501 = vpop.f32.mrb[0].mxu0
        %3502 = vdwg.mxu0
        %v3503 = vadd.f32 %v3289, %v3425
        %v3504 = vadd.f32 %v3290, %v3430
        %v3505 = vadd.f32 %v3291, %v3435
        %v3506 = vadd.f32 %v3292, %v3440
        %v3507 = vadd.f32 %v3293, %v3445
        %v3508 = vadd.f32 %v3294, %v3450
        %v3509 = vadd.f32 %v3295, %v3455
        %v3510 = vadd.f32 %v3296, %v3460
        %v3511 = vadd.f32 %v3297, %v3465
        %v3512 = vadd.f32 %v3298, %v3470
        %v3513 = vadd.f32 %v3299, %v3475
        %v3514 = vadd.f32 %v3300, %v3480
        %v3515 = vadd.f32 %v3301, %v3485
        %v3516 = vadd.f32 %v3302, %v3490
        %v3517 = vadd.f32 %v3303, %v3495
        %v3518 = vadd.f32 %v3304, %v3500
        %3519 = vst.msk [vmem:[#allocation3] sm:$0xff] %vm1152, %v3503
        %3520 = vst.msk [vmem:[#allocation3 + $0x8] sm:$0xff] %vm1152, %v3504
        %3521 = vst.msk [vmem:[#allocation3 + $0x10] sm:$0xff] %vm1152, %v3505
        %3522 = vst.msk [vmem:[#allocation3 + $0x18] sm:$0xff] %vm1152, %v3506
        %3523 = vst.msk [vmem:[#allocation3 + $0x20] sm:$0xff] %vm1152, %v3507
        %3524 = vst.msk [vmem:[#allocation3 + $0x28] sm:$0xff] %vm1152, %v3508
        %3525 = vst.msk [vmem:[#allocation3 + $0x30] sm:$0xff] %vm1152, %v3509
        %3526 = vst.msk [vmem:[#allocation3 + $0x38] sm:$0xff] %vm1152, %v3510
        %3527 = vst.msk [vmem:[#allocation3 + $0x40] sm:$0xff] %vm1152, %v3511
        %3528 = vst.msk [vmem:[#allocation3 + $0x48] sm:$0xff] %vm1152, %v3512
        %3529 = vst.msk [vmem:[#allocation3 + $0x50] sm:$0xff] %vm1152, %v3513
        %3530 = vst.msk [vmem:[#allocation3 + $0x58] sm:$0xff] %vm1152, %v3514
        %3531 = vst.msk [vmem:[#allocation3 + $0x60] sm:$0xff] %vm1152, %v3515
        %3532 = vst.msk [vmem:[#allocation3 + $0x68] sm:$0xff] %vm1152, %v3516
        %3533 = vst.msk [vmem:[#allocation3 + $0x70] sm:$0xff] %vm1152, %v3517
        %3534 = vst.msk [vmem:[#allocation3 + $0x78] sm:$0xff] %vm1152, %v3518
        %v3535 = vld [vmem:[#allocation3] sm:$0xff]
        %v3536 = vld [vmem:[#allocation3 + $0x8] sm:$0xff]
        %v3537 = vld [vmem:[#allocation3 + $0x10] sm:$0xff]
        %v3538 = vld [vmem:[#allocation3 + $0x18] sm:$0xff]
        %v3539 = vld [vmem:[#allocation3 + $0x20] sm:$0xff]
        %v3540 = vld [vmem:[#allocation3 + $0x28] sm:$0xff]
        %v3541 = vld [vmem:[#allocation3 + $0x30] sm:$0xff]
        %v3542 = vld [vmem:[#allocation3 + $0x38] sm:$0xff]
        %v3543 = vld [vmem:[#allocation3 + $0x40] sm:$0xff]
        %v3544 = vld [vmem:[#allocation3 + $0x48] sm:$0xff]
        %v3545 = vld [vmem:[#allocation3 + $0x50] sm:$0xff]
        %v3546 = vld [vmem:[#allocation3 + $0x58] sm:$0xff]
        %v3547 = vld [vmem:[#allocation3 + $0x60] sm:$0xff]
        %v3548 = vld [vmem:[#allocation3 + $0x68] sm:$0xff]
        %v3549 = vld [vmem:[#allocation3 + $0x70] sm:$0xff]
        %v3550 = vld [vmem:[#allocation3 + $0x78] sm:$0xff]
        %v3551 = vld [vmem:[#allocation13] sm:$0x1]
        %v3553 = vlaneseq
        %v3554 = vshrl.u32 %v3553, 7
        %v3555 = vsub.s32 0, %v3554
        %v3556 = vrot.slane %v3551, %v3555
        %v3558 = vmul.f32 %v3535, %v3556
        %v3559 = vmul.f32 %v3536, %v3556
        %v3560 = vmul.f32 %v3537, %v3556
        %v3561 = vmul.f32 %v3538, %v3556
        %v3562 = vmul.f32 %v3539, %v3556
        %v3563 = vmul.f32 %v3540, %v3556
        %v3564 = vmul.f32 %v3541, %v3556
        %v3565 = vmul.f32 %v3542, %v3556
        %v3566 = vmul.f32 %v3543, %v3556
        %v3567 = vmul.f32 %v3544, %v3556
        %v3568 = vmul.f32 %v3545, %v3556
        %v3569 = vmul.f32 %v3546, %v3556
        %v3570 = vmul.f32 %v3547, %v3556
        %v3571 = vmul.f32 %v3548, %v3556
        %v3572 = vmul.f32 %v3549, %v3556
        %v3573 = vmul.f32 %v3550, %v3556
        %v3574 = vld [vmem:[#allocation15] sm:$0x1]
        %v3576 = vlaneseq
        %v3577 = vshrl.u32 %v3576, 7
        %v3578 = vsub.s32 0, %v3577
        %v3579 = vrot.slane %v3574, %v3578
        %v3581 = vadd.f32 %v3558, %v3579
        %v3582 = vadd.f32 %v3559, %v3579
        %v3583 = vadd.f32 %v3560, %v3579
        %v3584 = vadd.f32 %v3561, %v3579
        %v3585 = vadd.f32 %v3562, %v3579
        %v3586 = vadd.f32 %v3563, %v3579
        %v3587 = vadd.f32 %v3564, %v3579
        %v3588 = vadd.f32 %v3565, %v3579
        %v3589 = vadd.f32 %v3566, %v3579
        %v3590 = vadd.f32 %v3567, %v3579
        %v3591 = vadd.f32 %v3568, %v3579
        %v3592 = vadd.f32 %v3569, %v3579
        %v3593 = vadd.f32 %v3570, %v3579
        %v3594 = vadd.f32 %v3571, %v3579
        %v3595 = vadd.f32 %v3572, %v3579
        %v3596 = vadd.f32 %v3573, %v3579
        %v3597 = vmax.f32 %v3581, 0.0
        %v3598 = vmax.f32 %v3582, 0.0
        %v3599 = vmax.f32 %v3583, 0.0
        %v3600 = vmax.f32 %v3584, 0.0
        %v3601 = vmax.f32 %v3585, 0.0
        %v3602 = vmax.f32 %v3586, 0.0
        %v3603 = vmax.f32 %v3587, 0.0
        %v3604 = vmax.f32 %v3588, 0.0
        %v3605 = vmax.f32 %v3589, 0.0
        %v3606 = vmax.f32 %v3590, 0.0
        %v3607 = vmax.f32 %v3591, 0.0
        %v3608 = vmax.f32 %v3592, 0.0
        %v3609 = vmax.f32 %v3593, 0.0
        %v3610 = vmax.f32 %v3594, 0.0
        %v3611 = vmax.f32 %v3595, 0.0
        %v3612 = vmax.f32 %v3596, 0.0
        %v3613 = vld [vmem:[#allocation16] sm:$0xf]
        %v3615 = vsel %vm1152, %v3597, 0
        %v3618 = vsel %vm1152, %v3598, 0
        %v3621 = vsel %vm1152, %v3599, 0
        %v3624 = vsel %vm1152, %v3600, 0
        %v3627 = vsel %vm1152, %v3601, 0
        %v3630 = vsel %vm1152, %v3602, 0
        %v3633 = vsel %vm1152, %v3603, 0
        %v3636 = vsel %vm1152, %v3604, 0
        %v3639 = vsel %vm1152, %v3605, 0
        %v3642 = vsel %vm1152, %v3606, 0
        %v3645 = vsel %vm1152, %v3607, 0
        %v3648 = vsel %vm1152, %v3608, 0
        %v3651 = vsel %vm1152, %v3609, 0
        %v3654 = vsel %vm1152, %v3610, 0
        %v3657 = vsel %vm1152, %v3611, 0
        %v3660 = vsel %vm1152, %v3612, 0
        %v3663 = vsel %vm1252, %v3613, 0
        %3665 = vmatprep.subr.mxu0 0.0
        %3666 = vmatpush1.msra.mxu0 %v3663
        %3667 = vmatprep.subr.mxu0 0.0
        %3668 = vmatpush1.msra.mxu0 0.0
        %3669 = vmatprep.subr.mxu0 0.0
        %3670 = vmatpush1.msra.mxu0 0.0
        %3671 = vmatprep.subr.mxu0 0.0
        %3672 = vmatpush1.msra.mxu0 0.0
        %3673 = vmatprep.subr.mxu0 0.0
        %3674 = vmatpush1.msra.mxu0 0.0
        %3675 = vmatprep.subr.mxu0 0.0
        %3676 = vmatpush1.msra.mxu0 0.0
        %3677 = vmatprep.subr.mxu0 0.0
        %3678 = vmatpush1.msra.mxu0 0.0
        %3679 = vmatprep.subr.mxu0 0.0
        %3680 = vmatpush1.msra.mxu0 0.0
        %3681 = vmatprep.subr.mxu0 0.0
        %3682 = vmatpush1.msra.mxu0 0.0
        %3683 = vmatprep.subr.mxu0 0.0
        %3684 = vmatpush1.msra.mxu0 0.0
        %3685 = vmatprep.subr.mxu0 0.0
        %3686 = vmatpush1.msra.mxu0 0.0
        %3687 = vmatprep.subr.mxu0 0.0
        %3688 = vmatpush1.msra.mxu0 0.0
        %3689 = vmatprep.subr.mxu0 0.0
        %3690 = vmatpush1.msra.mxu0 0.0
        %3691 = vmatprep.subr.mxu0 0.0
        %3692 = vmatpush1.msra.mxu0 0.0
        %3693 = vmatprep.subr.mxu0 0.0
        %3694 = vmatpush1.msra.mxu0 0.0
        %3695 = vmatprep.subr.mxu0 0.0
        %3696 = vmatpush1.msra.mxu0 0.0
        %3697 = vmatprep.subr.mxu0 0.0
        %3698 = vmatpush1.msra.mxu0 0.0
        %3699 = vmatprep.subr.mxu0 0.0
        %3700 = vmatpush1.msra.mxu0 0.0
        %3701 = vmatprep.subr.mxu0 0.0
        %3702 = vmatpush1.msra.mxu0 0.0
        %3703 = vmatprep.subr.mxu0 0.0
        %3704 = vmatpush1.msra.mxu0 0.0
        %3705 = vmatprep.subr.mxu0 0.0
        %3706 = vmatpush1.msra.mxu0 0.0
        %3707 = vmatprep.subr.mxu0 0.0
        %3708 = vmatpush1.msra.mxu0 0.0
        %3709 = vmatprep.subr.mxu0 0.0
        %3710 = vmatpush1.msra.mxu0 0.0
        %3711 = vmatprep.subr.mxu0 0.0
        %3712 = vmatpush1.msra.mxu0 0.0
        %3713 = vmatprep.subr.mxu0 0.0
        %3714 = vmatpush1.msra.mxu0 0.0
        %3715 = vmatprep.subr.mxu0 0.0
        %3716 = vmatpush1.msra.mxu0 0.0
        %3717 = vmatprep.subr.mxu0 0.0
        %3718 = vmatpush1.msra.mxu0 0.0
        %3719 = vmatprep.subr.mxu0 0.0
        %3720 = vmatpush1.msra.mxu0 0.0
        %3721 = vmatprep.subr.mxu0 0.0
        %3722 = vmatpush1.msra.mxu0 0.0
        %3723 = vmatprep.subr.mxu0 0.0
        %3724 = vmatpush1.msra.mxu0 0.0
        %3725 = vmatprep.subr.mxu0 0.0
        %3726 = vmatpush1.msra.mxu0 0.0
        %3727 = vmatprep.subr.mxu0 0.0
        %3728 = vmatpush1.msra.mxu0 0.0
        %3729 = vmatprep.mubr.f32.mxu0 0.0
        %3730 = vmatmul.mubr.f32.gmra.mrb[0].mxu0 %v3615
        %v3731 = vpop.f32.mrb[0].mxu0
        %v3732 = vadd.f32 0.0, %v3731
        %v3733 = vpop.f32.mrb[0].mxu0
        %3734 = vmatprep.mubr.f32.mxu0 0.0
        %3735 = vmatmul.mubr.f32.gmra.mrb[0].mxu0 %v3618
        %v3736 = vpop.f32.mrb[0].mxu0
        %v3737 = vadd.f32 0.0, %v3736
        %v3738 = vpop.f32.mrb[0].mxu0
        %3739 = vmatprep.mubr.f32.mxu0 0.0
        %3740 = vmatmul.mubr.f32.gmra.mrb[0].mxu0 %v3621
        %v3741 = vpop.f32.mrb[0].mxu0
        %v3742 = vadd.f32 0.0, %v3741
        %v3743 = vpop.f32.mrb[0].mxu0
        %3744 = vmatprep.mubr.f32.mxu0 0.0
        %3745 = vmatmul.mubr.f32.gmra.mrb[0].mxu0 %v3624
        %v3746 = vpop.f32.mrb[0].mxu0
        %v3747 = vadd.f32 0.0, %v3746
        %v3748 = vpop.f32.mrb[0].mxu0
        %3749 = vmatprep.mubr.f32.mxu0 0.0
        %3750 = vmatmul.mubr.f32.gmra.mrb[0].mxu0 %v3627
        %v3751 = vpop.f32.mrb[0].mxu0
        %v3752 = vadd.f32 0.0, %v3751
        %v3753 = vpop.f32.mrb[0].mxu0
        %3754 = vmatprep.mubr.f32.mxu0 0.0
        %3755 = vmatmul.mubr.f32.gmra.mrb[0].mxu0 %v3630
        %v3756 = vpop.f32.mrb[0].mxu0
        %v3757 = vadd.f32 0.0, %v3756
        %v3758 = vpop.f32.mrb[0].mxu0
        %3759 = vmatprep.mubr.f32.mxu0 0.0
        %3760 = vmatmul.mubr.f32.gmra.mrb[0].mxu0 %v3633
        %v3761 = vpop.f32.mrb[0].mxu0
        %v3762 = vadd.f32 0.0, %v3761
        %v3763 = vpop.f32.mrb[0].mxu0
        %3764 = vmatprep.mubr.f32.mxu0 0.0
        %3765 = vmatmul.mubr.f32.gmra.mrb[0].mxu0 %v3636
        %v3766 = vpop.f32.mrb[0].mxu0
        %v3767 = vadd.f32 0.0, %v3766
        %v3768 = vpop.f32.mrb[0].mxu0
        %3769 = vmatprep.mubr.f32.mxu0 0.0
        %3770 = vmatmul.mubr.f32.gmra.mrb[0].mxu0 %v3639
        %v3771 = vpop.f32.mrb[0].mxu0
        %v3772 = vadd.f32 0.0, %v3771
        %v3773 = vpop.f32.mrb[0].mxu0
        %3774 = vmatprep.mubr.f32.mxu0 0.0
        %3775 = vmatmul.mubr.f32.gmra.mrb[0].mxu0 %v3642
        %v3776 = vpop.f32.mrb[0].mxu0
        %v3777 = vadd.f32 0.0, %v3776
        %v3778 = vpop.f32.mrb[0].mxu0
        %3779 = vmatprep.mubr.f32.mxu0 0.0
        %3780 = vmatmul.mubr.f32.gmra.mrb[0].mxu0 %v3645
        %v3781 = vpop.f32.mrb[0].mxu0
        %v3782 = vadd.f32 0.0, %v3781
        %v3783 = vpop.f32.mrb[0].mxu0
        %3784 = vmatprep.mubr.f32.mxu0 0.0
        %3785 = vmatmul.mubr.f32.gmra.mrb[0].mxu0 %v3648
        %v3786 = vpop.f32.mrb[0].mxu0
        %v3787 = vadd.f32 0.0, %v3786
        %v3788 = vpop.f32.mrb[0].mxu0
        %3789 = vmatprep.mubr.f32.mxu0 0.0
        %3790 = vmatmul.mubr.f32.gmra.mrb[0].mxu0 %v3651
        %v3791 = vpop.f32.mrb[0].mxu0
        %v3792 = vadd.f32 0.0, %v3791
        %v3793 = vpop.f32.mrb[0].mxu0
        %3794 = vmatprep.mubr.f32.mxu0 0.0
        %3795 = vmatmul.mubr.f32.gmra.mrb[0].mxu0 %v3654
        %v3796 = vpop.f32.mrb[0].mxu0
        %v3797 = vadd.f32 0.0, %v3796
        %v3798 = vpop.f32.mrb[0].mxu0
        %3799 = vmatprep.mubr.f32.mxu0 0.0
        %3800 = vmatmul.mubr.f32.gmra.mrb[0].mxu0 %v3657
        %v3801 = vpop.f32.mrb[0].mxu0
        %v3802 = vadd.f32 0.0, %v3801
        %v3803 = vpop.f32.mrb[0].mxu0
        %3804 = vmatprep.mubr.f32.mxu0 0.0
        %3805 = vmatmul.mubr.f32.gmra.mrb[0].mxu0 %v3660
        %v3806 = vpop.f32.mrb[0].mxu0
        %v3807 = vadd.f32 0.0, %v3806
        %v3808 = vpop.f32.mrb[0].mxu0
        %3809 = vdwg.mxu0
        %v3810 = vld [vmem:[#allocation18] sm:$0x1]
        %v3812 = vlaneseq
        %v3813 = vshrl.u32 %v3812, 7
        %v3814 = vsub.s32 0, %v3813
        %v3815 = vrot.slane %v3810, %v3814
        %v3817 = vmul.f32 %v3732, %v3815
        %v3818 = vmul.f32 %v3737, %v3815
        %v3819 = vmul.f32 %v3742, %v3815
        %v3820 = vmul.f32 %v3747, %v3815
        %v3821 = vmul.f32 %v3752, %v3815
        %v3822 = vmul.f32 %v3757, %v3815
        %v3823 = vmul.f32 %v3762, %v3815
        %v3824 = vmul.f32 %v3767, %v3815
        %v3825 = vmul.f32 %v3772, %v3815
        %v3826 = vmul.f32 %v3777, %v3815
        %v3827 = vmul.f32 %v3782, %v3815
        %v3828 = vmul.f32 %v3787, %v3815
        %v3829 = vmul.f32 %v3792, %v3815
        %v3830 = vmul.f32 %v3797, %v3815
        %v3831 = vmul.f32 %v3802, %v3815
        %v3832 = vmul.f32 %v3807, %v3815
        %v3833 = vld [vmem:[#allocation19] sm:$0x1]
        %v3835 = vlaneseq
        %v3836 = vshrl.u32 %v3835, 7
        %v3837 = vsub.s32 0, %v3836
        %v3838 = vrot.slane %v3833, %v3837
        %v3840 = vadd.f32 %v3817, %v3838
        %v3841 = vadd.f32 %v3818, %v3838
        %v3842 = vadd.f32 %v3819, %v3838
        %v3843 = vadd.f32 %v3820, %v3838
        %v3844 = vadd.f32 %v3821, %v3838
        %v3845 = vadd.f32 %v3822, %v3838
        %v3846 = vadd.f32 %v3823, %v3838
        %v3847 = vadd.f32 %v3824, %v3838
        %v3848 = vadd.f32 %v3825, %v3838
        %v3849 = vadd.f32 %v3826, %v3838
        %v3850 = vadd.f32 %v3827, %v3838
        %v3851 = vadd.f32 %v3828, %v3838
        %v3852 = vadd.f32 %v3829, %v3838
        %v3853 = vadd.f32 %v3830, %v3838
        %v3854 = vadd.f32 %v3831, %v3838
        %v3855 = vadd.f32 %v3832, %v3838
        %s3856 = smul.u32 %s37, 128
        %s3857 = scalar_lea.vmem %s436, %s3856 [#allocation4]
        %v3858 = vld [vmem:[%s3857] sm:$0xff]
        %v3859 = vld [vmem:[%s3857 + $0x8] sm:$0xff]
        %v3860 = vld [vmem:[%s3857 + $0x10] sm:$0xff]
        %v3861 = vld [vmem:[%s3857 + $0x18] sm:$0xff]
        %v3862 = vld [vmem:[%s3857 + $0x20] sm:$0xff]
        %v3863 = vld [vmem:[%s3857 + $0x28] sm:$0xff]
        %v3864 = vld [vmem:[%s3857 + $0x30] sm:$0xff]
        %v3865 = vld [vmem:[%s3857 + $0x38] sm:$0xff]
        %v3866 = vld [vmem:[%s3857 + $0x40] sm:$0xff]
        %v3867 = vld [vmem:[%s3857 + $0x48] sm:$0xff]
        %v3868 = vld [vmem:[%s3857 + $0x50] sm:$0xff]
        %v3869 = vld [vmem:[%s3857 + $0x58] sm:$0xff]
        %v3870 = vld [vmem:[%s3857 + $0x60] sm:$0xff]
        %v3871 = vld [vmem:[%s3857 + $0x68] sm:$0xff]
        %v3872 = vld [vmem:[%s3857 + $0x70] sm:$0xff]
        %v3873 = vld [vmem:[%s3857 + $0x78] sm:$0xff]
        %v3874 = vadd.f32 %v3840, %v3858
        %v3875 = vadd.f32 %v3841, %v3859
        %v3876 = vadd.f32 %v3842, %v3860
        %v3877 = vadd.f32 %v3843, %v3861
        %v3878 = vadd.f32 %v3844, %v3862
        %v3879 = vadd.f32 %v3845, %v3863
        %v3880 = vadd.f32 %v3846, %v3864
        %v3881 = vadd.f32 %v3847, %v3865
        %v3882 = vadd.f32 %v3848, %v3866
        %v3883 = vadd.f32 %v3849, %v3867
        %v3884 = vadd.f32 %v3850, %v3868
        %v3885 = vadd.f32 %v3851, %v3869
        %v3886 = vadd.f32 %v3852, %v3870
        %v3887 = vadd.f32 %v3853, %v3871
        %v3888 = vadd.f32 %v3854, %v3872
        %v3889 = vadd.f32 %v3855, %v3873
        %v3890 = vmax.f32 %v3874, 0.0
        %v3891 = vmax.f32 %v3875, 0.0
        %v3892 = vmax.f32 %v3876, 0.0
        %v3893 = vmax.f32 %v3877, 0.0
        %v3894 = vmax.f32 %v3878, 0.0
        %v3895 = vmax.f32 %v3879, 0.0
        %v3896 = vmax.f32 %v3880, 0.0
        %v3897 = vmax.f32 %v3881, 0.0
        %v3898 = vmax.f32 %v3882, 0.0
        %v3899 = vmax.f32 %v3883, 0.0
        %v3900 = vmax.f32 %v3884, 0.0
        %v3901 = vmax.f32 %v3885, 0.0
        %v3902 = vmax.f32 %v3886, 0.0
        %v3903 = vmax.f32 %v3887, 0.0
        %v3904 = vmax.f32 %v3888, 0.0
        %v3905 = vmax.f32 %v3889, 0.0
        %vm3906 = vcmask 130048
        %3907 = vst.msk [vmem:[%s508] sm:$0xff] %vm3906, %v3890
        %3908 = vst.msk [vmem:[%s508 + $0x8] sm:$0xff] %vm3906, %v3891
        %3909 = vst.msk [vmem:[%s508 + $0x10] sm:$0xff] %vm3906, %v3892
        %3910 = vst.msk [vmem:[%s508 + $0x18] sm:$0xff] %vm3906, %v3893
        %3911 = vst.msk [vmem:[%s508 + $0x20] sm:$0xff] %vm3906, %v3894
        %3912 = vst.msk [vmem:[%s508 + $0x28] sm:$0xff] %vm3906, %v3895
        %3913 = vst.msk [vmem:[%s508 + $0x30] sm:$0xff] %vm3906, %v3896
        %3914 = vst.msk [vmem:[%s508 + $0x38] sm:$0xff] %vm3906, %v3897
        %3915 = vst.msk [vmem:[%s508 + $0x40] sm:$0xff] %vm3906, %v3898
        %3916 = vst.msk [vmem:[%s508 + $0x48] sm:$0xff] %vm3906, %v3899
        %3917 = vst.msk [vmem:[%s508 + $0x50] sm:$0xff] %vm3906, %v3900
        %3918 = vst.msk [vmem:[%s508 + $0x58] sm:$0xff] %vm3906, %v3901
        %3919 = vst.msk [vmem:[%s508 + $0x60] sm:$0xff] %vm3906, %v3902
        %3920 = vst.msk [vmem:[%s508 + $0x68] sm:$0xff] %vm3906, %v3903
        %3921 = vst.msk [vmem:[%s508 + $0x70] sm:$0xff] %vm3906, %v3904
        %3922 = vst.msk [vmem:[%s508 + $0x78] sm:$0xff] %vm3906, %v3905
        %s3923 = sand.u32 %s269, 1
        %s3924 = scalar_lea.sflag [#allocation6], %s3923
        %s3925 = sand.u32 %s269, 1
        %s3926 = smul.addr %s3925, 128
        %s3927 = scalar_lea.vmem [#allocation21], %s3926
        // Predicated region
        $region105: #{tpu_custom_call.1} parent=59 // pred_check
          %p3928 = pneg %p279
        $region106: #{tpu_custom_call.1} parent=59 // pred_check_branch
          %3930 = sbr.rel (%p3928) target = $region108
        $region107: #{tpu_custom_call.1} parent=59 // pred_region
          %s3931 = smul.u32 16, %s37
          %s3933 = ssub.s32 2048, 2048
          %3934 = vsyncadd %s3924, %s3933
          %s3935 = smul.addr %s36, 32
          %s3936 = sadd.s32 %s3931, %s3935
          %s3937 = smul.addr %s3936, 128
          %s3938 = scalar_lea.hbm %s10, %s3937
          %s3939 = sshll.u32 %s3927, 4
          %s3940 = int_to_ptr.vmem [resolvable:$true] %s3939
          %3945 = dma.vmem_to_hbm [thread:$0]  %s3940, 2048, %s3938, %s3924, 128, 128, 8
        $region108: #{tpu_custom_call.1} parent=59 // pred_fallthru
          _
      $region60: #{tpu_custom_call.1} parent=5 // pred_fallthru
        _
      %p3946 = scmp.le.s32.totalorder 2, %s27
      // Predicated region
      $region109: #{tpu_custom_call.1} parent=5 // pred_check
        %p3947 = pneg %p3946
      $region110: #{tpu_custom_call.1} parent=5 // pred_check_branch
        %3949 = sbr.rel (%p3947) target = $region112
      $region111: #{tpu_custom_call.1} parent=5 // pred_region
        %s3950 = ssub.s32 %s27, 2
        // Predicated region
        $region113: #{tpu_custom_call.1} parent=111 // pred_check
          %p3951 = pneg %p285
        $region114: #{tpu_custom_call.1} parent=111 // pred_check_branch
          %3953 = sbr.rel (%p3951) target = $region116
        $region115: #{tpu_custom_call.1} parent=111 // pred_region
          %s3954 = sand.u32 %s270, 1
          %s3955 = scalar_lea.sflag [#allocation6], %s3954
          %s3956 = sand.u32 %s270, 1
          %s3957 = smul.addr %s3956, 128
          %s3958 = scalar_lea.vmem [#allocation21], %s3957
          %3959 = dma.done %s3955, 2048
        $region116: #{tpu_custom_call.1} parent=111 // pred_fallthru
          _
      $region112: #{tpu_custom_call.1} parent=5 // pred_fallthru
        _
    $region6: #{tpu_custom_call.1} parent=1 // loop_footer
      %s31 = sadd.s32 1, %s27
    $region7: #{tpu_custom_call.1} parent=1 // loop_footer_branch
      %26 = sbr.rel target = $region3
    $region8: #{tpu_custom_call.1} parent=1 // loop_exit
      _
    %3960 = vsyncpa [#allocation5], 1
    %s3961 = scalar_lea.sflag [#allocation5], 1
    %3962 = vsyncpa %s3961, 1
    %3963 = vsyncpa [#allocation8], 1
    %3964 = vsyncpa [#allocation11], 1
    %3965 = vsyncpa [#allocation14], 1
    %3966 = vsyncpa [#allocation17], 1
    %3967 = vsyncpa [#allocation20], 1
    %3968 = vsyncpa [#allocation6], 1
    %s3969 = scalar_lea.sflag [#allocation6], 1
    %3970 = vsyncpa %s3969, 1

</llo_original>
